<compile_context>
chip_gen: v7x
topology: tpu7x:2x2x1
jax: 0.10.0
libtpu: 0.0.40
codegen_flags: <defaults>
</compile_context>

<pallas_src>
import functools

import numpy as np
import jax
import jax.numpy as jnp
from jax.experimental import pallas as pl
from jax.experimental.pallas import tpu as pltpu


# ------------------------------ Pallas kernel --------------------------------
def _fused_encoding_kernel(x_ref, a_ref,
                           m1_ref, s1_ref, b1_ref,
                           m2_ref, s2_ref, b2_ref,
                           m3_ref, s3_ref, b3_ref,
                           wa_ref, ba_ref,
                           phi_ref, enc_ref):
    """conv1->conv2->conv3 (3x3/s2/p1 + bias + ReLU) and Linear+ReLU, fully fused."""

    def conv_layer(x_bf16, s_ref, m_ref, b_ref):
        rows = s_ref.shape[1]
        cols = m_ref.shape[2]
        acc = jnp.zeros((rows, cols), jnp.float32)
        for ki in range(3):  # unrolled over the 3 kernel rows
            # Row-select (stride-2 height taps + zero padding). S is 0/1, so the
            # f32 result holds exact copies of the bf16 inputs -> the bf16 cast
            # below is lossless.
            g = jnp.dot(s_ref[ki], x_bf16, preferred_element_type=jnp.float32)
            # Width taps + channel mix for kernel row ki.
            acc = acc + jnp.dot(g.astype(jnp.bfloat16), m_ref[ki],
                                preferred_element_type=jnp.float32)
        # f32 bias + ReLU epilogue (v5e-safe).
        return jnp.maximum(acc + b_ref[...], 0.0)

    a0 = x_ref[...]                                         # (N*16, 16*Cin) bf16
    a1 = conv_layer(a0, s1_ref, m1_ref, b1_ref)              # (N*8, 8*C1p) f32
    a2 = conv_layer(a1.astype(jnp.bfloat16), s2_ref, m2_ref, b2_ref)  # (N*4, 4*C2p)
    a3 = conv_layer(a2.astype(jnp.bfloat16), s3_ref, m3_ref, b3_ref)  # (N*2, 2*C3)
    phi_ref[...] = a3.astype(phi_ref.dtype)

    # Action encoder: ReLU(a @ Wa + ba), fused as a second output.
    enc = jnp.dot(a_ref[...], wa_ref[...], preferred_element_type=jnp.float32)
    enc_ref[...] = jnp.maximum(enc + ba_ref[...], 0.0).astype(enc_ref.dtype)


# -------------------------- structured-matrix builders ------------------------
def _height_select(n_imgs, h_in):
    """S[ki]: (n_imgs*h_out, n_imgs*h_in) 0/1 matrix selecting input row 2*ho-1+ki."""
    h_out = h_in // 2
    s = np.zeros((3, n_imgs * h_out, n_imgs * h_in), np.float32)
    for ki in range(3):
        b = np.zeros((h_out, h_in), np.float32)
        for ho in range(h_out):
            h = 2 * ho - 1 + ki
            if 0 <= h < h_in:          # rows outside = zero padding
                b[ho, h] = 1.0
        s[ki] = np.kron(np.eye(n_imgs, dtype=np.float32), b)
    return s


def _width_weight(w_conv, w_in, c_in_pad, c_out_pad):
    """M[ki]: (w_in*c_in_pad, w_out*c_out_pad) block-banded matrix from conv weight.

    M[ki][(w, ci), (wo, co)] = w_conv[co, ci, ki, w-(2*wo-1)] when the tap is in
    range, else 0 (which also realizes the zero width-padding and the channel
    zero-padding of the lane-dense layout).
    """
    c_out, c_in = int(w_conv.shape[0]), int(w_conv.shape[1])
    w_out = w_in // 2
    a = np.zeros((3, w_in, w_out), np.float32)       # width tap selection (0/1)
    for kj in range(3):
        for wo in range(w_out):
            w = 2 * wo - 1 + kj
            if 0 <= w < w_in:
                a[kj, w, wo] = 1.0
    # m4[ki, w, ci, wo, co] = sum_kj a[kj, w, wo] * w_conv[co, ci, ki, kj]
    m4 = jnp.einsum("jxw,oikj->kxiwo", a, w_conv)
    m4 = jnp.pad(m4, ((0, 0), (0, 0), (0, c_in_pad - c_in),
                      (0, 0), (0, c_out_pad - c_out)))
    return m4.reshape(3, w_in * c_in_pad, w_out * c_out_pad)


def _bias_row(b, w_out, c_out_pad):
    """(1, w_out*c_out_pad) bias row matching the (width, channel) column layout."""
    bp = jnp.pad(b.astype(jnp.float32), (0, c_out_pad - b.shape[0]))
    return jnp.tile(bp, (w_out,)).reshape(1, w_out * c_out_pad)


def _pad_channels(c, w_out):
    """Pad channel count so w_out * c_pad is a multiple of 128 lanes."""
    if w_out > 0 and 128 % w_out == 0:
        unit = 128 // w_out
        return ((c + unit - 1) // unit) * unit
    return c


# --------------------------------- forward ------------------------------------
@functools.partial(jax.jit, static_argnames=("row_tiles",))
def vrnn_encoding_forward(params, all_x, all_a, *, row_tiles=1):
    """
    all_x: [seq, batch, C, H, W]  (NCHW images, H=W=16)
    all_a: [seq, batch, nr_actions]
    returns (all_phi_x [seq, batch, cnn_output_number],
             encoded_action [seq, batch, action_encoding])
    """
    seq, batch, c_in, h0, w0 = all_x.shape
    assert h0 == 16 and w0 == 16, "DVRL '16x16' encoder expects 16x16 observations"
    n = seq * batch
    nr_actions = all_a.shape[-1]
    assert n % row_tiles == 0
    n_loc = n // row_tiles
    if row_tiles > 1:
        assert n_loc % 8 == 0, "each grid tile must keep sublane-aligned blocks"

    w1c, b1c = params["conv1_w"], params["conv1_b"]
    w2c, b2c = params["conv2_w"], params["conv2_b"]
    w3c, b3c = params["conv3_w"], params["conv3_b"]
    c1, c2, c3 = int(w1c.shape[0]), int(w2c.shape[0]), int(w3c.shape[0])

    h1, h2, h3 = h0 // 2, h0 // 4, h0 // 8          # 8, 4, 2 (square)
    c1p = _pad_channels(c1, h1)                     # 8*c1p  = 128 lanes
    c2p = _pad_channels(c2, h2)                     # 4*c2p  = 128 lanes
    c3p = c3                                        # final layer left unpadded

    # ---- activation-side inputs (bf16 operands, 2-D (image*height, width*chan))
    x = all_x.reshape(n, c_in, h0, w0)
    x2d = x.transpose(0, 2, 3, 1).reshape(n * h0, w0 * c_in).astype(jnp.bfloat16)
    a2d = all_a.reshape(n, nr_actions).astype(jnp.bfloat16)

    # ---- weight-side inputs (built once per call from the raw conv weights)
    m1 = _width_weight(w1c, w0, c_in, c1p).astype(jnp.bfloat16)
    m2 = _width_weight(w2c, h1, c1p, c2p).astype(jnp.bfloat16)
    m3 = _width_weight(w3c, h2, c2p, c3p).astype(jnp.bfloat16)
    b1r = _bias_row(b1c, h1, c1p)
    b2r = _bias_row(b2c, h2, c2p)
    b3r = _bias_row(b3c, h3, c3p)
    s1 = jnp.asarray(_height_select(n_loc, h0), jnp.bfloat16)
    s2 = jnp.asarray(_height_select(n_loc, h1), jnp.bfloat16)
    s3 = jnp.asarray(_height_select(n_loc, h2), jnp.bfloat16)
    wa = params["act_w"].T.astype(jnp.bfloat16)               # (nr_actions, A)
    ba = params["act_b"].reshape(1, -1).astype(jnp.float32)
    a_enc = wa.shape[1]

    # ---- single fused pallas_call
    rx = n_loc * h0
    rphi = n_loc * h3

    def shared(shape):
        nd = len(shape)
        return pl.BlockSpec(shape, lambda i, _nd=nd: (0,) * _nd)

    in_specs = [
        pl.BlockSpec((rx, w0 * c_in), lambda i: (i, 0)),       # x2d (split)
        pl.BlockSpec((n_loc, nr_actions), lambda i: (i, 0)),   # a2d (split)
        shared(m1.shape), shared(s1.shape), shared(b1r.shape),
        shared(m2.shape), shared(s2.shape), shared(b2r.shape),
        shared(m3.shape), shared(s3.shape), shared(b3r.shape),
        shared(wa.shape), shared(ba.shape),
    ]
    out_specs = (
        pl.BlockSpec((rphi, h3 * c3p), lambda i: (i, 0)),
        pl.BlockSpec((n_loc, a_enc), lambda i: (i, 0)),
    )
    out_shape = (
        jax.ShapeDtypeStruct((n * h3, h3 * c3p), jnp.float32),
        jax.ShapeDtypeStruct((n, a_enc), jnp.float32),
    )

    phi2d, enc = pl.pallas_call(
        _fused_encoding_kernel,
        out_shape=out_shape,
        grid=(row_tiles,),
        in_specs=in_specs,
        out_specs=out_specs,
        compiler_params=pltpu.CompilerParams(
            dimension_semantics=("parallel",)),
    )(x2d, a2d, m1, s1, b1r, m2, s2, b2r, m3, s3, b3r, wa, ba)

    # ---- final tiny re-layout to PyTorch's NCHW flatten order (c, h, w)
    phi = phi2d.reshape(n, h3, h3, c3p)[:, :, :, :c3]          # (N, H3, W3, C3)
    all_phi_x = phi.transpose(0, 3, 1, 2).reshape(seq, batch, c3 * h3 * h3)
    encoded_action = enc.reshape(seq, batch, a_enc)
    return all_phi_x, encoded_action


# ------------------------------ parameter init --------------------------------
def init_params(key, nr_inputs, cnn_channels, nr_actions, action_encoding):
    c0, c1, c2 = cnn_channels
    keys = jax.random.split(key, 8)

    def lin_init(kw, kb, shape, fan_in):
        bound = 1.0 / jnp.sqrt(fan_in)
        w = jax.random.uniform(kw, shape, jnp.float32, -bound, bound)
        b = jax.random.uniform(kb, (shape[0],), jnp.float32, -bound, bound)
        return w, b

    p = {}
    p["conv1_w"], p["conv1_b"] = lin_init(keys[0], keys[1], (c0, nr_inputs, 3, 3),
                                          nr_inputs * 9)
    p["conv2_w"], p["conv2_b"] = lin_init(keys[2], keys[3], (c1, c0, 3, 3), c0 * 9)
    p["conv3_w"], p["conv3_b"] = lin_init(keys[4], keys[5], (c2, c1, 3, 3), c1 * 9)
    p["act_w"], p["act_b"] = lin_init(keys[6], keys[7], (action_encoding, nr_actions),
                                      nr_actions)
    return p


# -------------------------------- references ----------------------------------
def _conv_ref(x, w, b, preferred=None):
    y = jax.lax.conv_general_dilated(
        x, w, window_strides=(2, 2), padding=((1, 1), (1, 1)),
        dimension_numbers=("NCHW", "OIHW", "NCHW"),
        preferred_element_type=preferred)
    return jnp.maximum(y + b[None, :, None, None].astype(y.dtype), 0.0)


def _reference_forward_f32(params, all_x, all_a):
    """Full-f32 reference (original module semantics)."""
    seq, batch = all_x.shape[:2]
    nr_actions = all_a.shape[-1]
    x = all_x.reshape((-1,) + all_x.shape[2:])
    h = _conv_ref(x, params["conv1_w"], params["conv1_b"])
    h = _conv_ref(h, params["conv2_w"], params["conv2_b"])
    h = _conv_ref(h, params["conv3_w"], params["conv3_b"])
    phi = h.reshape(seq, batch, -1)
    enc = jnp.maximum(all_a.reshape(-1, nr_actions) @ params["act_w"].T
                      + params["act_b"], 0.0).reshape(seq, batch, -1)
    return phi, enc


def _reference_forward_bf16(params, all_x, all_a):
    """Reference with the kernel's exact operand precision: bf16 operands,
    f32 accumulation and epilogue, bf16 re-cast of activations fed to the
    next layer."""
    seq, batch = all_x.shape[:2]
    nr_actions = all_a.shape[-1]
    bf = jnp.bfloat16
    x = all_x.reshape((-1,) + all_x.shape[2:]).astype(bf)
    h1 = _conv_ref(x, params["conv1_w"].astype(bf), params["conv1_b"],
                   preferred=jnp.float32)
    h2 = _conv_ref(h1.astype(bf), params["conv2_w"].astype(bf), params["conv2_b"],
                   preferred=jnp.float32)
    h3 = _conv_ref(h2.astype(bf), params["conv3_w"].astype(bf), params["conv3_b"],
                   preferred=jnp.float32)
    phi = h3.reshape(seq, batch, -1)
    a = all_a.reshape(-1, nr_actions).astype(bf)
    enc = jnp.maximum(
        jnp.dot(a, params["act_w"].T.astype(bf), preferred_element_type=jnp.float32)
        + params["act_b"], 0.0).reshape(seq, batch, -1)
    return phi, enc


# ----------------------------------- main --------------------------------------
if __name__ == "__main__":
    seq_len, batch_size = 8, 2
    nr_inputs, H, W = 4, 16, 16
    cnn_channels = (8, 16, 16)
    nr_actions, action_encoding = 5, 32

    key = jax.random.PRNGKey(0)
    kx, ka, kp = jax.random.split(key, 3)

    all_x = jax.random.normal(kx, (seq_len, batch_size, nr_inputs, H, W), jnp.float32)
    all_a = jax.random.normal(ka, (seq_len, batch_size, nr_actions), jnp.float32)
    params = init_params(kp, nr_inputs, cnn_channels, nr_actions, action_encoding)

    # On multi-TensorCore chips (v7x: 2 TCs/chip) split the single grid step into
    # 2 'parallel' image tiles; on 1-TC chips (v5e/v6e) keep grid=(1,).
    n_imgs = seq_len * batch_size
    try:
        num_cores = int(getattr(jax.devices()[0], "num_cores", 1))
    except Exception:  # pragma: no cover - defensive
        num_cores = 1
    row_tiles = 2 if (num_cores >= 2 and n_imgs % 16 == 0) else 1

    all_phi_x, encoded_action = vrnn_encoding_forward(
        params, all_x, all_a, row_tiles=row_tiles)
    jax.block_until_ready((all_phi_x, encoded_action))

    assert all_phi_x.shape == (seq_len, batch_size, cnn_channels[2] * 2 * 2)
    assert encoded_action.shape == (seq_len, batch_size, action_encoding)

    # Tight structural check vs. a reference computed at the same operand
    # precision (bf16 operands, f32 accumulation) -- only summation-order diffs.
    ref_phi_b, ref_enc_b = _reference_forward_bf16(params, all_x, all_a)
    assert jnp.allclose(all_phi_x, ref_phi_b, atol=2e-3, rtol=2e-3)
    assert jnp.allclose(encoded_action, ref_enc_b, atol=2e-3, rtol=2e-3)

    # Fidelity check vs. the full-f32 module semantics (tolerance relaxed only
    # because of the intentional bf16 GEMM operands).
    ref_phi, ref_enc = _reference_forward_f32(params, all_x, all_a)
    assert jnp.allclose(all_phi_x, ref_phi, atol=5e-2, rtol=5e-2)
    assert jnp.allclose(encoded_action, ref_enc, atol=5e-2, rtol=5e-2)

    print("KERNEL_OK")
</pallas_src>

<mosaic_0001>
module attributes {stable_mosaic.version = 11 : i64} {
  func.func @_fused_encoding_kernel(%arg0: i32, %arg1: memref<256x64xbf16, #tpu.memory_space<vmem>>, %arg2: memref<16x5xbf16, #tpu.memory_space<vmem>>, %arg3: memref<3x64x128xbf16, #tpu.memory_space<vmem>>, %arg4: memref<3x128x256xbf16, #tpu.memory_space<vmem>>, %arg5: memref<1x128xf32, #tpu.memory_space<vmem>>, %arg6: memref<3x128x128xbf16, #tpu.memory_space<vmem>>, %arg7: memref<3x64x128xbf16, #tpu.memory_space<vmem>>, %arg8: memref<1x128xf32, #tpu.memory_space<vmem>>, %arg9: memref<3x128x32xbf16, #tpu.memory_space<vmem>>, %arg10: memref<3x32x64xbf16, #tpu.memory_space<vmem>>, %arg11: memref<1x32xf32, #tpu.memory_space<vmem>>, %arg12: memref<5x32xbf16, #tpu.memory_space<vmem>>, %arg13: memref<1x32xf32, #tpu.memory_space<vmem>>, %arg14: memref<32x32xf32, #tpu.memory_space<vmem>>, %arg15: memref<16x32xf32, #tpu.memory_space<vmem>>) attributes {dimension_semantics = [#tpu.dimension_semantics<parallel>], iteration_bounds = array<i64: 1>, scalar_prefetch = 0 : i64, scratch_operands = 0 : i64, tpu.core_type = #tpu.core_type<tc>, window_params = [{transform_indices = @transform_0, window_bounds = array<i64: 256, 64>}, {transform_indices = @transform_1, window_bounds = array<i64: 16, 5>}, {pipeline_mode = #tpu.pipeline_mode<synchronous>, transform_indices = @transform_2, window_bounds = array<i64: 3, 64, 128>}, {pipeline_mode = #tpu.pipeline_mode<synchronous>, transform_indices = @transform_3, window_bounds = array<i64: 3, 128, 256>}, {pipeline_mode = #tpu.pipeline_mode<synchronous>, transform_indices = @transform_4, window_bounds = array<i64: 1, 128>}, {pipeline_mode = #tpu.pipeline_mode<synchronous>, transform_indices = @transform_5, window_bounds = array<i64: 3, 128, 128>}, {pipeline_mode = #tpu.pipeline_mode<synchronous>, transform_indices = @transform_6, window_bounds = array<i64: 3, 64, 128>}, {pipeline_mode = #tpu.pipeline_mode<synchronous>, transform_indices = @transform_7, window_bounds = array<i64: 1, 128>}, {pipeline_mode = #tpu.pipeline_mode<synchronous>, transform_indices = @transform_8, window_bounds = array<i64: 3, 128, 32>}, {pipeline_mode = #tpu.pipeline_mode<synchronous>, transform_indices = @transform_9, window_bounds = array<i64: 3, 32, 64>}, {pipeline_mode = #tpu.pipeline_mode<synchronous>, transform_indices = @transform_10, window_bounds = array<i64: 1, 32>}, {pipeline_mode = #tpu.pipeline_mode<synchronous>, transform_indices = @transform_11, window_bounds = array<i64: 5, 32>}, {pipeline_mode = #tpu.pipeline_mode<synchronous>, transform_indices = @transform_12, window_bounds = array<i64: 1, 32>}, {transform_indices = @transform_13, window_bounds = array<i64: 32, 32>}, {transform_indices = @transform_14, window_bounds = array<i64: 16, 32>}]} {
    %c0 = arith.constant 0 : index
    %c0_0 = arith.constant 0 : index
    %0 = vector.load %arg1[%c0, %c0_0] : memref<256x64xbf16, #tpu.memory_space<vmem>>, vector<256x64xbf16>
    %cst = arith.constant 0.000000e+00 : f32
    %1 = vector.broadcast %cst : f32 to vector<128x128xf32>
    %c0_1 = arith.constant 0 : index
    %c0_2 = arith.constant 0 : index
    %c0_3 = arith.constant 0 : index
    %2 = vector.load %arg4[%c0_1, %c0_2, %c0_3] : memref<3x128x256xbf16, #tpu.memory_space<vmem>>, vector<1x128x256xbf16>
    %3 = vector.shape_cast %2 : vector<1x128x256xbf16> to vector<128x256xbf16>
    %cst_4 = arith.constant dense<0.000000e+00> : vector<128x64xf32>
    %4 = tpu.matmul %3, %0, %cst_4 {dimension_numbers = #tpu.dot_dimension_numbers<[1], [0], [0], [1], [0, 0, 1, 1], [], []>} : vector<128x256xbf16>, vector<256x64xbf16>, vector<128x64xf32> -> vector<128x64xf32>
    %5 = arith.truncf %4 : vector<128x64xf32> to vector<128x64xbf16>
    %c0_5 = arith.constant 0 : index
    %c0_6 = arith.constant 0 : index
    %c0_7 = arith.constant 0 : index
    %6 = vector.load %arg3[%c0_5, %c0_6, %c0_7] : memref<3x64x128xbf16, #tpu.memory_space<vmem>>, vector<1x64x128xbf16>
    %7 = vector.shape_cast %6 : vector<1x64x128xbf16> to vector<64x128xbf16>
    %cst_8 = arith.constant dense<0.000000e+00> : vector<128x128xf32>
    %8 = tpu.matmul %5, %7, %cst_8 {dimension_numbers = #tpu.dot_dimension_numbers<[1], [0], [0], [1], [0, 0, 1, 1], [], []>} : vector<128x64xbf16>, vector<64x128xbf16>, vector<128x128xf32> -> vector<128x128xf32>
    %9 = arith.addf %1, %8 : vector<128x128xf32>
    %c1 = arith.constant 1 : index
    %c0_9 = arith.constant 0 : index
    %c0_10 = arith.constant 0 : index
    %10 = vector.load %arg4[%c1, %c0_9, %c0_10] : memref<3x128x256xbf16, #tpu.memory_space<vmem>>, vector<1x128x256xbf16>
    %11 = vector.shape_cast %10 : vector<1x128x256xbf16> to vector<128x256xbf16>
    %cst_11 = arith.constant dense<0.000000e+00> : vector<128x64xf32>
    %12 = tpu.matmul %11, %0, %cst_11 {dimension_numbers = #tpu.dot_dimension_numbers<[1], [0], [0], [1], [0, 0, 1, 1], [], []>} : vector<128x256xbf16>, vector<256x64xbf16>, vector<128x64xf32> -> vector<128x64xf32>
    %13 = arith.truncf %12 : vector<128x64xf32> to vector<128x64xbf16>
    %c1_12 = arith.constant 1 : index
    %c0_13 = arith.constant 0 : index
    %c0_14 = arith.constant 0 : index
    %14 = vector.load %arg3[%c1_12, %c0_13, %c0_14] : memref<3x64x128xbf16, #tpu.memory_space<vmem>>, vector<1x64x128xbf16>
    %15 = vector.shape_cast %14 : vector<1x64x128xbf16> to vector<64x128xbf16>
    %cst_15 = arith.constant dense<0.000000e+00> : vector<128x128xf32>
    %16 = tpu.matmul %13, %15, %cst_15 {dimension_numbers = #tpu.dot_dimension_numbers<[1], [0], [0], [1], [0, 0, 1, 1], [], []>} : vector<128x64xbf16>, vector<64x128xbf16>, vector<128x128xf32> -> vector<128x128xf32>
    %17 = arith.addf %9, %16 : vector<128x128xf32>
    %c2 = arith.constant 2 : index
    %c0_16 = arith.constant 0 : index
    %c0_17 = arith.constant 0 : index
    %18 = vector.load %arg4[%c2, %c0_16, %c0_17] : memref<3x128x256xbf16, #tpu.memory_space<vmem>>, vector<1x128x256xbf16>
    %19 = vector.shape_cast %18 : vector<1x128x256xbf16> to vector<128x256xbf16>
    %cst_18 = arith.constant dense<0.000000e+00> : vector<128x64xf32>
    %20 = tpu.matmul %19, %0, %cst_18 {dimension_numbers = #tpu.dot_dimension_numbers<[1], [0], [0], [1], [0, 0, 1, 1], [], []>} : vector<128x256xbf16>, vector<256x64xbf16>, vector<128x64xf32> -> vector<128x64xf32>
    %21 = arith.truncf %20 : vector<128x64xf32> to vector<128x64xbf16>
    %c2_19 = arith.constant 2 : index
    %c0_20 = arith.constant 0 : index
    %c0_21 = arith.constant 0 : index
    %22 = vector.load %arg3[%c2_19, %c0_20, %c0_21] : memref<3x64x128xbf16, #tpu.memory_space<vmem>>, vector<1x64x128xbf16>
    %23 = vector.shape_cast %22 : vector<1x64x128xbf16> to vector<64x128xbf16>
    %cst_22 = arith.constant dense<0.000000e+00> : vector<128x128xf32>
    %24 = tpu.matmul %21, %23, %cst_22 {dimension_numbers = #tpu.dot_dimension_numbers<[1], [0], [0], [1], [0, 0, 1, 1], [], []>} : vector<128x64xbf16>, vector<64x128xbf16>, vector<128x128xf32> -> vector<128x128xf32>
    %25 = arith.addf %17, %24 : vector<128x128xf32>
    %c0_23 = arith.constant 0 : index
    %c0_24 = arith.constant 0 : index
    %26 = vector.load %arg5[%c0_23, %c0_24] : memref<1x128xf32, #tpu.memory_space<vmem>>, vector<1x128xf32>
    %27 = vector.broadcast %26 : vector<1x128xf32> to vector<128x128xf32>
    %28 = arith.addf %25, %27 : vector<128x128xf32>
    %cst_25 = arith.constant 0.000000e+00 : f32
    %29 = vector.broadcast %cst_25 : f32 to vector<128x128xf32>
    %30 = arith.maximumf %28, %29 : vector<128x128xf32>
    %31 = arith.truncf %30 : vector<128x128xf32> to vector<128x128xbf16>
    %cst_26 = arith.constant 0.000000e+00 : f32
    %32 = vector.broadcast %cst_26 : f32 to vector<64x128xf32>
    %c0_27 = arith.constant 0 : index
    %c0_28 = arith.constant 0 : index
    %c0_29 = arith.constant 0 : index
    %33 = vector.load %arg7[%c0_27, %c0_28, %c0_29] : memref<3x64x128xbf16, #tpu.memory_space<vmem>>, vector<1x64x128xbf16>
    %34 = vector.shape_cast %33 : vector<1x64x128xbf16> to vector<64x128xbf16>
    %cst_30 = arith.constant dense<0.000000e+00> : vector<64x128xf32>
    %35 = tpu.matmul %34, %31, %cst_30 {dimension_numbers = #tpu.dot_dimension_numbers<[1], [0], [0], [1], [0, 0, 1, 1], [], []>} : vector<64x128xbf16>, vector<128x128xbf16>, vector<64x128xf32> -> vector<64x128xf32>
    %36 = arith.truncf %35 : vector<64x128xf32> to vector<64x128xbf16>
    %c0_31 = arith.constant 0 : index
    %c0_32 = arith.constant 0 : index
    %c0_33 = arith.constant 0 : index
    %37 = vector.load %arg6[%c0_31, %c0_32, %c0_33] : memref<3x128x128xbf16, #tpu.memory_space<vmem>>, vector<1x128x128xbf16>
    %38 = vector.shape_cast %37 : vector<1x128x128xbf16> to vector<128x128xbf16>
    %cst_34 = arith.constant dense<0.000000e+00> : vector<64x128xf32>
    %39 = tpu.matmul %36, %38, %cst_34 {dimension_numbers = #tpu.dot_dimension_numbers<[1], [0], [0], [1], [0, 0, 1, 1], [], []>} : vector<64x128xbf16>, vector<128x128xbf16>, vector<64x128xf32> -> vector<64x128xf32>
    %40 = arith.addf %32, %39 : vector<64x128xf32>
    %c1_35 = arith.constant 1 : index
    %c0_36 = arith.constant 0 : index
    %c0_37 = arith.constant 0 : index
    %41 = vector.load %arg7[%c1_35, %c0_36, %c0_37] : memref<3x64x128xbf16, #tpu.memory_space<vmem>>, vector<1x64x128xbf16>
    %42 = vector.shape_cast %41 : vector<1x64x128xbf16> to vector<64x128xbf16>
    %cst_38 = arith.constant dense<0.000000e+00> : vector<64x128xf32>
    %43 = tpu.matmul %42, %31, %cst_38 {dimension_numbers = #tpu.dot_dimension_numbers<[1], [0], [0], [1], [0, 0, 1, 1], [], []>} : vector<64x128xbf16>, vector<128x128xbf16>, vector<64x128xf32> -> vector<64x128xf32>
    %44 = arith.truncf %43 : vector<64x128xf32> to vector<64x128xbf16>
    %c1_39 = arith.constant 1 : index
    %c0_40 = arith.constant 0 : index
    %c0_41 = arith.constant 0 : index
    %45 = vector.load %arg6[%c1_39, %c0_40, %c0_41] : memref<3x128x128xbf16, #tpu.memory_space<vmem>>, vector<1x128x128xbf16>
    %46 = vector.shape_cast %45 : vector<1x128x128xbf16> to vector<128x128xbf16>
    %cst_42 = arith.constant dense<0.000000e+00> : vector<64x128xf32>
    %47 = tpu.matmul %44, %46, %cst_42 {dimension_numbers = #tpu.dot_dimension_numbers<[1], [0], [0], [1], [0, 0, 1, 1], [], []>} : vector<64x128xbf16>, vector<128x128xbf16>, vector<64x128xf32> -> vector<64x128xf32>
    %48 = arith.addf %40, %47 : vector<64x128xf32>
    %c2_43 = arith.constant 2 : index
    %c0_44 = arith.constant 0 : index
    %c0_45 = arith.constant 0 : index
    %49 = vector.load %arg7[%c2_43, %c0_44, %c0_45] : memref<3x64x128xbf16, #tpu.memory_space<vmem>>, vector<1x64x128xbf16>
    %50 = vector.shape_cast %49 : vector<1x64x128xbf16> to vector<64x128xbf16>
    %cst_46 = arith.constant dense<0.000000e+00> : vector<64x128xf32>
    %51 = tpu.matmul %50, %31, %cst_46 {dimension_numbers = #tpu.dot_dimension_numbers<[1], [0], [0], [1], [0, 0, 1, 1], [], []>} : vector<64x128xbf16>, vector<128x128xbf16>, vector<64x128xf32> -> vector<64x128xf32>
    %52 = arith.truncf %51 : vector<64x128xf32> to vector<64x128xbf16>
    %c2_47 = arith.constant 2 : index
    %c0_48 = arith.constant 0 : index
    %c0_49 = arith.constant 0 : index
    %53 = vector.load %arg6[%c2_47, %c0_48, %c0_49] : memref<3x128x128xbf16, #tpu.memory_space<vmem>>, vector<1x128x128xbf16>
    %54 = vector.shape_cast %53 : vector<1x128x128xbf16> to vector<128x128xbf16>
    %cst_50 = arith.constant dense<0.000000e+00> : vector<64x128xf32>
    %55 = tpu.matmul %52, %54, %cst_50 {dimension_numbers = #tpu.dot_dimension_numbers<[1], [0], [0], [1], [0, 0, 1, 1], [], []>} : vector<64x128xbf16>, vector<128x128xbf16>, vector<64x128xf32> -> vector<64x128xf32>
    %56 = arith.addf %48, %55 : vector<64x128xf32>
    %c0_51 = arith.constant 0 : index
    %c0_52 = arith.constant 0 : index
    %57 = vector.load %arg8[%c0_51, %c0_52] : memref<1x128xf32, #tpu.memory_space<vmem>>, vector<1x128xf32>
    %58 = vector.broadcast %57 : vector<1x128xf32> to vector<64x128xf32>
    %59 = arith.addf %56, %58 : vector<64x128xf32>
    %cst_53 = arith.constant 0.000000e+00 : f32
    %60 = vector.broadcast %cst_53 : f32 to vector<64x128xf32>
    %61 = arith.maximumf %59, %60 : vector<64x128xf32>
    %62 = arith.truncf %61 : vector<64x128xf32> to vector<64x128xbf16>
    %cst_54 = arith.constant 0.000000e+00 : f32
    %63 = vector.broadcast %cst_54 : f32 to vector<32x32xf32>
    %c0_55 = arith.constant 0 : index
    %c0_56 = arith.constant 0 : index
    %c0_57 = arith.constant 0 : index
    %64 = vector.load %arg10[%c0_55, %c0_56, %c0_57] : memref<3x32x64xbf16, #tpu.memory_space<vmem>>, vector<1x32x64xbf16>
    %65 = vector.shape_cast %64 : vector<1x32x64xbf16> to vector<32x64xbf16>
    %cst_58 = arith.constant dense<0.000000e+00> : vector<32x128xf32>
    %66 = tpu.matmul %65, %62, %cst_58 {dimension_numbers = #tpu.dot_dimension_numbers<[1], [0], [0], [1], [0, 0, 1, 1], [], []>} : vector<32x64xbf16>, vector<64x128xbf16>, vector<32x128xf32> -> vector<32x128xf32>
    %67 = arith.truncf %66 : vector<32x128xf32> to vector<32x128xbf16>
    %c0_59 = arith.constant 0 : index
    %c0_60 = arith.constant 0 : index
    %c0_61 = arith.constant 0 : index
    %68 = vector.load %arg9[%c0_59, %c0_60, %c0_61] : memref<3x128x32xbf16, #tpu.memory_space<vmem>>, vector<1x128x32xbf16>
    %69 = vector.shape_cast %68 : vector<1x128x32xbf16> to vector<128x32xbf16>
    %cst_62 = arith.constant dense<0.000000e+00> : vector<32x32xf32>
    %70 = tpu.matmul %67, %69, %cst_62 {dimension_numbers = #tpu.dot_dimension_numbers<[1], [0], [0], [1], [0, 0, 1, 1], [], []>} : vector<32x128xbf16>, vector<128x32xbf16>, vector<32x32xf32> -> vector<32x32xf32>
    %71 = arith.addf %63, %70 : vector<32x32xf32>
    %c1_63 = arith.constant 1 : index
    %c0_64 = arith.constant 0 : index
    %c0_65 = arith.constant 0 : index
    %72 = vector.load %arg10[%c1_63, %c0_64, %c0_65] : memref<3x32x64xbf16, #tpu.memory_space<vmem>>, vector<1x32x64xbf16>
    %73 = vector.shape_cast %72 : vector<1x32x64xbf16> to vector<32x64xbf16>
    %cst_66 = arith.constant dense<0.000000e+00> : vector<32x128xf32>
    %74 = tpu.matmul %73, %62, %cst_66 {dimension_numbers = #tpu.dot_dimension_numbers<[1], [0], [0], [1], [0, 0, 1, 1], [], []>} : vector<32x64xbf16>, vector<64x128xbf16>, vector<32x128xf32> -> vector<32x128xf32>
    %75 = arith.truncf %74 : vector<32x128xf32> to vector<32x128xbf16>
    %c1_67 = arith.constant 1 : index
    %c0_68 = arith.constant 0 : index
    %c0_69 = arith.constant 0 : index
    %76 = vector.load %arg9[%c1_67, %c0_68, %c0_69] : memref<3x128x32xbf16, #tpu.memory_space<vmem>>, vector<1x128x32xbf16>
    %77 = vector.shape_cast %76 : vector<1x128x32xbf16> to vector<128x32xbf16>
    %cst_70 = arith.constant dense<0.000000e+00> : vector<32x32xf32>
    %78 = tpu.matmul %75, %77, %cst_70 {dimension_numbers = #tpu.dot_dimension_numbers<[1], [0], [0], [1], [0, 0, 1, 1], [], []>} : vector<32x128xbf16>, vector<128x32xbf16>, vector<32x32xf32> -> vector<32x32xf32>
    %79 = arith.addf %71, %78 : vector<32x32xf32>
    %c2_71 = arith.constant 2 : index
    %c0_72 = arith.constant 0 : index
    %c0_73 = arith.constant 0 : index
    %80 = vector.load %arg10[%c2_71, %c0_72, %c0_73] : memref<3x32x64xbf16, #tpu.memory_space<vmem>>, vector<1x32x64xbf16>
    %81 = vector.shape_cast %80 : vector<1x32x64xbf16> to vector<32x64xbf16>
    %cst_74 = arith.constant dense<0.000000e+00> : vector<32x128xf32>
    %82 = tpu.matmul %81, %62, %cst_74 {dimension_numbers = #tpu.dot_dimension_numbers<[1], [0], [0], [1], [0, 0, 1, 1], [], []>} : vector<32x64xbf16>, vector<64x128xbf16>, vector<32x128xf32> -> vector<32x128xf32>
    %83 = arith.truncf %82 : vector<32x128xf32> to vector<32x128xbf16>
    %c2_75 = arith.constant 2 : index
    %c0_76 = arith.constant 0 : index
    %c0_77 = arith.constant 0 : index
    %84 = vector.load %arg9[%c2_75, %c0_76, %c0_77] : memref<3x128x32xbf16, #tpu.memory_space<vmem>>, vector<1x128x32xbf16>
    %85 = vector.shape_cast %84 : vector<1x128x32xbf16> to vector<128x32xbf16>
    %cst_78 = arith.constant dense<0.000000e+00> : vector<32x32xf32>
    %86 = tpu.matmul %83, %85, %cst_78 {dimension_numbers = #tpu.dot_dimension_numbers<[1], [0], [0], [1], [0, 0, 1, 1], [], []>} : vector<32x128xbf16>, vector<128x32xbf16>, vector<32x32xf32> -> vector<32x32xf32>
    %87 = arith.addf %79, %86 : vector<32x32xf32>
    %c0_79 = arith.constant 0 : index
    %c0_80 = arith.constant 0 : index
    %88 = vector.load %arg11[%c0_79, %c0_80] : memref<1x32xf32, #tpu.memory_space<vmem>>, vector<1x32xf32>
    %89 = vector.broadcast %88 : vector<1x32xf32> to vector<32x32xf32>
    %90 = arith.addf %87, %89 : vector<32x32xf32>
    %cst_81 = arith.constant 0.000000e+00 : f32
    %91 = vector.broadcast %cst_81 : f32 to vector<32x32xf32>
    %92 = arith.maximumf %90, %91 : vector<32x32xf32>
    %c0_82 = arith.constant 0 : index
    %c0_83 = arith.constant 0 : index
    %93 = vector.load %arg14[%c0_82, %c0_83] : memref<32x32xf32, #tpu.memory_space<vmem>>, vector<32x32xf32>
    tpu.vector_store %arg14[%c0_82, %c0_83], %92 {strides = array<i32>} : memref<32x32xf32, #tpu.memory_space<vmem>>, vector<32x32xf32>,
    %c0_84 = arith.constant 0 : index
    %c0_85 = arith.constant 0 : index
    %94 = vector.load %arg2[%c0_84, %c0_85] : memref<16x5xbf16, #tpu.memory_space<vmem>>, vector<16x5xbf16>
    %c0_86 = arith.constant 0 : index
    %c0_87 = arith.constant 0 : index
    %95 = vector.load %arg12[%c0_86, %c0_87] : memref<5x32xbf16, #tpu.memory_space<vmem>>, vector<5x32xbf16>
    %cst_88 = arith.constant dense<0.000000e+00> : vector<16x32xf32>
    %96 = tpu.matmul %94, %95, %cst_88 {dimension_numbers = #tpu.dot_dimension_numbers<[1], [0], [0], [1], [0, 0, 1, 1], [], []>} : vector<16x5xbf16>, vector<5x32xbf16>, vector<16x32xf32> -> vector<16x32xf32>
    %c0_89 = arith.constant 0 : index
    %c0_90 = arith.constant 0 : index
    %97 = vector.load %arg13[%c0_89, %c0_90] : memref<1x32xf32, #tpu.memory_space<vmem>>, vector<1x32xf32>
    %98 = vector.broadcast %97 : vector<1x32xf32> to vector<16x32xf32>
    %99 = arith.addf %96, %98 : vector<16x32xf32>
    %cst_91 = arith.constant 0.000000e+00 : f32
    %100 = vector.broadcast %cst_91 : f32 to vector<16x32xf32>
    %101 = arith.maximumf %99, %100 : vector<16x32xf32>
    %c0_92 = arith.constant 0 : index
    %c0_93 = arith.constant 0 : index
    %102 = vector.load %arg15[%c0_92, %c0_93] : memref<16x32xf32, #tpu.memory_space<vmem>>, vector<16x32xf32>
    tpu.vector_store %arg15[%c0_92, %c0_93], %101 {strides = array<i32>} : memref<16x32xf32, #tpu.memory_space<vmem>>, vector<16x32xf32>,
    return
  }
  func.func @transform_0(%arg0: i32) -> (i32, i32) {
    %c0_i32 = arith.constant 0 : i32
    %c0_i32_0 = arith.constant 0 : i32
    return %arg0, %c0_i32 : i32, i32
  }
  func.func @transform_1(%arg0: i32) -> (i32, i32) {
    %c0_i32 = arith.constant 0 : i32
    %c0_i32_0 = arith.constant 0 : i32
    return %arg0, %c0_i32 : i32, i32
  }
  func.func @transform_2(%arg0: i32) -> (i32, i32, i32) {
    %c0_i32 = arith.constant 0 : i32
    %c0_i32_0 = arith.constant 0 : i32
    %c0_i32_1 = arith.constant 0 : i32
    %c0_i32_2 = arith.constant 0 : i32
    return %c0_i32, %c0_i32_0, %c0_i32_1 : i32, i32, i32
  }
  func.func @transform_3(%arg0: i32) -> (i32, i32, i32) {
    %c0_i32 = arith.constant 0 : i32
    %c0_i32_0 = arith.constant 0 : i32
    %c0_i32_1 = arith.constant 0 : i32
    %c0_i32_2 = arith.constant 0 : i32
    return %c0_i32, %c0_i32_0, %c0_i32_1 : i32, i32, i32
  }
  func.func @transform_4(%arg0: i32) -> (i32, i32) {
    %c0_i32 = arith.constant 0 : i32
    %c0_i32_0 = arith.constant 0 : i32
    %c0_i32_1 = arith.constant 0 : i32
    return %c0_i32, %c0_i32_0 : i32, i32
  }
  func.func @transform_5(%arg0: i32) -> (i32, i32, i32) {
    %c0_i32 = arith.constant 0 : i32
    %c0_i32_0 = arith.constant 0 : i32
    %c0_i32_1 = arith.constant 0 : i32
    %c0_i32_2 = arith.constant 0 : i32
    return %c0_i32, %c0_i32_0, %c0_i32_1 : i32, i32, i32
  }
  func.func @transform_6(%arg0: i32) -> (i32, i32, i32) {
    %c0_i32 = arith.constant 0 : i32
    %c0_i32_0 = arith.constant 0 : i32
    %c0_i32_1 = arith.constant 0 : i32
    %c0_i32_2 = arith.constant 0 : i32
    return %c0_i32, %c0_i32_0, %c0_i32_1 : i32, i32, i32
  }
  func.func @transform_7(%arg0: i32) -> (i32, i32) {
    %c0_i32 = arith.constant 0 : i32
    %c0_i32_0 = arith.constant 0 : i32
    %c0_i32_1 = arith.constant 0 : i32
    return %c0_i32, %c0_i32_0 : i32, i32
  }
  func.func @transform_8(%arg0: i32) -> (i32, i32, i32) {
    %c0_i32 = arith.constant 0 : i32
    %c0_i32_0 = arith.constant 0 : i32
    %c0_i32_1 = arith.constant 0 : i32
    %c0_i32_2 = arith.constant 0 : i32
    return %c0_i32, %c0_i32_0, %c0_i32_1 : i32, i32, i32
  }
  func.func @transform_9(%arg0: i32) -> (i32, i32, i32) {
    %c0_i32 = arith.constant 0 : i32
    %c0_i32_0 = arith.constant 0 : i32
    %c0_i32_1 = arith.constant 0 : i32
    %c0_i32_2 = arith.constant 0 : i32
    return %c0_i32, %c0_i32_0, %c0_i32_1 : i32, i32, i32
  }
  func.func @transform_10(%arg0: i32) -> (i32, i32) {
    %c0_i32 = arith.constant 0 : i32
    %c0_i32_0 = arith.constant 0 : i32
    %c0_i32_1 = arith.constant 0 : i32
    return %c0_i32, %c0_i32_0 : i32, i32
  }
  func.func @transform_11(%arg0: i32) -> (i32, i32) {
    %c0_i32 = arith.constant 0 : i32
    %c0_i32_0 = arith.constant 0 : i32
    %c0_i32_1 = arith.constant 0 : i32
    return %c0_i32, %c0_i32_0 : i32, i32
  }
  func.func @transform_12(%arg0: i32) -> (i32, i32) {
    %c0_i32 = arith.constant 0 : i32
    %c0_i32_0 = arith.constant 0 : i32
    %c0_i32_1 = arith.constant 0 : i32
    return %c0_i32, %c0_i32_0 : i32, i32
  }
  func.func @transform_13(%arg0: i32) -> (i32, i32) {
    %c0_i32 = arith.constant 0 : i32
    %c0_i32_0 = arith.constant 0 : i32
    return %arg0, %c0_i32 : i32, i32
  }
  func.func @transform_14(%arg0: i32) -> (i32, i32) {
    %c0_i32 = arith.constant 0 : i32
    %c0_i32_0 = arith.constant 0 : i32
    return %arg0, %c0_i32 : i32, i32
  }
}

</mosaic_0001>

<llo_original>
// kernel: tile.18
$region0: #{tile.18}
  #allocation0 [shape = 's32[1]{0}', space=sflag, size = 0x4, scoped, tag = 'scoped memory for tile.18']
  %s0 = inlined_call_operand.vmem [shape: f32[16], index: 0, kind: input, shape index: {}]
  %s1 = inlined_call_operand.vmem [shape: f32[8,16], index: 1, kind: output, shape index: {}]
  // Predicated region
  $region2: #{tile.18} parent=0 // pred_check
    _
  $region3: #{tile.18} parent=0 // pred_check_branch
    %3 = sbr.rel (0) target = $region5
  $region4: #{tile.18} parent=0 // pred_region
    _
  $region5: #{tile.18} parent=0 // pred_fallthru
    _
  %v4 = vld [vmem:[%s0] ss:$0 sm:$0xff]
  %5 = vst [vmem:[%s1] sm:$0xff] %v4

// kernel: tile.19
$region0: #{tile.19}
  %s0 = inlined_call_operand.vmem [shape: f32[8,16], index: 0, kind: input, shape index: {}]
  %s1 = inlined_call_operand.vmem [shape: f32[1,128], index: 1, kind: output, shape index: {}]
  $region1: #{tile.19} parent=0
    #allocation0 [shape = 'u8[4096]{0}', space=vmem, size = 0x1000, scoped, tag = 'scoped mem for output reshape']
    %v2 = vld [vmem:[%s0] sm:$0x1]
    %vm3 = vcmask 130048
    %4 = vst.msk [vmem:[#allocation0] sm:$0x1] %vm3, %v2
    %s5 = scalar_lea.vmem %s0, 7
    %v6 = vld [vmem:[%s5] sm:$0x1]
    %7 = vrot.lane.b32.xlu0 %v6, 112
    %v8 = vpop.permute.xlu0 %7
    %vm9 = vcmask 1048448
    %10 = vst.msk [vmem:[#allocation0] sm:$0x1] %vm9, %v8
    %s11 = scalar_lea.vmem %s0, 6
    %v12 = vld [vmem:[%s11] sm:$0x1]
    %13 = vrot.lane.b32.xlu0 %v12, 96
    %v14 = vpop.permute.xlu0 %13
    %vm15 = vcmask 917248
    %16 = vst.msk [vmem:[#allocation0] sm:$0x1] %vm15, %v14
    %s17 = scalar_lea.vmem %s0, 5
    %v18 = vld [vmem:[%s17] sm:$0x1]
    %19 = vrot.lane.b32.xlu0 %v18, 80
    %v20 = vpop.permute.xlu0 %19
    %vm21 = vcmask 786048
    %22 = vst.msk [vmem:[#allocation0] sm:$0x1] %vm21, %v20
    %s23 = scalar_lea.vmem %s0, 4
    %v24 = vld [vmem:[%s23] sm:$0x1]
    %25 = vrot.lane.b32.xlu0 %v24, 64
    %v26 = vpop.permute.xlu0 %25
    %vm27 = vcmask 654848
    %28 = vst.msk [vmem:[#allocation0] sm:$0x1] %vm27, %v26
    %s29 = scalar_lea.vmem %s0, 3
    %v30 = vld [vmem:[%s29] sm:$0x1]
    %31 = vrot.lane.b32.xlu0 %v30, 48
    %v32 = vpop.permute.xlu0 %31
    %vm33 = vcmask 523648
    %34 = vst.msk [vmem:[#allocation0] sm:$0x1] %vm33, %v32
    %s35 = scalar_lea.vmem %s0, 2
    %v36 = vld [vmem:[%s35] sm:$0x1]
    %37 = vrot.lane.b32.xlu0 %v36, 32
    %v38 = vpop.permute.xlu0 %37
    %vm39 = vcmask 392448
    %40 = vst.msk [vmem:[#allocation0] sm:$0x1] %vm39, %v38
    %s41 = scalar_lea.vmem %s0, 1
    %v42 = vld [vmem:[%s41] sm:$0x1]
    %43 = vrot.lane.b32.xlu0 %v42, 16
    %v44 = vpop.permute.xlu0 %43
    %vm45 = vcmask 261248
    %46 = vst.msk [vmem:[#allocation0] sm:$0x1] %vm45, %v44
    %s48 = sshllo.u32 0, 1
    %v50 = vld [vmem:[#allocation0] sm:%s48]
    %s51 = sshllo.u32 0, 1
    %52 = vst [vmem:[%s1] sm:%s51] %v50

// kernel: tile.23
$region0: #{tile.23}
  #allocation0 [shape = 's32[1]{0}', space=sflag, size = 0x4, scoped, tag = 'scoped memory for tile.23']
  %s0 = inlined_call_operand.vmem [shape: f32[32], index: 0, kind: input, shape index: {}]
  %s1 = inlined_call_operand.vmem [shape: f32[4,32], index: 1, kind: output, shape index: {}]
  // Predicated region
  $region2: #{tile.23} parent=0 // pred_check
    _
  $region3: #{tile.23} parent=0 // pred_check_branch
    %3 = sbr.rel (0) target = $region5
  $region4: #{tile.23} parent=0 // pred_region
    _
  $region5: #{tile.23} parent=0 // pred_fallthru
    _
  %v4 = vld [vmem:[%s0] ss:$0 sm:$0xff]
  %5 = vst [vmem:[%s1] sm:$0xf] %v4

// kernel: tile.24
$region0: #{tile.24}
  %s0 = inlined_call_operand.vmem [shape: f32[4,32], index: 0, kind: input, shape index: {}]
  %s1 = inlined_call_operand.vmem [shape: f32[1,128], index: 1, kind: output, shape index: {}]
  $region1: #{tile.24} parent=0
    #allocation0 [shape = 'u8[4096]{0}', space=vmem, size = 0x1000, scoped, tag = 'scoped mem for output reshape']
    #allocation1 [shape = 'u8[4096]{0}', space=vmem, size = 0x1000, scoped, tag = 'scoped mem for input reshape']
    %s3 = sshllo.u32 0, 4
    %v4 = vld [vmem:[%s0] sm:%s3]
    %5 = vst [vmem:[#allocation1] sm:%s3] %v4
    %v6 = vld [vmem:[#allocation1] sm:$0x1]
    %vm7 = vcmask 261120
    %8 = vst.msk [vmem:[#allocation0] sm:$0x1] %vm7, %v6
    %s9 = scalar_lea.vmem [#allocation1], 3
    %v10 = vld [vmem:[%s9] sm:$0x1]
    %11 = vrot.lane.b32.xlu0 %v10, 96
    %v12 = vpop.permute.xlu0 %11
    %vm13 = vcmask 1048320
    %14 = vst.msk [vmem:[#allocation0] sm:$0x1] %vm13, %v12
    %s15 = scalar_lea.vmem [#allocation1], 2
    %v16 = vld [vmem:[%s15] sm:$0x1]
    %17 = vrot.lane.b32.xlu0 %v16, 64
    %v18 = vpop.permute.xlu0 %17
    %vm19 = vcmask 785920
    %20 = vst.msk [vmem:[#allocation0] sm:$0x1] %vm19, %v18
    %s21 = scalar_lea.vmem [#allocation1], 1
    %v22 = vld [vmem:[%s21] sm:$0x1]
    %23 = vrot.lane.b32.xlu0 %v22, 32
    %v24 = vpop.permute.xlu0 %23
    %vm25 = vcmask 523520
    %26 = vst.msk [vmem:[#allocation0] sm:$0x1] %vm25, %v24
    %s28 = sshllo.u32 0, 1
    %v30 = vld [vmem:[#allocation0] sm:%s28]
    %s31 = sshllo.u32 0, 1
    %32 = vst [vmem:[%s1] sm:%s31] %v30

// kernel: tile.28
$region0: #{tile.28}
  #allocation0 [shape = 's32[1]{0}', space=sflag, size = 0x4, scoped, tag = 'scoped memory for tile.28']
  %s0 = inlined_call_operand.vmem [shape: f32[16], index: 0, kind: input, shape index: {}]
  %s1 = inlined_call_operand.vmem [shape: f32[2,16], index: 1, kind: output, shape index: {}]
  // Predicated region
  $region2: #{tile.28} parent=0 // pred_check
    _
  $region3: #{tile.28} parent=0 // pred_check_branch
    %3 = sbr.rel (0) target = $region5
  $region4: #{tile.28} parent=0 // pred_region
    _
  $region5: #{tile.28} parent=0 // pred_fallthru
    _
  %v4 = vld [vmem:[%s0] ss:$0 sm:$0xff]
  %5 = vst [vmem:[%s1] sm:$0x3] %v4

// kernel: tile.29
$region0: #{tile.29}
  %s0 = inlined_call_operand.vmem [shape: f32[2,16], index: 0, kind: input, shape index: {}]
  %s1 = inlined_call_operand.vmem [shape: f32[1,32], index: 1, kind: output, shape index: {}]
  $region1: #{tile.29} parent=0
    #allocation0 [shape = 'u8[4096]{0}', space=vmem, size = 0x1000, scoped, tag = 'scoped mem for output reshape']
    #allocation1 [shape = 'u8[4096]{0}', space=vmem, size = 0x1000, scoped, tag = 'scoped mem for input reshape']
    %s3 = sshllo.u32 0, 2
    %v4 = vld [vmem:[%s0] sm:%s3]
    %5 = vst [vmem:[#allocation1] sm:%s3] %v4
    %v6 = vld [vmem:[#allocation1] sm:$0x1]
    %vm7 = vcmask 130048
    %8 = vst.msk [vmem:[#allocation0] sm:$0x1] %vm7, %v6
    %s9 = scalar_lea.vmem [#allocation1], 1
    %v10 = vld [vmem:[%s9] sm:$0x1]
    %11 = vrot.lane.b32.xlu0 %v10, 16
    %v12 = vpop.permute.xlu0 %11
    %vm13 = vcmask 261248
    %14 = vst.msk [vmem:[#allocation0] sm:$0x1] %vm13, %v12
    %s16 = sshllo.u32 0, 1
    %v18 = vld [vmem:[#allocation0] sm:%s16]
    %s19 = sshllo.u32 0, 1
    %20 = vst [vmem:[%s1] sm:%s19] %v18

// kernel: vrnn_encoding_forward.1
$region0: #{vrnn_encoding_forward.1}
  #allocation0 [shape = 'u32[]', space=smem, size = 0x4, offset = 0x4, fixed_abs, tag = 'smem constant byte address 0x4 - core index']
  #allocation1 [shape = 'u32[144,128]{1,0:T(1,128)}', space=vmem, size = 0x12000, scoped, tag = 'internal scratch']
  %s0 = inlined_call_operand.vmem [shape: bf16[256,64], index: 0, kind: input, shape index: {}]
  %s1 = inlined_call_operand.vmem [shape: bf16[16,5], index: 1, kind: input, shape index: {}]
  %s2 = inlined_call_operand.vmem [shape: bf16[3,64,128], index: 2, kind: input, shape index: {}]
  %s3 = inlined_call_operand.vmem [shape: bf16[3,128,256], index: 3, kind: input, shape index: {}]
  %s4 = inlined_call_operand.vmem [shape: f32[1,128], index: 4, kind: input, shape index: {}]
  %s5 = inlined_call_operand.vmem [shape: bf16[3,128,128], index: 5, kind: input, shape index: {}]
  %s6 = inlined_call_operand.vmem [shape: bf16[3,64,128], index: 6, kind: input, shape index: {}]
  %s7 = inlined_call_operand.vmem [shape: f32[1,128], index: 7, kind: input, shape index: {}]
  %s8 = inlined_call_operand.vmem [shape: bf16[3,128,32], index: 8, kind: input, shape index: {}]
  %s9 = inlined_call_operand.vmem [shape: bf16[3,32,64], index: 9, kind: input, shape index: {}]
  %s10 = inlined_call_operand.vmem [shape: f32[1,32], index: 10, kind: input, shape index: {}]
  %s11 = inlined_call_operand.vmem [shape: bf16[5,32], index: 11, kind: input, shape index: {}]
  %s12 = inlined_call_operand.vmem [shape: f32[1,32], index: 12, kind: input, shape index: {}]
  %s13 = inlined_call_operand.vmem [shape: f32[32,32], index: 13, kind: output, shape index: {0}]
  %s14 = inlined_call_operand.hbm [shape: f32[16,32], index: 14, kind: output, shape index: {1}]
  %15 = xla_tuple %s13, %s14
  %s16 = sld [smem:[#allocation0]]
  $region70: #{vrnn_encoding_forward.1} parent=0
    _
  %s18 = ssub.s32 1, %s16
  %s19 = scalar_select 0, %s18, %s16
  $region1: #{vrnn_encoding_forward.1} parent=0
    #allocation2 [shape = 'u8[8192]{0}', space=vmem, size = 0x2000, scoped, tag = 'output window, operand 1, single buffered']
    #allocation3 [shape = 's32[1]{0}', space=sflag, size = 0x4, scoped, tag = 'scoped memory for vrnn_encoding_forward.1']
    %20 = vsyncpa [#allocation3], 0
    // Predicated region
    $region2: #{vrnn_encoding_forward.1} parent=1 // pred_check
      _
    $region3: #{vrnn_encoding_forward.1} parent=1 // pred_check_branch
      %22 = sbr.rel (0) target = $region5
    $region4: #{vrnn_encoding_forward.1} parent=1 // pred_region
      _
    $region5: #{vrnn_encoding_forward.1} parent=1 // pred_fallthru
      _
    // Predicated region
    $region6: #{vrnn_encoding_forward.1} parent=1 // pred_check
      _
    $region7: #{vrnn_encoding_forward.1} parent=1 // pred_check_branch
      %24 = sbr.rel (0) target = $region9
    $region8: #{vrnn_encoding_forward.1} parent=1 // pred_region
      _
    $region9: #{vrnn_encoding_forward.1} parent=1 // pred_fallthru
      _
    // Predicated region
    $region10: #{vrnn_encoding_forward.1} parent=1 // pred_check
      _
    $region11: #{vrnn_encoding_forward.1} parent=1 // pred_check_branch
      %26 = sbr.rel (0) target = $region13
    $region12: #{vrnn_encoding_forward.1} parent=1 // pred_region
      _
    $region13: #{vrnn_encoding_forward.1} parent=1 // pred_fallthru
      _
    // Predicated region
    $region14: #{vrnn_encoding_forward.1} parent=1 // pred_check
      _
    $region15: #{vrnn_encoding_forward.1} parent=1 // pred_check_branch
      %28 = sbr.rel (0) target = $region17
    $region16: #{vrnn_encoding_forward.1} parent=1 // pred_region
      _
    $region17: #{vrnn_encoding_forward.1} parent=1 // pred_fallthru
      _
    // Predicated region
    $region18: #{vrnn_encoding_forward.1} parent=1 // pred_check
      _
    $region19: #{vrnn_encoding_forward.1} parent=1 // pred_check_branch
      %30 = sbr.rel (0) target = $region21
    $region20: #{vrnn_encoding_forward.1} parent=1 // pred_region
      _
    $region21: #{vrnn_encoding_forward.1} parent=1 // pred_fallthru
      _
    // Predicated region
    $region22: #{vrnn_encoding_forward.1} parent=1 // pred_check
      _
    $region23: #{vrnn_encoding_forward.1} parent=1 // pred_check_branch
      %32 = sbr.rel (0) target = $region25
    $region24: #{vrnn_encoding_forward.1} parent=1 // pred_region
      _
    $region25: #{vrnn_encoding_forward.1} parent=1 // pred_fallthru
      _
    // Predicated region
    $region26: #{vrnn_encoding_forward.1} parent=1 // pred_check
      _
    $region27: #{vrnn_encoding_forward.1} parent=1 // pred_check_branch
      %34 = sbr.rel (0) target = $region29
    $region28: #{vrnn_encoding_forward.1} parent=1 // pred_region
      _
    $region29: #{vrnn_encoding_forward.1} parent=1 // pred_fallthru
      _
    // Predicated region
    $region30: #{vrnn_encoding_forward.1} parent=1 // pred_check
      _
    $region31: #{vrnn_encoding_forward.1} parent=1 // pred_check_branch
      %36 = sbr.rel (0) target = $region33
    $region32: #{vrnn_encoding_forward.1} parent=1 // pred_region
      _
    $region33: #{vrnn_encoding_forward.1} parent=1 // pred_fallthru
      _
    // Predicated region
    $region34: #{vrnn_encoding_forward.1} parent=1 // pred_check
      _
    $region35: #{vrnn_encoding_forward.1} parent=1 // pred_check_branch
      %38 = sbr.rel (0) target = $region37
    $region36: #{vrnn_encoding_forward.1} parent=1 // pred_region
      _
    $region37: #{vrnn_encoding_forward.1} parent=1 // pred_fallthru
      _
    // Predicated region
    $region38: #{vrnn_encoding_forward.1} parent=1 // pred_check
      _
    $region39: #{vrnn_encoding_forward.1} parent=1 // pred_check_branch
      %40 = sbr.rel (0) target = $region41
    $region40: #{vrnn_encoding_forward.1} parent=1 // pred_region
      _
    $region41: #{vrnn_encoding_forward.1} parent=1 // pred_fallthru
      _
    // Predicated region
    $region42: #{vrnn_encoding_forward.1} parent=1 // pred_check
      _
    $region43: #{vrnn_encoding_forward.1} parent=1 // pred_check_branch
      %42 = sbr.rel (0) target = $region45
    $region44: #{vrnn_encoding_forward.1} parent=1 // pred_region
      _
    $region45: #{vrnn_encoding_forward.1} parent=1 // pred_fallthru
      _
    // Predicated region
    $region46: #{vrnn_encoding_forward.1} parent=1 // pred_check
      _
    $region47: #{vrnn_encoding_forward.1} parent=1 // pred_check_branch
      %44 = sbr.rel (0) target = $region49
    $region48: #{vrnn_encoding_forward.1} parent=1 // pred_region
      _
    $region49: #{vrnn_encoding_forward.1} parent=1 // pred_fallthru
      _
    // Predicated region
    $region50: #{vrnn_encoding_forward.1} parent=1 // pred_check
      _
    $region51: #{vrnn_encoding_forward.1} parent=1 // pred_check_branch
      %46 = sbr.rel (0) target = $region53
    $region52: #{vrnn_encoding_forward.1} parent=1 // pred_region
      _
    $region53: #{vrnn_encoding_forward.1} parent=1 // pred_fallthru
      _
    %v48 = vld [vmem:[%s0] sm:$0xf]
    %v49 = vld [vmem:[%s0 + $0x4] sm:$0xf]
    %v50 = vld [vmem:[%s0 + $0x8] sm:$0xf]
    %v51 = vld [vmem:[%s0 + $0xc] sm:$0xf]
    %v52 = vld [vmem:[%s0 + $0x10] sm:$0xf]
    %v53 = vld [vmem:[%s0 + $0x14] sm:$0xf]
    %v54 = vld [vmem:[%s0 + $0x18] sm:$0xf]
    %v55 = vld [vmem:[%s0 + $0x1c] sm:$0xf]
    %v56 = vld [vmem:[%s0 + $0x20] sm:$0xf]
    %v57 = vld [vmem:[%s0 + $0x24] sm:$0xf]
    %v58 = vld [vmem:[%s0 + $0x28] sm:$0xf]
    %v59 = vld [vmem:[%s0 + $0x2c] sm:$0xf]
    %v60 = vld [vmem:[%s0 + $0x30] sm:$0xf]
    %v61 = vld [vmem:[%s0 + $0x34] sm:$0xf]
    %v62 = vld [vmem:[%s0 + $0x38] sm:$0xf]
    %v63 = vld [vmem:[%s0 + $0x3c] sm:$0xf]
    %v64 = vld [vmem:[%s0 + $0x40] sm:$0xf]
    %v65 = vld [vmem:[%s0 + $0x44] sm:$0xf]
    %v66 = vld [vmem:[%s0 + $0x48] sm:$0xf]
    %v67 = vld [vmem:[%s0 + $0x4c] sm:$0xf]
    %v68 = vld [vmem:[%s0 + $0x50] sm:$0xf]
    %v69 = vld [vmem:[%s0 + $0x54] sm:$0xf]
    %v70 = vld [vmem:[%s0 + $0x58] sm:$0xf]
    %v71 = vld [vmem:[%s0 + $0x5c] sm:$0xf]
    %v72 = vld [vmem:[%s0 + $0x60] sm:$0xf]
    %v73 = vld [vmem:[%s0 + $0x64] sm:$0xf]
    %v74 = vld [vmem:[%s0 + $0x68] sm:$0xf]
    %v75 = vld [vmem:[%s0 + $0x6c] sm:$0xf]
    %v76 = vld [vmem:[%s0 + $0x70] sm:$0xf]
    %v77 = vld [vmem:[%s0 + $0x74] sm:$0xf]
    %v78 = vld [vmem:[%s0 + $0x78] sm:$0xf]
    %v79 = vld [vmem:[%s0 + $0x7c] sm:$0xf]
    %v80 = vld [vmem:[%s3] sm:$0xff]
    %v81 = vld [vmem:[%s3 + $0x8] sm:$0xff]
    %v82 = vld [vmem:[%s3 + $0x10] sm:$0xff]
    %v83 = vld [vmem:[%s3 + $0x18] sm:$0xff]
    %v84 = vld [vmem:[%s3 + $0x20] sm:$0xff]
    %v85 = vld [vmem:[%s3 + $0x28] sm:$0xff]
    %v86 = vld [vmem:[%s3 + $0x30] sm:$0xff]
    %v87 = vld [vmem:[%s3 + $0x38] sm:$0xff]
    %v88 = vld [vmem:[%s3 + $0x40] sm:$0xff]
    %v89 = vld [vmem:[%s3 + $0x48] sm:$0xff]
    %v90 = vld [vmem:[%s3 + $0x50] sm:$0xff]
    %v91 = vld [vmem:[%s3 + $0x58] sm:$0xff]
    %v92 = vld [vmem:[%s3 + $0x60] sm:$0xff]
    %v93 = vld [vmem:[%s3 + $0x68] sm:$0xff]
    %v94 = vld [vmem:[%s3 + $0x70] sm:$0xff]
    %v95 = vld [vmem:[%s3 + $0x78] sm:$0xff]
    %v112 = vunpack.c.l.b16 %v80
    %v113 = vunpack.c.h.b16 %v80
    %v114 = vunpack.c.l.b16 %v81
    %v115 = vunpack.c.h.b16 %v81
    %v116 = vunpack.c.l.b16 %v82
    %v117 = vunpack.c.h.b16 %v82
    %v118 = vunpack.c.l.b16 %v83
    %v119 = vunpack.c.h.b16 %v83
    %v120 = vunpack.c.l.b16 %v84
    %v121 = vunpack.c.h.b16 %v84
    %v122 = vunpack.c.l.b16 %v85
    %v123 = vunpack.c.h.b16 %v85
    %v124 = vunpack.c.l.b16 %v86
    %v125 = vunpack.c.h.b16 %v86
    %v126 = vunpack.c.l.b16 %v87
    %v127 = vunpack.c.h.b16 %v87
    %v128 = vunpack.c.l.b16 %v88
    %v129 = vunpack.c.h.b16 %v88
    %v130 = vunpack.c.l.b16 %v89
    %v131 = vunpack.c.h.b16 %v89
    %v132 = vunpack.c.l.b16 %v90
    %v133 = vunpack.c.h.b16 %v90
    %v134 = vunpack.c.l.b16 %v91
    %v135 = vunpack.c.h.b16 %v91
    %v136 = vunpack.c.l.b16 %v92
    %v137 = vunpack.c.h.b16 %v92
    %v138 = vunpack.c.l.b16 %v93
    %v139 = vunpack.c.h.b16 %v93
    %v140 = vunpack.c.l.b16 %v94
    %v141 = vunpack.c.h.b16 %v94
    %v142 = vunpack.c.l.b16 %v95
    %v143 = vunpack.c.h.b16 %v95
    %v144 = vpack.c.b16 %v114, %v112
    %v145 = vpack.c.b16 %v115, %v113
    %v146 = vpack.c.b16 %v118, %v116
    %v147 = vpack.c.b16 %v119, %v117
    %v148 = vpack.c.b16 %v122, %v120
    %v149 = vpack.c.b16 %v123, %v121
    %v150 = vpack.c.b16 %v126, %v124
    %v151 = vpack.c.b16 %v127, %v125
    %v152 = vpack.c.b16 %v130, %v128
    %v153 = vpack.c.b16 %v131, %v129
    %v154 = vpack.c.b16 %v134, %v132
    %v155 = vpack.c.b16 %v135, %v133
    %v156 = vpack.c.b16 %v138, %v136
    %v157 = vpack.c.b16 %v139, %v137
    %v158 = vpack.c.b16 %v142, %v140
    %v159 = vpack.c.b16 %v143, %v141
    %v208 = vunpack.c.l.b16 %v48
    %v209 = vunpack.c.l.b16 %v49
    %v210 = vunpack.c.l.b16 %v50
    %v211 = vunpack.c.l.b16 %v51
    %v212 = vunpack.c.l.b16 %v52
    %v213 = vunpack.c.l.b16 %v53
    %v214 = vunpack.c.l.b16 %v54
    %v215 = vunpack.c.l.b16 %v55
    %v216 = vunpack.c.l.b16 %v56
    %v217 = vunpack.c.l.b16 %v57
    %v218 = vunpack.c.l.b16 %v58
    %v219 = vunpack.c.l.b16 %v59
    %v220 = vunpack.c.l.b16 %v60
    %v221 = vunpack.c.l.b16 %v61
    %v222 = vunpack.c.l.b16 %v62
    %v223 = vunpack.c.l.b16 %v63
    %v224 = vunpack.c.l.b16 %v64
    %v225 = vunpack.c.l.b16 %v65
    %v226 = vunpack.c.l.b16 %v66
    %v227 = vunpack.c.l.b16 %v67
    %v228 = vunpack.c.l.b16 %v68
    %v229 = vunpack.c.l.b16 %v69
    %v230 = vunpack.c.l.b16 %v70
    %v231 = vunpack.c.l.b16 %v71
    %v232 = vunpack.c.l.b16 %v72
    %v233 = vunpack.c.l.b16 %v73
    %v234 = vunpack.c.l.b16 %v74
    %v235 = vunpack.c.l.b16 %v75
    %v236 = vunpack.c.l.b16 %v76
    %v237 = vunpack.c.l.b16 %v77
    %v238 = vunpack.c.l.b16 %v78
    %v239 = vunpack.c.l.b16 %v79
    %v240 = vpack.c.b16 %v209, %v208
    %v241 = vpack.c.b16 %v211, %v210
    %v242 = vpack.c.b16 %v213, %v212
    %v243 = vpack.c.b16 %v215, %v214
    %v244 = vpack.c.b16 %v217, %v216
    %v245 = vpack.c.b16 %v219, %v218
    %v246 = vpack.c.b16 %v221, %v220
    %v247 = vpack.c.b16 %v223, %v222
    %v248 = vpack.c.b16 %v225, %v224
    %v249 = vpack.c.b16 %v227, %v226
    %v250 = vpack.c.b16 %v229, %v228
    %v251 = vpack.c.b16 %v231, %v230
    %v252 = vpack.c.b16 %v233, %v232
    %v253 = vpack.c.b16 %v235, %v234
    %v254 = vpack.c.b16 %v237, %v236
    %v255 = vpack.c.b16 %v239, %v238
    %272 = vmatprep.subr.bf16.mxu0 0
    %273 = vmatpush1.bf16.msra.mxu0 %v240
    %274 = vmatprep.subr.bf16.mxu0 0
    %275 = vmatpush1.bf16.msra.mxu0 %v241
    %276 = vmatprep.subr.bf16.mxu0 0
    %277 = vmatpush1.bf16.msra.mxu0 %v242
    %278 = vmatprep.subr.bf16.mxu0 0
    %279 = vmatpush1.bf16.msra.mxu0 %v243
    %280 = vmatprep.subr.bf16.mxu0 0
    %281 = vmatpush1.bf16.msra.mxu0 %v244
    %282 = vmatprep.subr.bf16.mxu0 0
    %283 = vmatpush1.bf16.msra.mxu0 %v245
    %284 = vmatprep.subr.bf16.mxu0 0
    %285 = vmatpush1.bf16.msra.mxu0 %v246
    %286 = vmatprep.subr.bf16.mxu0 0
    %287 = vmatpush1.bf16.msra.mxu0 %v247
    %288 = vmatprep.subr.bf16.mxu0 0
    %289 = vmatpush1.bf16.msra.mxu0 %v248
    %290 = vmatprep.subr.bf16.mxu0 0
    %291 = vmatpush1.bf16.msra.mxu0 %v249
    %292 = vmatprep.subr.bf16.mxu0 0
    %293 = vmatpush1.bf16.msra.mxu0 %v250
    %294 = vmatprep.subr.bf16.mxu0 0
    %295 = vmatpush1.bf16.msra.mxu0 %v251
    %296 = vmatprep.subr.bf16.mxu0 0
    %297 = vmatpush1.bf16.msra.mxu0 %v252
    %298 = vmatprep.subr.bf16.mxu0 0
    %299 = vmatpush1.bf16.msra.mxu0 %v253
    %300 = vmatprep.subr.bf16.mxu0 0
    %301 = vmatpush1.bf16.msra.mxu0 %v254
    %302 = vmatprep.subr.bf16.mxu0 0
    %303 = vmatpush1.bf16.msra.mxu0 %v255
    %304 = vmatprep.mubr.bf16.mxu0 %v145
    %305 = vmatmul.mubr.bf16.gmra.mrb[0].mxu0 %v144
    %v306 = vpop.f32.mrb[0].mxu0
    %v307 = vadd.f32 0.0, %v306
    %v308 = vpop.f32.mrb[0].mxu0
    %v309 = vpop.f32.mrb[0].mxu0
    %v310 = vadd.f32 0.0, %v309
    %v311 = vpop.f32.mrb[0].mxu0
    %312 = vmatprep.mubr.bf16.mxu0 %v147
    %313 = vmatmul.mubr.bf16.gmra.mrb[0].mxu0 %v146
    %v314 = vpop.f32.mrb[0].mxu0
    %v315 = vadd.f32 0.0, %v314
    %v316 = vpop.f32.mrb[0].mxu0
    %v317 = vpop.f32.mrb[0].mxu0
    %v318 = vadd.f32 0.0, %v317
    %v319 = vpop.f32.mrb[0].mxu0
    %320 = vmatprep.mubr.bf16.mxu0 %v149
    %321 = vmatmul.mubr.bf16.gmra.mrb[0].mxu0 %v148
    %v322 = vpop.f32.mrb[0].mxu0
    %v323 = vadd.f32 0.0, %v322
    %v324 = vpop.f32.mrb[0].mxu0
    %v325 = vpop.f32.mrb[0].mxu0
    %v326 = vadd.f32 0.0, %v325
    %v327 = vpop.f32.mrb[0].mxu0
    %328 = vmatprep.mubr.bf16.mxu0 %v151
    %329 = vmatmul.mubr.bf16.gmra.mrb[0].mxu0 %v150
    %v330 = vpop.f32.mrb[0].mxu0
    %v331 = vadd.f32 0.0, %v330
    %v332 = vpop.f32.mrb[0].mxu0
    %v333 = vpop.f32.mrb[0].mxu0
    %v334 = vadd.f32 0.0, %v333
    %v335 = vpop.f32.mrb[0].mxu0
    %336 = vmatprep.mubr.bf16.mxu0 %v153
    %337 = vmatmul.mubr.bf16.gmra.mrb[0].mxu0 %v152
    %v338 = vpop.f32.mrb[0].mxu0
    %v339 = vadd.f32 0.0, %v338
    %v340 = vpop.f32.mrb[0].mxu0
    %v341 = vpop.f32.mrb[0].mxu0
    %v342 = vadd.f32 0.0, %v341
    %v343 = vpop.f32.mrb[0].mxu0
    %344 = vmatprep.mubr.bf16.mxu0 %v155
    %345 = vmatmul.mubr.bf16.gmra.mrb[0].mxu0 %v154
    %v346 = vpop.f32.mrb[0].mxu0
    %v347 = vadd.f32 0.0, %v346
    %v348 = vpop.f32.mrb[0].mxu0
    %v349 = vpop.f32.mrb[0].mxu0
    %v350 = vadd.f32 0.0, %v349
    %v351 = vpop.f32.mrb[0].mxu0
    %352 = vmatprep.mubr.bf16.mxu0 %v157
    %353 = vmatmul.mubr.bf16.gmra.mrb[0].mxu0 %v156
    %v354 = vpop.f32.mrb[0].mxu0
    %v355 = vadd.f32 0.0, %v354
    %v356 = vpop.f32.mrb[0].mxu0
    %v357 = vpop.f32.mrb[0].mxu0
    %v358 = vadd.f32 0.0, %v357
    %v359 = vpop.f32.mrb[0].mxu0
    %360 = vmatprep.mubr.bf16.mxu0 %v159
    %361 = vmatmul.mubr.bf16.gmra.mrb[0].mxu0 %v158
    %v362 = vpop.f32.mrb[0].mxu0
    %v363 = vadd.f32 0.0, %v362
    %v364 = vpop.f32.mrb[0].mxu0
    %v365 = vpop.f32.mrb[0].mxu0
    %v366 = vadd.f32 0.0, %v365
    %v367 = vpop.f32.mrb[0].mxu0
    %368 = vdwg.mxu0
    %v369 = vpack.c.bf16 %v310, %v307
    %v370 = vpack.c.bf16 %v318, %v315
    %v371 = vpack.c.bf16 %v326, %v323
    %v372 = vpack.c.bf16 %v334, %v331
    %v373 = vpack.c.bf16 %v342, %v339
    %v374 = vpack.c.bf16 %v350, %v347
    %v375 = vpack.c.bf16 %v358, %v355
    %v376 = vpack.c.bf16 %v366, %v363
    %v377 = vld [vmem:[%s2] sm:$0xf]
    %v378 = vld [vmem:[%s2 + $0x4] sm:$0xf]
    %v379 = vld [vmem:[%s2 + $0x8] sm:$0xf]
    %v380 = vld [vmem:[%s2 + $0xc] sm:$0xf]
    %v381 = vld [vmem:[%s2 + $0x10] sm:$0xf]
    %v382 = vld [vmem:[%s2 + $0x14] sm:$0xf]
    %v383 = vld [vmem:[%s2 + $0x18] sm:$0xf]
    %v384 = vld [vmem:[%s2 + $0x1c] sm:$0xf]
    %s385 = scalar_lea.vmem %s3, 128
    %v386 = vld [vmem:[%s385] sm:$0xff]
    %v387 = vld [vmem:[%s385 + $0x8] sm:$0xff]
    %v388 = vld [vmem:[%s385 + $0x10] sm:$0xff]
    %v389 = vld [vmem:[%s385 + $0x18] sm:$0xff]
    %v390 = vld [vmem:[%s385 + $0x20] sm:$0xff]
    %v391 = vld [vmem:[%s385 + $0x28] sm:$0xff]
    %v392 = vld [vmem:[%s385 + $0x30] sm:$0xff]
    %v393 = vld [vmem:[%s385 + $0x38] sm:$0xff]
    %v394 = vld [vmem:[%s385 + $0x40] sm:$0xff]
    %v395 = vld [vmem:[%s385 + $0x48] sm:$0xff]
    %v396 = vld [vmem:[%s385 + $0x50] sm:$0xff]
    %v397 = vld [vmem:[%s385 + $0x58] sm:$0xff]
    %v398 = vld [vmem:[%s385 + $0x60] sm:$0xff]
    %v399 = vld [vmem:[%s385 + $0x68] sm:$0xff]
    %v400 = vld [vmem:[%s385 + $0x70] sm:$0xff]
    %v401 = vld [vmem:[%s385 + $0x78] sm:$0xff]
    %v418 = vunpack.c.l.b16 %v386
    %v419 = vunpack.c.h.b16 %v386
    %v420 = vunpack.c.l.b16 %v387
    %v421 = vunpack.c.h.b16 %v387
    %v422 = vunpack.c.l.b16 %v388
    %v423 = vunpack.c.h.b16 %v388
    %v424 = vunpack.c.l.b16 %v389
    %v425 = vunpack.c.h.b16 %v389
    %v426 = vunpack.c.l.b16 %v390
    %v427 = vunpack.c.h.b16 %v390
    %v428 = vunpack.c.l.b16 %v391
    %v429 = vunpack.c.h.b16 %v391
    %v430 = vunpack.c.l.b16 %v392
    %v431 = vunpack.c.h.b16 %v392
    %v432 = vunpack.c.l.b16 %v393
    %v433 = vunpack.c.h.b16 %v393
    %v434 = vunpack.c.l.b16 %v394
    %v435 = vunpack.c.h.b16 %v394
    %v436 = vunpack.c.l.b16 %v395
    %v437 = vunpack.c.h.b16 %v395
    %v438 = vunpack.c.l.b16 %v396
    %v439 = vunpack.c.h.b16 %v396
    %v440 = vunpack.c.l.b16 %v397
    %v441 = vunpack.c.h.b16 %v397
    %v442 = vunpack.c.l.b16 %v398
    %v443 = vunpack.c.h.b16 %v398
    %v444 = vunpack.c.l.b16 %v399
    %v445 = vunpack.c.h.b16 %v399
    %v446 = vunpack.c.l.b16 %v400
    %v447 = vunpack.c.h.b16 %v400
    %v448 = vunpack.c.l.b16 %v401
    %v449 = vunpack.c.h.b16 %v401
    %v450 = vpack.c.b16 %v420, %v418
    %v451 = vpack.c.b16 %v421, %v419
    %v452 = vpack.c.b16 %v424, %v422
    %v453 = vpack.c.b16 %v425, %v423
    %v454 = vpack.c.b16 %v428, %v426
    %v455 = vpack.c.b16 %v429, %v427
    %v456 = vpack.c.b16 %v432, %v430
    %v457 = vpack.c.b16 %v433, %v431
    %v458 = vpack.c.b16 %v436, %v434
    %v459 = vpack.c.b16 %v437, %v435
    %v460 = vpack.c.b16 %v440, %v438
    %v461 = vpack.c.b16 %v441, %v439
    %v462 = vpack.c.b16 %v444, %v442
    %v463 = vpack.c.b16 %v445, %v443
    %v464 = vpack.c.b16 %v448, %v446
    %v465 = vpack.c.b16 %v449, %v447
    %482 = vmatprep.subr.bf16.mxu0 0
    %483 = vmatpush1.bf16.msra.mxu0 %v240
    %484 = vmatprep.subr.bf16.mxu0 0
    %485 = vmatpush1.bf16.msra.mxu0 %v241
    %486 = vmatprep.subr.bf16.mxu0 0
    %487 = vmatpush1.bf16.msra.mxu0 %v242
    %488 = vmatprep.subr.bf16.mxu0 0
    %489 = vmatpush1.bf16.msra.mxu0 %v243
    %490 = vmatprep.subr.bf16.mxu0 0
    %491 = vmatpush1.bf16.msra.mxu0 %v244
    %492 = vmatprep.subr.bf16.mxu0 0
    %493 = vmatpush1.bf16.msra.mxu0 %v245
    %494 = vmatprep.subr.bf16.mxu0 0
    %495 = vmatpush1.bf16.msra.mxu0 %v246
    %496 = vmatprep.subr.bf16.mxu0 0
    %497 = vmatpush1.bf16.msra.mxu0 %v247
    %498 = vmatprep.subr.bf16.mxu0 0
    %499 = vmatpush1.bf16.msra.mxu0 %v248
    %500 = vmatprep.subr.bf16.mxu0 0
    %501 = vmatpush1.bf16.msra.mxu0 %v249
    %502 = vmatprep.subr.bf16.mxu0 0
    %503 = vmatpush1.bf16.msra.mxu0 %v250
    %504 = vmatprep.subr.bf16.mxu0 0
    %505 = vmatpush1.bf16.msra.mxu0 %v251
    %506 = vmatprep.subr.bf16.mxu0 0
    %507 = vmatpush1.bf16.msra.mxu0 %v252
    %508 = vmatprep.subr.bf16.mxu0 0
    %509 = vmatpush1.bf16.msra.mxu0 %v253
    %510 = vmatprep.subr.bf16.mxu0 0
    %511 = vmatpush1.bf16.msra.mxu0 %v254
    %512 = vmatprep.subr.bf16.mxu0 0
    %513 = vmatpush1.bf16.msra.mxu0 %v255
    %514 = vmatprep.mubr.bf16.mxu0 %v451
    %515 = vmatmul.mubr.bf16.gmra.mrb[0].mxu0 %v450
    %v516 = vpop.f32.mrb[0].mxu0
    %v517 = vadd.f32 0.0, %v516
    %v518 = vpop.f32.mrb[0].mxu0
    %v519 = vpop.f32.mrb[0].mxu0
    %v520 = vadd.f32 0.0, %v519
    %v521 = vpop.f32.mrb[0].mxu0
    %522 = vmatprep.mubr.bf16.mxu0 %v453
    %523 = vmatmul.mubr.bf16.gmra.mrb[0].mxu0 %v452
    %v524 = vpop.f32.mrb[0].mxu0
    %v525 = vadd.f32 0.0, %v524
    %v526 = vpop.f32.mrb[0].mxu0
    %v527 = vpop.f32.mrb[0].mxu0
    %v528 = vadd.f32 0.0, %v527
    %v529 = vpop.f32.mrb[0].mxu0
    %530 = vmatprep.mubr.bf16.mxu0 %v455
    %531 = vmatmul.mubr.bf16.gmra.mrb[0].mxu0 %v454
    %v532 = vpop.f32.mrb[0].mxu0
    %v533 = vadd.f32 0.0, %v532
    %v534 = vpop.f32.mrb[0].mxu0
    %v535 = vpop.f32.mrb[0].mxu0
    %v536 = vadd.f32 0.0, %v535
    %v537 = vpop.f32.mrb[0].mxu0
    %538 = vmatprep.mubr.bf16.mxu0 %v457
    %539 = vmatmul.mubr.bf16.gmra.mrb[0].mxu0 %v456
    %v540 = vpop.f32.mrb[0].mxu0
    %v541 = vadd.f32 0.0, %v540
    %v542 = vpop.f32.mrb[0].mxu0
    %v543 = vpop.f32.mrb[0].mxu0
    %v544 = vadd.f32 0.0, %v543
    %v545 = vpop.f32.mrb[0].mxu0
    %546 = vmatprep.mubr.bf16.mxu0 %v459
    %547 = vmatmul.mubr.bf16.gmra.mrb[0].mxu0 %v458
    %v548 = vpop.f32.mrb[0].mxu0
    %v549 = vadd.f32 0.0, %v548
    %v550 = vpop.f32.mrb[0].mxu0
    %v551 = vpop.f32.mrb[0].mxu0
    %v552 = vadd.f32 0.0, %v551
    %v553 = vpop.f32.mrb[0].mxu0
    %554 = vmatprep.mubr.bf16.mxu0 %v461
    %555 = vmatmul.mubr.bf16.gmra.mrb[0].mxu0 %v460
    %v556 = vpop.f32.mrb[0].mxu0
    %v557 = vadd.f32 0.0, %v556
    %v558 = vpop.f32.mrb[0].mxu0
    %v559 = vpop.f32.mrb[0].mxu0
    %v560 = vadd.f32 0.0, %v559
    %v561 = vpop.f32.mrb[0].mxu0
    %562 = vmatprep.mubr.bf16.mxu0 %v463
    %563 = vmatmul.mubr.bf16.gmra.mrb[0].mxu0 %v462
    %v564 = vpop.f32.mrb[0].mxu0
    %v565 = vadd.f32 0.0, %v564
    %v566 = vpop.f32.mrb[0].mxu0
    %v567 = vpop.f32.mrb[0].mxu0
    %v568 = vadd.f32 0.0, %v567
    %v569 = vpop.f32.mrb[0].mxu0
    %570 = vmatprep.mubr.bf16.mxu0 %v465
    %571 = vmatmul.mubr.bf16.gmra.mrb[0].mxu0 %v464
    %v572 = vpop.f32.mrb[0].mxu0
    %v573 = vadd.f32 0.0, %v572
    %v574 = vpop.f32.mrb[0].mxu0
    %v575 = vpop.f32.mrb[0].mxu0
    %v576 = vadd.f32 0.0, %v575
    %v577 = vpop.f32.mrb[0].mxu0
    %578 = vdwg.mxu0
    %v579 = vpack.c.bf16 %v520, %v517
    %v580 = vpack.c.bf16 %v528, %v525
    %v581 = vpack.c.bf16 %v536, %v533
    %v582 = vpack.c.bf16 %v544, %v541
    %v583 = vpack.c.bf16 %v552, %v549
    %v584 = vpack.c.bf16 %v560, %v557
    %v585 = vpack.c.bf16 %v568, %v565
    %v586 = vpack.c.bf16 %v576, %v573
    %s587 = scalar_lea.vmem %s2, 32
    %v588 = vld [vmem:[%s587] sm:$0xf]
    %v589 = vld [vmem:[%s587 + $0x4] sm:$0xf]
    %v590 = vld [vmem:[%s587 + $0x8] sm:$0xf]
    %v591 = vld [vmem:[%s587 + $0xc] sm:$0xf]
    %v592 = vld [vmem:[%s587 + $0x10] sm:$0xf]
    %v593 = vld [vmem:[%s587 + $0x14] sm:$0xf]
    %v594 = vld [vmem:[%s587 + $0x18] sm:$0xf]
    %v595 = vld [vmem:[%s587 + $0x1c] sm:$0xf]
    %v604 = vunpack.c.l.b16 %v588
    %v605 = vunpack.c.l.b16 %v589
    %v606 = vunpack.c.l.b16 %v590
    %v607 = vunpack.c.l.b16 %v591
    %v608 = vunpack.c.l.b16 %v592
    %v609 = vunpack.c.l.b16 %v593
    %v610 = vunpack.c.l.b16 %v594
    %v611 = vunpack.c.l.b16 %v595
    %v612 = vpack.c.b16 %v605, %v604
    %v613 = vpack.c.b16 %v607, %v606
    %v614 = vpack.c.b16 %v609, %v608
    %v615 = vpack.c.b16 %v611, %v610
    %vm620 = vcmask 523264
    %v622 = vsel %vm620, %v579, 0
    %v625 = vsel %vm620, %v580, 0
    %v628 = vsel %vm620, %v581, 0
    %v631 = vsel %vm620, %v582, 0
    %v634 = vsel %vm620, %v583, 0
    %v637 = vsel %vm620, %v584, 0
    %v640 = vsel %vm620, %v585, 0
    %v643 = vsel %vm620, %v586, 0
    %645 = vmatprep.subr.bf16.mxu0 0
    %646 = vmatpush1.bf16.msra.mxu0 %v612
    %647 = vmatprep.subr.bf16.mxu0 0
    %648 = vmatpush1.bf16.msra.mxu0 %v613
    %649 = vmatprep.subr.bf16.mxu0 0
    %650 = vmatpush1.bf16.msra.mxu0 %v614
    %651 = vmatprep.subr.bf16.mxu0 0
    %652 = vmatpush1.bf16.msra.mxu0 %v615
    %653 = vmatprep.subr.bf16.mxu0 0
    %654 = vmatpush1.bf16.msra.mxu0 0
    %655 = vmatprep.subr.bf16.mxu0 0
    %656 = vmatpush1.bf16.msra.mxu0 0
    %657 = vmatprep.subr.bf16.mxu0 0
    %658 = vmatpush1.bf16.msra.mxu0 0
    %659 = vmatprep.subr.bf16.mxu0 0
    %660 = vmatpush1.bf16.msra.mxu0 0
    %661 = vmatprep.subr.bf16.mxu0 0
    %662 = vmatpush1.bf16.msra.mxu0 0
    %663 = vmatprep.subr.bf16.mxu0 0
    %664 = vmatpush1.bf16.msra.mxu0 0
    %665 = vmatprep.subr.bf16.mxu0 0
    %666 = vmatpush1.bf16.msra.mxu0 0
    %667 = vmatprep.subr.bf16.mxu0 0
    %668 = vmatpush1.bf16.msra.mxu0 0
    %669 = vmatprep.subr.bf16.mxu0 0
    %670 = vmatpush1.bf16.msra.mxu0 0
    %671 = vmatprep.subr.bf16.mxu0 0
    %672 = vmatpush1.bf16.msra.mxu0 0
    %673 = vmatprep.subr.bf16.mxu0 0
    %674 = vmatpush1.bf16.msra.mxu0 0
    %675 = vmatprep.subr.bf16.mxu0 0
    %676 = vmatpush1.bf16.msra.mxu0 0
    %677 = vmatprep.mubr.bf16.mxu0 0
    %678 = vmatmul.mubr.bf16.gmra.mrb[0].mxu0 %v622
    %v679 = vpop.f32.mrb[0].mxu0
    %v680 = vadd.f32 0.0, %v679
    %v681 = vpop.f32.mrb[0].mxu0
    %v682 = vpop.f32.mrb[0].mxu0
    %v683 = vadd.f32 0.0, %v682
    %v684 = vpop.f32.mrb[0].mxu0
    %685 = vmatprep.mubr.bf16.mxu0 0
    %686 = vmatmul.mubr.bf16.gmra.mrb[0].mxu0 %v625
    %v687 = vpop.f32.mrb[0].mxu0
    %v688 = vadd.f32 0.0, %v687
    %v689 = vpop.f32.mrb[0].mxu0
    %v690 = vpop.f32.mrb[0].mxu0
    %v691 = vadd.f32 0.0, %v690
    %v692 = vpop.f32.mrb[0].mxu0
    %693 = vmatprep.mubr.bf16.mxu0 0
    %694 = vmatmul.mubr.bf16.gmra.mrb[0].mxu0 %v628
    %v695 = vpop.f32.mrb[0].mxu0
    %v696 = vadd.f32 0.0, %v695
    %v697 = vpop.f32.mrb[0].mxu0
    %v698 = vpop.f32.mrb[0].mxu0
    %v699 = vadd.f32 0.0, %v698
    %v700 = vpop.f32.mrb[0].mxu0
    %701 = vmatprep.mubr.bf16.mxu0 0
    %702 = vmatmul.mubr.bf16.gmra.mrb[0].mxu0 %v631
    %v703 = vpop.f32.mrb[0].mxu0
    %v704 = vadd.f32 0.0, %v703
    %v705 = vpop.f32.mrb[0].mxu0
    %v706 = vpop.f32.mrb[0].mxu0
    %v707 = vadd.f32 0.0, %v706
    %v708 = vpop.f32.mrb[0].mxu0
    %709 = vmatprep.mubr.bf16.mxu0 0
    %710 = vmatmul.mubr.bf16.gmra.mrb[0].mxu0 %v634
    %v711 = vpop.f32.mrb[0].mxu0
    %v712 = vadd.f32 0.0, %v711
    %v713 = vpop.f32.mrb[0].mxu0
    %v714 = vpop.f32.mrb[0].mxu0
    %v715 = vadd.f32 0.0, %v714
    %v716 = vpop.f32.mrb[0].mxu0
    %717 = vmatprep.mubr.bf16.mxu0 0
    %718 = vmatmul.mubr.bf16.gmra.mrb[0].mxu0 %v637
    %v719 = vpop.f32.mrb[0].mxu0
    %v720 = vadd.f32 0.0, %v719
    %v721 = vpop.f32.mrb[0].mxu0
    %v722 = vpop.f32.mrb[0].mxu0
    %v723 = vadd.f32 0.0, %v722
    %v724 = vpop.f32.mrb[0].mxu0
    %725 = vmatprep.mubr.bf16.mxu0 0
    %726 = vmatmul.mubr.bf16.gmra.mrb[0].mxu0 %v640
    %v727 = vpop.f32.mrb[0].mxu0
    %v728 = vadd.f32 0.0, %v727
    %v729 = vpop.f32.mrb[0].mxu0
    %v730 = vpop.f32.mrb[0].mxu0
    %v731 = vadd.f32 0.0, %v730
    %v732 = vpop.f32.mrb[0].mxu0
    %733 = vmatprep.mubr.bf16.mxu0 0
    %734 = vmatmul.mubr.bf16.gmra.mrb[0].mxu0 %v643
    %v735 = vpop.f32.mrb[0].mxu0
    %v736 = vadd.f32 0.0, %v735
    %v737 = vpop.f32.mrb[0].mxu0
    %v738 = vpop.f32.mrb[0].mxu0
    %v739 = vadd.f32 0.0, %v738
    %v740 = vpop.f32.mrb[0].mxu0
    %741 = vdwg.mxu0
    %v750 = vunpack.c.l.b16 %v377
    %v751 = vunpack.c.l.b16 %v378
    %v752 = vunpack.c.l.b16 %v379
    %v753 = vunpack.c.l.b16 %v380
    %v754 = vunpack.c.l.b16 %v381
    %v755 = vunpack.c.l.b16 %v382
    %v756 = vunpack.c.l.b16 %v383
    %v757 = vunpack.c.l.b16 %v384
    %v758 = vpack.c.b16 %v751, %v750
    %v759 = vpack.c.b16 %v753, %v752
    %v760 = vpack.c.b16 %v755, %v754
    %v761 = vpack.c.b16 %v757, %v756
    %v767 = vsel %vm620, %v369, 0
    %v770 = vsel %vm620, %v370, 0
    %v773 = vsel %vm620, %v371, 0
    %v776 = vsel %vm620, %v372, 0
    %v779 = vsel %vm620, %v373, 0
    %v782 = vsel %vm620, %v374, 0
    %v785 = vsel %vm620, %v375, 0
    %v788 = vsel %vm620, %v376, 0
    %790 = vmatprep.subr.bf16.mxu0 0
    %791 = vmatpush1.bf16.msra.mxu0 %v758
    %792 = vmatprep.subr.bf16.mxu0 0
    %793 = vmatpush1.bf16.msra.mxu0 %v759
    %794 = vmatprep.subr.bf16.mxu0 0
    %795 = vmatpush1.bf16.msra.mxu0 %v760
    %796 = vmatprep.subr.bf16.mxu0 0
    %797 = vmatpush1.bf16.msra.mxu0 %v761
    %798 = vmatprep.subr.bf16.mxu0 0
    %799 = vmatpush1.bf16.msra.mxu0 0
    %800 = vmatprep.subr.bf16.mxu0 0
    %801 = vmatpush1.bf16.msra.mxu0 0
    %802 = vmatprep.subr.bf16.mxu0 0
    %803 = vmatpush1.bf16.msra.mxu0 0
    %804 = vmatprep.subr.bf16.mxu0 0
    %805 = vmatpush1.bf16.msra.mxu0 0
    %806 = vmatprep.subr.bf16.mxu0 0
    %807 = vmatpush1.bf16.msra.mxu0 0
    %808 = vmatprep.subr.bf16.mxu0 0
    %809 = vmatpush1.bf16.msra.mxu0 0
    %810 = vmatprep.subr.bf16.mxu0 0
    %811 = vmatpush1.bf16.msra.mxu0 0
    %812 = vmatprep.subr.bf16.mxu0 0
    %813 = vmatpush1.bf16.msra.mxu0 0
    %814 = vmatprep.subr.bf16.mxu0 0
    %815 = vmatpush1.bf16.msra.mxu0 0
    %816 = vmatprep.subr.bf16.mxu0 0
    %817 = vmatpush1.bf16.msra.mxu0 0
    %818 = vmatprep.subr.bf16.mxu0 0
    %819 = vmatpush1.bf16.msra.mxu0 0
    %820 = vmatprep.subr.bf16.mxu0 0
    %821 = vmatpush1.bf16.msra.mxu0 0
    %822 = vmatprep.mubr.bf16.mxu0 0
    %823 = vmatmul.mubr.bf16.gmra.mrb[0].mxu0 %v767
    %v824 = vpop.f32.mrb[0].mxu0
    %v825 = vadd.f32 %v680, %v824
    %v826 = vpop.f32.mrb[0].mxu0
    %v827 = vpop.f32.mrb[0].mxu0
    %v828 = vadd.f32 %v683, %v827
    %v829 = vpop.f32.mrb[0].mxu0
    %830 = vmatprep.mubr.bf16.mxu0 0
    %831 = vmatmul.mubr.bf16.gmra.mrb[0].mxu0 %v770
    %v832 = vpop.f32.mrb[0].mxu0
    %v833 = vadd.f32 %v688, %v832
    %v834 = vpop.f32.mrb[0].mxu0
    %v835 = vpop.f32.mrb[0].mxu0
    %v836 = vadd.f32 %v691, %v835
    %v837 = vpop.f32.mrb[0].mxu0
    %838 = vmatprep.mubr.bf16.mxu0 0
    %839 = vmatmul.mubr.bf16.gmra.mrb[0].mxu0 %v773
    %v840 = vpop.f32.mrb[0].mxu0
    %v841 = vadd.f32 %v696, %v840
    %v842 = vpop.f32.mrb[0].mxu0
    %v843 = vpop.f32.mrb[0].mxu0
    %v844 = vadd.f32 %v699, %v843
    %v845 = vpop.f32.mrb[0].mxu0
    %846 = vmatprep.mubr.bf16.mxu0 0
    %847 = vmatmul.mubr.bf16.gmra.mrb[0].mxu0 %v776
    %v848 = vpop.f32.mrb[0].mxu0
    %v849 = vadd.f32 %v704, %v848
    %v850 = vpop.f32.mrb[0].mxu0
    %v851 = vpop.f32.mrb[0].mxu0
    %v852 = vadd.f32 %v707, %v851
    %v853 = vpop.f32.mrb[0].mxu0
    %854 = vmatprep.mubr.bf16.mxu0 0
    %855 = vmatmul.mubr.bf16.gmra.mrb[0].mxu0 %v779
    %v856 = vpop.f32.mrb[0].mxu0
    %v857 = vadd.f32 %v712, %v856
    %v858 = vpop.f32.mrb[0].mxu0
    %v859 = vpop.f32.mrb[0].mxu0
    %v860 = vadd.f32 %v715, %v859
    %v861 = vpop.f32.mrb[0].mxu0
    %862 = vmatprep.mubr.bf16.mxu0 0
    %863 = vmatmul.mubr.bf16.gmra.mrb[0].mxu0 %v782
    %v864 = vpop.f32.mrb[0].mxu0
    %v865 = vadd.f32 %v720, %v864
    %v866 = vpop.f32.mrb[0].mxu0
    %v867 = vpop.f32.mrb[0].mxu0
    %v868 = vadd.f32 %v723, %v867
    %v869 = vpop.f32.mrb[0].mxu0
    %870 = vmatprep.mubr.bf16.mxu0 0
    %871 = vmatmul.mubr.bf16.gmra.mrb[0].mxu0 %v785
    %v872 = vpop.f32.mrb[0].mxu0
    %v873 = vadd.f32 %v728, %v872
    %v874 = vpop.f32.mrb[0].mxu0
    %v875 = vpop.f32.mrb[0].mxu0
    %v876 = vadd.f32 %v731, %v875
    %v877 = vpop.f32.mrb[0].mxu0
    %878 = vmatprep.mubr.bf16.mxu0 0
    %879 = vmatmul.mubr.bf16.gmra.mrb[0].mxu0 %v788
    %v880 = vpop.f32.mrb[0].mxu0
    %v881 = vadd.f32 %v736, %v880
    %v882 = vpop.f32.mrb[0].mxu0
    %v883 = vpop.f32.mrb[0].mxu0
    %v884 = vadd.f32 %v739, %v883
    %v885 = vpop.f32.mrb[0].mxu0
    %886 = vdwg.mxu0
    %s887 = scalar_lea.vmem %s3, 256
    %v888 = vld [vmem:[%s887] sm:$0xff]
    %v889 = vld [vmem:[%s887 + $0x8] sm:$0xff]
    %v890 = vld [vmem:[%s887 + $0x10] sm:$0xff]
    %v891 = vld [vmem:[%s887 + $0x18] sm:$0xff]
    %v892 = vld [vmem:[%s887 + $0x20] sm:$0xff]
    %v893 = vld [vmem:[%s887 + $0x28] sm:$0xff]
    %v894 = vld [vmem:[%s887 + $0x30] sm:$0xff]
    %v895 = vld [vmem:[%s887 + $0x38] sm:$0xff]
    %v896 = vld [vmem:[%s887 + $0x40] sm:$0xff]
    %v897 = vld [vmem:[%s887 + $0x48] sm:$0xff]
    %v898 = vld [vmem:[%s887 + $0x50] sm:$0xff]
    %v899 = vld [vmem:[%s887 + $0x58] sm:$0xff]
    %v900 = vld [vmem:[%s887 + $0x60] sm:$0xff]
    %v901 = vld [vmem:[%s887 + $0x68] sm:$0xff]
    %v902 = vld [vmem:[%s887 + $0x70] sm:$0xff]
    %v903 = vld [vmem:[%s887 + $0x78] sm:$0xff]
    %v920 = vunpack.c.l.b16 %v888
    %v921 = vunpack.c.h.b16 %v888
    %v922 = vunpack.c.l.b16 %v889
    %v923 = vunpack.c.h.b16 %v889
    %v924 = vunpack.c.l.b16 %v890
    %v925 = vunpack.c.h.b16 %v890
    %v926 = vunpack.c.l.b16 %v891
    %v927 = vunpack.c.h.b16 %v891
    %v928 = vunpack.c.l.b16 %v892
    %v929 = vunpack.c.h.b16 %v892
    %v930 = vunpack.c.l.b16 %v893
    %v931 = vunpack.c.h.b16 %v893
    %v932 = vunpack.c.l.b16 %v894
    %v933 = vunpack.c.h.b16 %v894
    %v934 = vunpack.c.l.b16 %v895
    %v935 = vunpack.c.h.b16 %v895
    %v936 = vunpack.c.l.b16 %v896
    %v937 = vunpack.c.h.b16 %v896
    %v938 = vunpack.c.l.b16 %v897
    %v939 = vunpack.c.h.b16 %v897
    %v940 = vunpack.c.l.b16 %v898
    %v941 = vunpack.c.h.b16 %v898
    %v942 = vunpack.c.l.b16 %v899
    %v943 = vunpack.c.h.b16 %v899
    %v944 = vunpack.c.l.b16 %v900
    %v945 = vunpack.c.h.b16 %v900
    %v946 = vunpack.c.l.b16 %v901
    %v947 = vunpack.c.h.b16 %v901
    %v948 = vunpack.c.l.b16 %v902
    %v949 = vunpack.c.h.b16 %v902
    %v950 = vunpack.c.l.b16 %v903
    %v951 = vunpack.c.h.b16 %v903
    %v952 = vpack.c.b16 %v922, %v920
    %v953 = vpack.c.b16 %v923, %v921
    %v954 = vpack.c.b16 %v926, %v924
    %v955 = vpack.c.b16 %v927, %v925
    %v956 = vpack.c.b16 %v930, %v928
    %v957 = vpack.c.b16 %v931, %v929
    %v958 = vpack.c.b16 %v934, %v932
    %v959 = vpack.c.b16 %v935, %v933
    %v960 = vpack.c.b16 %v938, %v936
    %v961 = vpack.c.b16 %v939, %v937
    %v962 = vpack.c.b16 %v942, %v940
    %v963 = vpack.c.b16 %v943, %v941
    %v964 = vpack.c.b16 %v946, %v944
    %v965 = vpack.c.b16 %v947, %v945
    %v966 = vpack.c.b16 %v950, %v948
    %v967 = vpack.c.b16 %v951, %v949
    %984 = vmatprep.subr.bf16.mxu0 0
    %985 = vmatpush1.bf16.msra.mxu0 %v240
    %986 = vmatprep.subr.bf16.mxu0 0
    %987 = vmatpush1.bf16.msra.mxu0 %v241
    %988 = vmatprep.subr.bf16.mxu0 0
    %989 = vmatpush1.bf16.msra.mxu0 %v242
    %990 = vmatprep.subr.bf16.mxu0 0
    %991 = vmatpush1.bf16.msra.mxu0 %v243
    %992 = vmatprep.subr.bf16.mxu0 0
    %993 = vmatpush1.bf16.msra.mxu0 %v244
    %994 = vmatprep.subr.bf16.mxu0 0
    %995 = vmatpush1.bf16.msra.mxu0 %v245
    %996 = vmatprep.subr.bf16.mxu0 0
    %997 = vmatpush1.bf16.msra.mxu0 %v246
    %998 = vmatprep.subr.bf16.mxu0 0
    %999 = vmatpush1.bf16.msra.mxu0 %v247
    %1000 = vmatprep.subr.bf16.mxu0 0
    %1001 = vmatpush1.bf16.msra.mxu0 %v248
    %1002 = vmatprep.subr.bf16.mxu0 0
    %1003 = vmatpush1.bf16.msra.mxu0 %v249
    %1004 = vmatprep.subr.bf16.mxu0 0
    %1005 = vmatpush1.bf16.msra.mxu0 %v250
    %1006 = vmatprep.subr.bf16.mxu0 0
    %1007 = vmatpush1.bf16.msra.mxu0 %v251
    %1008 = vmatprep.subr.bf16.mxu0 0
    %1009 = vmatpush1.bf16.msra.mxu0 %v252
    %1010 = vmatprep.subr.bf16.mxu0 0
    %1011 = vmatpush1.bf16.msra.mxu0 %v253
    %1012 = vmatprep.subr.bf16.mxu0 0
    %1013 = vmatpush1.bf16.msra.mxu0 %v254
    %1014 = vmatprep.subr.bf16.mxu0 0
    %1015 = vmatpush1.bf16.msra.mxu0 %v255
    %1016 = vmatprep.mubr.bf16.mxu0 %v953
    %1017 = vmatmul.mubr.bf16.gmra.mrb[0].mxu0 %v952
    %v1018 = vpop.f32.mrb[0].mxu0
    %v1019 = vadd.f32 0.0, %v1018
    %v1020 = vpop.f32.mrb[0].mxu0
    %v1021 = vpop.f32.mrb[0].mxu0
    %v1022 = vadd.f32 0.0, %v1021
    %v1023 = vpop.f32.mrb[0].mxu0
    %1024 = vmatprep.mubr.bf16.mxu0 %v955
    %1025 = vmatmul.mubr.bf16.gmra.mrb[0].mxu0 %v954
    %v1026 = vpop.f32.mrb[0].mxu0
    %v1027 = vadd.f32 0.0, %v1026
    %v1028 = vpop.f32.mrb[0].mxu0
    %v1029 = vpop.f32.mrb[0].mxu0
    %v1030 = vadd.f32 0.0, %v1029
    %v1031 = vpop.f32.mrb[0].mxu0
    %1032 = vmatprep.mubr.bf16.mxu0 %v957
    %1033 = vmatmul.mubr.bf16.gmra.mrb[0].mxu0 %v956
    %v1034 = vpop.f32.mrb[0].mxu0
    %v1035 = vadd.f32 0.0, %v1034
    %v1036 = vpop.f32.mrb[0].mxu0
    %v1037 = vpop.f32.mrb[0].mxu0
    %v1038 = vadd.f32 0.0, %v1037
    %v1039 = vpop.f32.mrb[0].mxu0
    %1040 = vmatprep.mubr.bf16.mxu0 %v959
    %1041 = vmatmul.mubr.bf16.gmra.mrb[0].mxu0 %v958
    %v1042 = vpop.f32.mrb[0].mxu0
    %v1043 = vadd.f32 0.0, %v1042
    %v1044 = vpop.f32.mrb[0].mxu0
    %v1045 = vpop.f32.mrb[0].mxu0
    %v1046 = vadd.f32 0.0, %v1045
    %v1047 = vpop.f32.mrb[0].mxu0
    %1048 = vmatprep.mubr.bf16.mxu0 %v961
    %1049 = vmatmul.mubr.bf16.gmra.mrb[0].mxu0 %v960
    %v1050 = vpop.f32.mrb[0].mxu0
    %v1051 = vadd.f32 0.0, %v1050
    %v1052 = vpop.f32.mrb[0].mxu0
    %v1053 = vpop.f32.mrb[0].mxu0
    %v1054 = vadd.f32 0.0, %v1053
    %v1055 = vpop.f32.mrb[0].mxu0
    %1056 = vmatprep.mubr.bf16.mxu0 %v963
    %1057 = vmatmul.mubr.bf16.gmra.mrb[0].mxu0 %v962
    %v1058 = vpop.f32.mrb[0].mxu0
    %v1059 = vadd.f32 0.0, %v1058
    %v1060 = vpop.f32.mrb[0].mxu0
    %v1061 = vpop.f32.mrb[0].mxu0
    %v1062 = vadd.f32 0.0, %v1061
    %v1063 = vpop.f32.mrb[0].mxu0
    %1064 = vmatprep.mubr.bf16.mxu0 %v965
    %1065 = vmatmul.mubr.bf16.gmra.mrb[0].mxu0 %v964
    %v1066 = vpop.f32.mrb[0].mxu0
    %v1067 = vadd.f32 0.0, %v1066
    %v1068 = vpop.f32.mrb[0].mxu0
    %v1069 = vpop.f32.mrb[0].mxu0
    %v1070 = vadd.f32 0.0, %v1069
    %v1071 = vpop.f32.mrb[0].mxu0
    %1072 = vmatprep.mubr.bf16.mxu0 %v967
    %1073 = vmatmul.mubr.bf16.gmra.mrb[0].mxu0 %v966
    %v1074 = vpop.f32.mrb[0].mxu0
    %v1075 = vadd.f32 0.0, %v1074
    %v1076 = vpop.f32.mrb[0].mxu0
    %v1077 = vpop.f32.mrb[0].mxu0
    %v1078 = vadd.f32 0.0, %v1077
    %v1079 = vpop.f32.mrb[0].mxu0
    %1080 = vdwg.mxu0
    %v1081 = vpack.c.bf16 %v1022, %v1019
    %v1082 = vpack.c.bf16 %v1030, %v1027
    %v1083 = vpack.c.bf16 %v1038, %v1035
    %v1084 = vpack.c.bf16 %v1046, %v1043
    %v1085 = vpack.c.bf16 %v1054, %v1051
    %v1086 = vpack.c.bf16 %v1062, %v1059
    %v1087 = vpack.c.bf16 %v1070, %v1067
    %v1088 = vpack.c.bf16 %v1078, %v1075
    %s1089 = scalar_lea.vmem %s2, 64
    %v1090 = vld [vmem:[%s1089] sm:$0xf]
    %v1091 = vld [vmem:[%s1089 + $0x4] sm:$0xf]
    %v1092 = vld [vmem:[%s1089 + $0x8] sm:$0xf]
    %v1093 = vld [vmem:[%s1089 + $0xc] sm:$0xf]
    %v1094 = vld [vmem:[%s1089 + $0x10] sm:$0xf]
    %v1095 = vld [vmem:[%s1089 + $0x14] sm:$0xf]
    %v1096 = vld [vmem:[%s1089 + $0x18] sm:$0xf]
    %v1097 = vld [vmem:[%s1089 + $0x1c] sm:$0xf]
    %v1106 = vunpack.c.l.b16 %v1090
    %v1107 = vunpack.c.l.b16 %v1091
    %v1108 = vunpack.c.l.b16 %v1092
    %v1109 = vunpack.c.l.b16 %v1093
    %v1110 = vunpack.c.l.b16 %v1094
    %v1111 = vunpack.c.l.b16 %v1095
    %v1112 = vunpack.c.l.b16 %v1096
    %v1113 = vunpack.c.l.b16 %v1097
    %v1114 = vpack.c.b16 %v1107, %v1106
    %v1115 = vpack.c.b16 %v1109, %v1108
    %v1116 = vpack.c.b16 %v1111, %v1110
    %v1117 = vpack.c.b16 %v1113, %v1112
    %v1123 = vsel %vm620, %v1081, 0
    %v1126 = vsel %vm620, %v1082, 0
    %v1129 = vsel %vm620, %v1083, 0
    %v1132 = vsel %vm620, %v1084, 0
    %v1135 = vsel %vm620, %v1085, 0
    %v1138 = vsel %vm620, %v1086, 0
    %v1141 = vsel %vm620, %v1087, 0
    %v1144 = vsel %vm620, %v1088, 0
    %1146 = vmatprep.subr.bf16.mxu0 0
    %1147 = vmatpush1.bf16.msra.mxu0 %v1114
    %1148 = vmatprep.subr.bf16.mxu0 0
    %1149 = vmatpush1.bf16.msra.mxu0 %v1115
    %1150 = vmatprep.subr.bf16.mxu0 0
    %1151 = vmatpush1.bf16.msra.mxu0 %v1116
    %1152 = vmatprep.subr.bf16.mxu0 0
    %1153 = vmatpush1.bf16.msra.mxu0 %v1117
    %1154 = vmatprep.subr.bf16.mxu0 0
    %1155 = vmatpush1.bf16.msra.mxu0 0
    %1156 = vmatprep.subr.bf16.mxu0 0
    %1157 = vmatpush1.bf16.msra.mxu0 0
    %1158 = vmatprep.subr.bf16.mxu0 0
    %1159 = vmatpush1.bf16.msra.mxu0 0
    %1160 = vmatprep.subr.bf16.mxu0 0
    %1161 = vmatpush1.bf16.msra.mxu0 0
    %1162 = vmatprep.subr.bf16.mxu0 0
    %1163 = vmatpush1.bf16.msra.mxu0 0
    %1164 = vmatprep.subr.bf16.mxu0 0
    %1165 = vmatpush1.bf16.msra.mxu0 0
    %1166 = vmatprep.subr.bf16.mxu0 0
    %1167 = vmatpush1.bf16.msra.mxu0 0
    %1168 = vmatprep.subr.bf16.mxu0 0
    %1169 = vmatpush1.bf16.msra.mxu0 0
    %1170 = vmatprep.subr.bf16.mxu0 0
    %1171 = vmatpush1.bf16.msra.mxu0 0
    %1172 = vmatprep.subr.bf16.mxu0 0
    %1173 = vmatpush1.bf16.msra.mxu0 0
    %1174 = vmatprep.subr.bf16.mxu0 0
    %1175 = vmatpush1.bf16.msra.mxu0 0
    %1176 = vmatprep.subr.bf16.mxu0 0
    %1177 = vmatpush1.bf16.msra.mxu0 0
    %1178 = vmatprep.mubr.bf16.mxu0 0
    %1179 = vmatmul.mubr.bf16.gmra.mrb[0].mxu0 %v1123
    %v1180 = vpop.f32.mrb[0].mxu0
    %v1181 = vadd.f32 0.0, %v1180
    %v1182 = vpop.f32.mrb[0].mxu0
    %v1183 = vpop.f32.mrb[0].mxu0
    %v1184 = vadd.f32 0.0, %v1183
    %v1185 = vpop.f32.mrb[0].mxu0
    %1186 = vmatprep.mubr.bf16.mxu0 0
    %1187 = vmatmul.mubr.bf16.gmra.mrb[0].mxu0 %v1126
    %v1188 = vpop.f32.mrb[0].mxu0
    %v1189 = vadd.f32 0.0, %v1188
    %v1190 = vpop.f32.mrb[0].mxu0
    %v1191 = vpop.f32.mrb[0].mxu0
    %v1192 = vadd.f32 0.0, %v1191
    %v1193 = vpop.f32.mrb[0].mxu0
    %1194 = vmatprep.mubr.bf16.mxu0 0
    %1195 = vmatmul.mubr.bf16.gmra.mrb[0].mxu0 %v1129
    %v1196 = vpop.f32.mrb[0].mxu0
    %v1197 = vadd.f32 0.0, %v1196
    %v1198 = vpop.f32.mrb[0].mxu0
    %v1199 = vpop.f32.mrb[0].mxu0
    %v1200 = vadd.f32 0.0, %v1199
    %v1201 = vpop.f32.mrb[0].mxu0
    %1202 = vmatprep.mubr.bf16.mxu0 0
    %1203 = vmatmul.mubr.bf16.gmra.mrb[0].mxu0 %v1132
    %v1204 = vpop.f32.mrb[0].mxu0
    %v1205 = vadd.f32 0.0, %v1204
    %v1206 = vpop.f32.mrb[0].mxu0
    %v1207 = vpop.f32.mrb[0].mxu0
    %v1208 = vadd.f32 0.0, %v1207
    %v1209 = vpop.f32.mrb[0].mxu0
    %1210 = vmatprep.mubr.bf16.mxu0 0
    %1211 = vmatmul.mubr.bf16.gmra.mrb[0].mxu0 %v1135
    %v1212 = vpop.f32.mrb[0].mxu0
    %v1213 = vadd.f32 0.0, %v1212
    %v1214 = vpop.f32.mrb[0].mxu0
    %v1215 = vpop.f32.mrb[0].mxu0
    %v1216 = vadd.f32 0.0, %v1215
    %v1217 = vpop.f32.mrb[0].mxu0
    %1218 = vmatprep.mubr.bf16.mxu0 0
    %1219 = vmatmul.mubr.bf16.gmra.mrb[0].mxu0 %v1138
    %v1220 = vpop.f32.mrb[0].mxu0
    %v1221 = vadd.f32 0.0, %v1220
    %v1222 = vpop.f32.mrb[0].mxu0
    %v1223 = vpop.f32.mrb[0].mxu0
    %v1224 = vadd.f32 0.0, %v1223
    %v1225 = vpop.f32.mrb[0].mxu0
    %1226 = vmatprep.mubr.bf16.mxu0 0
    %1227 = vmatmul.mubr.bf16.gmra.mrb[0].mxu0 %v1141
    %v1228 = vpop.f32.mrb[0].mxu0
    %v1229 = vadd.f32 0.0, %v1228
    %v1230 = vpop.f32.mrb[0].mxu0
    %v1231 = vpop.f32.mrb[0].mxu0
    %v1232 = vadd.f32 0.0, %v1231
    %v1233 = vpop.f32.mrb[0].mxu0
    %1234 = vmatprep.mubr.bf16.mxu0 0
    %1235 = vmatmul.mubr.bf16.gmra.mrb[0].mxu0 %v1144
    %v1236 = vpop.f32.mrb[0].mxu0
    %v1237 = vadd.f32 0.0, %v1236
    %v1238 = vpop.f32.mrb[0].mxu0
    %v1239 = vpop.f32.mrb[0].mxu0
    %v1240 = vadd.f32 0.0, %v1239
    %v1241 = vpop.f32.mrb[0].mxu0
    %1242 = vdwg.mxu0
    %v1243 = vadd.f32 %v825, %v1181
    %v1244 = vadd.f32 %v828, %v1184
    %v1245 = vadd.f32 %v833, %v1189
    %v1246 = vadd.f32 %v836, %v1192
    %v1247 = vadd.f32 %v841, %v1197
    %v1248 = vadd.f32 %v844, %v1200
    %v1249 = vadd.f32 %v849, %v1205
    %v1250 = vadd.f32 %v852, %v1208
    %v1251 = vadd.f32 %v857, %v1213
    %v1252 = vadd.f32 %v860, %v1216
    %v1253 = vadd.f32 %v865, %v1221
    %v1254 = vadd.f32 %v868, %v1224
    %v1255 = vadd.f32 %v873, %v1229
    %v1256 = vadd.f32 %v876, %v1232
    %v1257 = vadd.f32 %v881, %v1237
    %v1258 = vadd.f32 %v884, %v1240
    %v1259 = vld [vmem:[%s4] sm:$0x1]
    %v1261 = vlaneseq
    %v1262 = vshrl.u32 %v1261, 7
    %v1263 = vsub.s32 0, %v1262
    %v1264 = vrot.slane %v1259, %v1263
    %v1266 = vadd.f32 %v1243, %v1264
    %v1267 = vadd.f32 %v1244, %v1264
    %v1268 = vadd.f32 %v1245, %v1264
    %v1269 = vadd.f32 %v1246, %v1264
    %v1270 = vadd.f32 %v1247, %v1264
    %v1271 = vadd.f32 %v1248, %v1264
    %v1272 = vadd.f32 %v1249, %v1264
    %v1273 = vadd.f32 %v1250, %v1264
    %v1274 = vadd.f32 %v1251, %v1264
    %v1275 = vadd.f32 %v1252, %v1264
    %v1276 = vadd.f32 %v1253, %v1264
    %v1277 = vadd.f32 %v1254, %v1264
    %v1278 = vadd.f32 %v1255, %v1264
    %v1279 = vadd.f32 %v1256, %v1264
    %v1280 = vadd.f32 %v1257, %v1264
    %v1281 = vadd.f32 %v1258, %v1264
    %v1282 = vmax.f32 %v1266, 0.0
    %v1283 = vmax.f32 %v1267, 0.0
    %v1284 = vmax.f32 %v1268, 0.0
    %v1285 = vmax.f32 %v1269, 0.0
    %v1286 = vmax.f32 %v1270, 0.0
    %v1287 = vmax.f32 %v1271, 0.0
    %v1288 = vmax.f32 %v1272, 0.0
    %v1289 = vmax.f32 %v1273, 0.0
    %v1290 = vmax.f32 %v1274, 0.0
    %v1291 = vmax.f32 %v1275, 0.0
    %v1292 = vmax.f32 %v1276, 0.0
    %v1293 = vmax.f32 %v1277, 0.0
    %v1294 = vmax.f32 %v1278, 0.0
    %v1295 = vmax.f32 %v1279, 0.0
    %v1296 = vmax.f32 %v1280, 0.0
    %v1297 = vmax.f32 %v1281, 0.0
    %v1298 = vpack.c.bf16 %v1283, %v1282
    %v1299 = vpack.c.bf16 %v1285, %v1284
    %v1300 = vpack.c.bf16 %v1287, %v1286
    %v1301 = vpack.c.bf16 %v1289, %v1288
    %v1302 = vpack.c.bf16 %v1291, %v1290
    %v1303 = vpack.c.bf16 %v1293, %v1292
    %v1304 = vpack.c.bf16 %v1295, %v1294
    %v1305 = vpack.c.bf16 %v1297, %v1296
    %v1306 = vld [vmem:[%s6] sm:$0xf]
    %v1307 = vld [vmem:[%s6 + $0x4] sm:$0xf]
    %v1308 = vld [vmem:[%s6 + $0x8] sm:$0xf]
    %v1309 = vld [vmem:[%s6 + $0xc] sm:$0xf]
    %v1310 = vld [vmem:[%s6 + $0x10] sm:$0xf]
    %v1311 = vld [vmem:[%s6 + $0x14] sm:$0xf]
    %v1312 = vld [vmem:[%s6 + $0x18] sm:$0xf]
    %v1313 = vld [vmem:[%s6 + $0x1c] sm:$0xf]
    %v1322 = vunpack.c.l.b16 %v1306
    %v1323 = vunpack.c.l.b16 %v1307
    %v1324 = vunpack.c.l.b16 %v1308
    %v1325 = vunpack.c.l.b16 %v1309
    %v1326 = vunpack.c.l.b16 %v1310
    %v1327 = vunpack.c.l.b16 %v1311
    %v1328 = vunpack.c.l.b16 %v1312
    %v1329 = vunpack.c.l.b16 %v1313
    %v1330 = vpack.c.b16 %v1323, %v1322
    %v1331 = vpack.c.b16 %v1325, %v1324
    %v1332 = vpack.c.b16 %v1327, %v1326
    %v1333 = vpack.c.b16 %v1329, %v1328
    %1338 = vmatprep.subr.bf16.mxu0 0
    %1339 = vmatpush1.bf16.msra.mxu0 %v1298
    %1340 = vmatprep.subr.bf16.mxu0 0
    %1341 = vmatpush1.bf16.msra.mxu0 %v1299
    %1342 = vmatprep.subr.bf16.mxu0 0
    %1343 = vmatpush1.bf16.msra.mxu0 %v1300
    %1344 = vmatprep.subr.bf16.mxu0 0
    %1345 = vmatpush1.bf16.msra.mxu0 %v1301
    %1346 = vmatprep.subr.bf16.mxu0 0
    %1347 = vmatpush1.bf16.msra.mxu0 %v1302
    %1348 = vmatprep.subr.bf16.mxu0 0
    %1349 = vmatpush1.bf16.msra.mxu0 %v1303
    %1350 = vmatprep.subr.bf16.mxu0 0
    %1351 = vmatpush1.bf16.msra.mxu0 %v1304
    %1352 = vmatprep.subr.bf16.mxu0 0
    %1353 = vmatpush1.bf16.msra.mxu0 %v1305
    %1354 = vmatprep.subr.bf16.mxu0 0
    %1355 = vmatpush1.bf16.msra.mxu0 0
    %1356 = vmatprep.subr.bf16.mxu0 0
    %1357 = vmatpush1.bf16.msra.mxu0 0
    %1358 = vmatprep.subr.bf16.mxu0 0
    %1359 = vmatpush1.bf16.msra.mxu0 0
    %1360 = vmatprep.subr.bf16.mxu0 0
    %1361 = vmatpush1.bf16.msra.mxu0 0
    %1362 = vmatprep.subr.bf16.mxu0 0
    %1363 = vmatpush1.bf16.msra.mxu0 0
    %1364 = vmatprep.subr.bf16.mxu0 0
    %1365 = vmatpush1.bf16.msra.mxu0 0
    %1366 = vmatprep.subr.bf16.mxu0 0
    %1367 = vmatpush1.bf16.msra.mxu0 0
    %1368 = vmatprep.subr.bf16.mxu0 0
    %1369 = vmatpush1.bf16.msra.mxu0 0
    %1370 = vmatprep.mubr.bf16.mxu0 0
    %1371 = vmatmul.mubr.bf16.gmra.mrb[0].mxu0 %v1330
    %v1372 = vpop.f32.mrb[0].mxu0
    %v1373 = vadd.f32 0.0, %v1372
    %v1374 = vpop.f32.mrb[0].mxu0
    %v1375 = vpop.f32.mrb[0].mxu0
    %v1376 = vadd.f32 0.0, %v1375
    %v1377 = vpop.f32.mrb[0].mxu0
    %1378 = vmatprep.mubr.bf16.mxu0 0
    %1379 = vmatmul.mubr.bf16.gmra.mrb[0].mxu0 %v1331
    %v1380 = vpop.f32.mrb[0].mxu0
    %v1381 = vadd.f32 0.0, %v1380
    %v1382 = vpop.f32.mrb[0].mxu0
    %v1383 = vpop.f32.mrb[0].mxu0
    %v1384 = vadd.f32 0.0, %v1383
    %v1385 = vpop.f32.mrb[0].mxu0
    %1386 = vmatprep.mubr.bf16.mxu0 0
    %1387 = vmatmul.mubr.bf16.gmra.mrb[0].mxu0 %v1332
    %v1388 = vpop.f32.mrb[0].mxu0
    %v1389 = vadd.f32 0.0, %v1388
    %v1390 = vpop.f32.mrb[0].mxu0
    %v1391 = vpop.f32.mrb[0].mxu0
    %v1392 = vadd.f32 0.0, %v1391
    %v1393 = vpop.f32.mrb[0].mxu0
    %1394 = vmatprep.mubr.bf16.mxu0 0
    %1395 = vmatmul.mubr.bf16.gmra.mrb[0].mxu0 %v1333
    %v1396 = vpop.f32.mrb[0].mxu0
    %v1397 = vadd.f32 0.0, %v1396
    %v1398 = vpop.f32.mrb[0].mxu0
    %v1399 = vpop.f32.mrb[0].mxu0
    %v1400 = vadd.f32 0.0, %v1399
    %v1401 = vpop.f32.mrb[0].mxu0
    %1402 = vdwg.mxu0
    %v1403 = vpack.c.bf16 %v1376, %v1373
    %v1404 = vpack.c.bf16 %v1384, %v1381
    %v1405 = vpack.c.bf16 %v1392, %v1389
    %v1406 = vpack.c.bf16 %v1400, %v1397
    %v1407 = vld [vmem:[%s5] sm:$0xf]
    %v1408 = vld [vmem:[%s5 + $0x4] sm:$0xf]
    %v1409 = vld [vmem:[%s5 + $0x8] sm:$0xf]
    %v1410 = vld [vmem:[%s5 + $0xc] sm:$0xf]
    %v1411 = vld [vmem:[%s5 + $0x10] sm:$0xf]
    %v1412 = vld [vmem:[%s5 + $0x14] sm:$0xf]
    %v1413 = vld [vmem:[%s5 + $0x18] sm:$0xf]
    %v1414 = vld [vmem:[%s5 + $0x1c] sm:$0xf]
    %v1415 = vld [vmem:[%s5 + $0x20] sm:$0xf]
    %v1416 = vld [vmem:[%s5 + $0x24] sm:$0xf]
    %v1417 = vld [vmem:[%s5 + $0x28] sm:$0xf]
    %v1418 = vld [vmem:[%s5 + $0x2c] sm:$0xf]
    %v1419 = vld [vmem:[%s5 + $0x30] sm:$0xf]
    %v1420 = vld [vmem:[%s5 + $0x34] sm:$0xf]
    %v1421 = vld [vmem:[%s5 + $0x38] sm:$0xf]
    %v1422 = vld [vmem:[%s5 + $0x3c] sm:$0xf]
    %s1423 = scalar_lea.vmem %s6, 32
    %v1424 = vld [vmem:[%s1423] sm:$0xf]
    %v1425 = vld [vmem:[%s1423 + $0x4] sm:$0xf]
    %v1426 = vld [vmem:[%s1423 + $0x8] sm:$0xf]
    %v1427 = vld [vmem:[%s1423 + $0xc] sm:$0xf]
    %v1428 = vld [vmem:[%s1423 + $0x10] sm:$0xf]
    %v1429 = vld [vmem:[%s1423 + $0x14] sm:$0xf]
    %v1430 = vld [vmem:[%s1423 + $0x18] sm:$0xf]
    %v1431 = vld [vmem:[%s1423 + $0x1c] sm:$0xf]
    %v1440 = vunpack.c.l.b16 %v1424
    %v1441 = vunpack.c.l.b16 %v1425
    %v1442 = vunpack.c.l.b16 %v1426
    %v1443 = vunpack.c.l.b16 %v1427
    %v1444 = vunpack.c.l.b16 %v1428
    %v1445 = vunpack.c.l.b16 %v1429
    %v1446 = vunpack.c.l.b16 %v1430
    %v1447 = vunpack.c.l.b16 %v1431
    %v1448 = vpack.c.b16 %v1441, %v1440
    %v1449 = vpack.c.b16 %v1443, %v1442
    %v1450 = vpack.c.b16 %v1445, %v1444
    %v1451 = vpack.c.b16 %v1447, %v1446
    %1456 = vmatprep.subr.bf16.mxu0 0
    %1457 = vmatpush1.bf16.msra.mxu0 %v1298
    %1458 = vmatprep.subr.bf16.mxu0 0
    %1459 = vmatpush1.bf16.msra.mxu0 %v1299
    %1460 = vmatprep.subr.bf16.mxu0 0
    %1461 = vmatpush1.bf16.msra.mxu0 %v1300
    %1462 = vmatprep.subr.bf16.mxu0 0
    %1463 = vmatpush1.bf16.msra.mxu0 %v1301
    %1464 = vmatprep.subr.bf16.mxu0 0
    %1465 = vmatpush1.bf16.msra.mxu0 %v1302
    %1466 = vmatprep.subr.bf16.mxu0 0
    %1467 = vmatpush1.bf16.msra.mxu0 %v1303
    %1468 = vmatprep.subr.bf16.mxu0 0
    %1469 = vmatpush1.bf16.msra.mxu0 %v1304
    %1470 = vmatprep.subr.bf16.mxu0 0
    %1471 = vmatpush1.bf16.msra.mxu0 %v1305
    %1472 = vmatprep.subr.bf16.mxu0 0
    %1473 = vmatpush1.bf16.msra.mxu0 0
    %1474 = vmatprep.subr.bf16.mxu0 0
    %1475 = vmatpush1.bf16.msra.mxu0 0
    %1476 = vmatprep.subr.bf16.mxu0 0
    %1477 = vmatpush1.bf16.msra.mxu0 0
    %1478 = vmatprep.subr.bf16.mxu0 0
    %1479 = vmatpush1.bf16.msra.mxu0 0
    %1480 = vmatprep.subr.bf16.mxu0 0
    %1481 = vmatpush1.bf16.msra.mxu0 0
    %1482 = vmatprep.subr.bf16.mxu0 0
    %1483 = vmatpush1.bf16.msra.mxu0 0
    %1484 = vmatprep.subr.bf16.mxu0 0
    %1485 = vmatpush1.bf16.msra.mxu0 0
    %1486 = vmatprep.subr.bf16.mxu0 0
    %1487 = vmatpush1.bf16.msra.mxu0 0
    %1488 = vmatprep.mubr.bf16.mxu0 0
    %1489 = vmatmul.mubr.bf16.gmra.mrb[0].mxu0 %v1448
    %v1490 = vpop.f32.mrb[0].mxu0
    %v1491 = vadd.f32 0.0, %v1490
    %v1492 = vpop.f32.mrb[0].mxu0
    %v1493 = vpop.f32.mrb[0].mxu0
    %v1494 = vadd.f32 0.0, %v1493
    %v1495 = vpop.f32.mrb[0].mxu0
    %1496 = vmatprep.mubr.bf16.mxu0 0
    %1497 = vmatmul.mubr.bf16.gmra.mrb[0].mxu0 %v1449
    %v1498 = vpop.f32.mrb[0].mxu0
    %v1499 = vadd.f32 0.0, %v1498
    %v1500 = vpop.f32.mrb[0].mxu0
    %v1501 = vpop.f32.mrb[0].mxu0
    %v1502 = vadd.f32 0.0, %v1501
    %v1503 = vpop.f32.mrb[0].mxu0
    %1504 = vmatprep.mubr.bf16.mxu0 0
    %1505 = vmatmul.mubr.bf16.gmra.mrb[0].mxu0 %v1450
    %v1506 = vpop.f32.mrb[0].mxu0
    %v1507 = vadd.f32 0.0, %v1506
    %v1508 = vpop.f32.mrb[0].mxu0
    %v1509 = vpop.f32.mrb[0].mxu0
    %v1510 = vadd.f32 0.0, %v1509
    %v1511 = vpop.f32.mrb[0].mxu0
    %1512 = vmatprep.mubr.bf16.mxu0 0
    %1513 = vmatmul.mubr.bf16.gmra.mrb[0].mxu0 %v1451
    %v1514 = vpop.f32.mrb[0].mxu0
    %v1515 = vadd.f32 0.0, %v1514
    %v1516 = vpop.f32.mrb[0].mxu0
    %v1517 = vpop.f32.mrb[0].mxu0
    %v1518 = vadd.f32 0.0, %v1517
    %v1519 = vpop.f32.mrb[0].mxu0
    %1520 = vdwg.mxu0
    %v1521 = vpack.c.bf16 %v1494, %v1491
    %v1522 = vpack.c.bf16 %v1502, %v1499
    %v1523 = vpack.c.bf16 %v1510, %v1507
    %v1524 = vpack.c.bf16 %v1518, %v1515
    %s1525 = scalar_lea.vmem %s5, 64
    %v1526 = vld [vmem:[%s1525] sm:$0xf]
    %v1527 = vld [vmem:[%s1525 + $0x4] sm:$0xf]
    %v1528 = vld [vmem:[%s1525 + $0x8] sm:$0xf]
    %v1529 = vld [vmem:[%s1525 + $0xc] sm:$0xf]
    %v1530 = vld [vmem:[%s1525 + $0x10] sm:$0xf]
    %v1531 = vld [vmem:[%s1525 + $0x14] sm:$0xf]
    %v1532 = vld [vmem:[%s1525 + $0x18] sm:$0xf]
    %v1533 = vld [vmem:[%s1525 + $0x1c] sm:$0xf]
    %v1534 = vld [vmem:[%s1525 + $0x20] sm:$0xf]
    %v1535 = vld [vmem:[%s1525 + $0x24] sm:$0xf]
    %v1536 = vld [vmem:[%s1525 + $0x28] sm:$0xf]
    %v1537 = vld [vmem:[%s1525 + $0x2c] sm:$0xf]
    %v1538 = vld [vmem:[%s1525 + $0x30] sm:$0xf]
    %v1539 = vld [vmem:[%s1525 + $0x34] sm:$0xf]
    %v1540 = vld [vmem:[%s1525 + $0x38] sm:$0xf]
    %v1541 = vld [vmem:[%s1525 + $0x3c] sm:$0xf]
    %v1558 = vunpack.c.l.b16 %v1526
    %v1559 = vunpack.c.l.b16 %v1527
    %v1560 = vunpack.c.l.b16 %v1528
    %v1561 = vunpack.c.l.b16 %v1529
    %v1562 = vunpack.c.l.b16 %v1530
    %v1563 = vunpack.c.l.b16 %v1531
    %v1564 = vunpack.c.l.b16 %v1532
    %v1565 = vunpack.c.l.b16 %v1533
    %v1566 = vunpack.c.l.b16 %v1534
    %v1567 = vunpack.c.l.b16 %v1535
    %v1568 = vunpack.c.l.b16 %v1536
    %v1569 = vunpack.c.l.b16 %v1537
    %v1570 = vunpack.c.l.b16 %v1538
    %v1571 = vunpack.c.l.b16 %v1539
    %v1572 = vunpack.c.l.b16 %v1540
    %v1573 = vunpack.c.l.b16 %v1541
    %v1574 = vpack.c.b16 %v1559, %v1558
    %v1575 = vpack.c.b16 %v1561, %v1560
    %v1576 = vpack.c.b16 %v1563, %v1562
    %v1577 = vpack.c.b16 %v1565, %v1564
    %v1578 = vpack.c.b16 %v1567, %v1566
    %v1579 = vpack.c.b16 %v1569, %v1568
    %v1580 = vpack.c.b16 %v1571, %v1570
    %v1581 = vpack.c.b16 %v1573, %v1572
    %1590 = vmatprep.subr.bf16.mxu0 0
    %1591 = vmatpush1.bf16.msra.mxu0 %v1574
    %1592 = vmatprep.subr.bf16.mxu0 0
    %1593 = vmatpush1.bf16.msra.mxu0 %v1575
    %1594 = vmatprep.subr.bf16.mxu0 0
    %1595 = vmatpush1.bf16.msra.mxu0 %v1576
    %1596 = vmatprep.subr.bf16.mxu0 0
    %1597 = vmatpush1.bf16.msra.mxu0 %v1577
    %1598 = vmatprep.subr.bf16.mxu0 0
    %1599 = vmatpush1.bf16.msra.mxu0 %v1578
    %1600 = vmatprep.subr.bf16.mxu0 0
    %1601 = vmatpush1.bf16.msra.mxu0 %v1579
    %1602 = vmatprep.subr.bf16.mxu0 0
    %1603 = vmatpush1.bf16.msra.mxu0 %v1580
    %1604 = vmatprep.subr.bf16.mxu0 0
    %1605 = vmatpush1.bf16.msra.mxu0 %v1581
    %1606 = vmatprep.subr.bf16.mxu0 0
    %1607 = vmatpush1.bf16.msra.mxu0 0
    %1608 = vmatprep.subr.bf16.mxu0 0
    %1609 = vmatpush1.bf16.msra.mxu0 0
    %1610 = vmatprep.subr.bf16.mxu0 0
    %1611 = vmatpush1.bf16.msra.mxu0 0
    %1612 = vmatprep.subr.bf16.mxu0 0
    %1613 = vmatpush1.bf16.msra.mxu0 0
    %1614 = vmatprep.subr.bf16.mxu0 0
    %1615 = vmatpush1.bf16.msra.mxu0 0
    %1616 = vmatprep.subr.bf16.mxu0 0
    %1617 = vmatpush1.bf16.msra.mxu0 0
    %1618 = vmatprep.subr.bf16.mxu0 0
    %1619 = vmatpush1.bf16.msra.mxu0 0
    %1620 = vmatprep.subr.bf16.mxu0 0
    %1621 = vmatpush1.bf16.msra.mxu0 0
    %1622 = vmatprep.mubr.bf16.mxu0 0
    %1623 = vmatmul.mubr.bf16.gmra.mrb[0].mxu0 %v1521
    %v1624 = vpop.f32.mrb[0].mxu0
    %v1625 = vadd.f32 0.0, %v1624
    %v1626 = vpop.f32.mrb[0].mxu0
    %v1627 = vpop.f32.mrb[0].mxu0
    %v1628 = vadd.f32 0.0, %v1627
    %v1629 = vpop.f32.mrb[0].mxu0
    %1630 = vmatprep.mubr.bf16.mxu0 0
    %1631 = vmatmul.mubr.bf16.gmra.mrb[0].mxu0 %v1522
    %v1632 = vpop.f32.mrb[0].mxu0
    %v1633 = vadd.f32 0.0, %v1632
    %v1634 = vpop.f32.mrb[0].mxu0
    %v1635 = vpop.f32.mrb[0].mxu0
    %v1636 = vadd.f32 0.0, %v1635
    %v1637 = vpop.f32.mrb[0].mxu0
    %1638 = vmatprep.mubr.bf16.mxu0 0
    %1639 = vmatmul.mubr.bf16.gmra.mrb[0].mxu0 %v1523
    %v1640 = vpop.f32.mrb[0].mxu0
    %v1641 = vadd.f32 0.0, %v1640
    %v1642 = vpop.f32.mrb[0].mxu0
    %v1643 = vpop.f32.mrb[0].mxu0
    %v1644 = vadd.f32 0.0, %v1643
    %v1645 = vpop.f32.mrb[0].mxu0
    %1646 = vmatprep.mubr.bf16.mxu0 0
    %1647 = vmatmul.mubr.bf16.gmra.mrb[0].mxu0 %v1524
    %v1648 = vpop.f32.mrb[0].mxu0
    %v1649 = vadd.f32 0.0, %v1648
    %v1650 = vpop.f32.mrb[0].mxu0
    %v1651 = vpop.f32.mrb[0].mxu0
    %v1652 = vadd.f32 0.0, %v1651
    %v1653 = vpop.f32.mrb[0].mxu0
    %1654 = vdwg.mxu0
    %v1671 = vunpack.c.l.b16 %v1407
    %v1672 = vunpack.c.l.b16 %v1408
    %v1673 = vunpack.c.l.b16 %v1409
    %v1674 = vunpack.c.l.b16 %v1410
    %v1675 = vunpack.c.l.b16 %v1411
    %v1676 = vunpack.c.l.b16 %v1412
    %v1677 = vunpack.c.l.b16 %v1413
    %v1678 = vunpack.c.l.b16 %v1414
    %v1679 = vunpack.c.l.b16 %v1415
    %v1680 = vunpack.c.l.b16 %v1416
    %v1681 = vunpack.c.l.b16 %v1417
    %v1682 = vunpack.c.l.b16 %v1418
    %v1683 = vunpack.c.l.b16 %v1419
    %v1684 = vunpack.c.l.b16 %v1420
    %v1685 = vunpack.c.l.b16 %v1421
    %v1686 = vunpack.c.l.b16 %v1422
    %v1687 = vpack.c.b16 %v1672, %v1671
    %v1688 = vpack.c.b16 %v1674, %v1673
    %v1689 = vpack.c.b16 %v1676, %v1675
    %v1690 = vpack.c.b16 %v1678, %v1677
    %v1691 = vpack.c.b16 %v1680, %v1679
    %v1692 = vpack.c.b16 %v1682, %v1681
    %v1693 = vpack.c.b16 %v1684, %v1683
    %v1694 = vpack.c.b16 %v1686, %v1685
    %1703 = vmatprep.subr.bf16.mxu0 0
    %1704 = vmatpush1.bf16.msra.mxu0 %v1687
    %1705 = vmatprep.subr.bf16.mxu0 0
    %1706 = vmatpush1.bf16.msra.mxu0 %v1688
    %1707 = vmatprep.subr.bf16.mxu0 0
    %1708 = vmatpush1.bf16.msra.mxu0 %v1689
    %1709 = vmatprep.subr.bf16.mxu0 0
    %1710 = vmatpush1.bf16.msra.mxu0 %v1690
    %1711 = vmatprep.subr.bf16.mxu0 0
    %1712 = vmatpush1.bf16.msra.mxu0 %v1691
    %1713 = vmatprep.subr.bf16.mxu0 0
    %1714 = vmatpush1.bf16.msra.mxu0 %v1692
    %1715 = vmatprep.subr.bf16.mxu0 0
    %1716 = vmatpush1.bf16.msra.mxu0 %v1693
    %1717 = vmatprep.subr.bf16.mxu0 0
    %1718 = vmatpush1.bf16.msra.mxu0 %v1694
    %1719 = vmatprep.subr.bf16.mxu0 0
    %1720 = vmatpush1.bf16.msra.mxu0 0
    %1721 = vmatprep.subr.bf16.mxu0 0
    %1722 = vmatpush1.bf16.msra.mxu0 0
    %1723 = vmatprep.subr.bf16.mxu0 0
    %1724 = vmatpush1.bf16.msra.mxu0 0
    %1725 = vmatprep.subr.bf16.mxu0 0
    %1726 = vmatpush1.bf16.msra.mxu0 0
    %1727 = vmatprep.subr.bf16.mxu0 0
    %1728 = vmatpush1.bf16.msra.mxu0 0
    %1729 = vmatprep.subr.bf16.mxu0 0
    %1730 = vmatpush1.bf16.msra.mxu0 0
    %1731 = vmatprep.subr.bf16.mxu0 0
    %1732 = vmatpush1.bf16.msra.mxu0 0
    %1733 = vmatprep.subr.bf16.mxu0 0
    %1734 = vmatpush1.bf16.msra.mxu0 0
    %1735 = vmatprep.mubr.bf16.mxu0 0
    %1736 = vmatmul.mubr.bf16.gmra.mrb[0].mxu0 %v1403
    %v1737 = vpop.f32.mrb[0].mxu0
    %v1738 = vadd.f32 %v1625, %v1737
    %v1739 = vpop.f32.mrb[0].mxu0
    %v1740 = vpop.f32.mrb[0].mxu0
    %v1741 = vadd.f32 %v1628, %v1740
    %v1742 = vpop.f32.mrb[0].mxu0
    %1743 = vmatprep.mubr.bf16.mxu0 0
    %1744 = vmatmul.mubr.bf16.gmra.mrb[0].mxu0 %v1404
    %v1745 = vpop.f32.mrb[0].mxu0
    %v1746 = vadd.f32 %v1633, %v1745
    %v1747 = vpop.f32.mrb[0].mxu0
    %v1748 = vpop.f32.mrb[0].mxu0
    %v1749 = vadd.f32 %v1636, %v1748
    %v1750 = vpop.f32.mrb[0].mxu0
    %1751 = vmatprep.mubr.bf16.mxu0 0
    %1752 = vmatmul.mubr.bf16.gmra.mrb[0].mxu0 %v1405
    %v1753 = vpop.f32.mrb[0].mxu0
    %v1754 = vadd.f32 %v1641, %v1753
    %v1755 = vpop.f32.mrb[0].mxu0
    %v1756 = vpop.f32.mrb[0].mxu0
    %v1757 = vadd.f32 %v1644, %v1756
    %v1758 = vpop.f32.mrb[0].mxu0
    %1759 = vmatprep.mubr.bf16.mxu0 0
    %1760 = vmatmul.mubr.bf16.gmra.mrb[0].mxu0 %v1406
    %v1761 = vpop.f32.mrb[0].mxu0
    %v1762 = vadd.f32 %v1649, %v1761
    %v1763 = vpop.f32.mrb[0].mxu0
    %v1764 = vpop.f32.mrb[0].mxu0
    %v1765 = vadd.f32 %v1652, %v1764
    %v1766 = vpop.f32.mrb[0].mxu0
    %1767 = vdwg.mxu0
    %s1768 = scalar_lea.vmem %s6, 64
    %v1769 = vld [vmem:[%s1768] sm:$0xf]
    %v1770 = vld [vmem:[%s1768 + $0x4] sm:$0xf]
    %v1771 = vld [vmem:[%s1768 + $0x8] sm:$0xf]
    %v1772 = vld [vmem:[%s1768 + $0xc] sm:$0xf]
    %v1773 = vld [vmem:[%s1768 + $0x10] sm:$0xf]
    %v1774 = vld [vmem:[%s1768 + $0x14] sm:$0xf]
    %v1775 = vld [vmem:[%s1768 + $0x18] sm:$0xf]
    %v1776 = vld [vmem:[%s1768 + $0x1c] sm:$0xf]
    %v1785 = vunpack.c.l.b16 %v1769
    %v1786 = vunpack.c.l.b16 %v1770
    %v1787 = vunpack.c.l.b16 %v1771
    %v1788 = vunpack.c.l.b16 %v1772
    %v1789 = vunpack.c.l.b16 %v1773
    %v1790 = vunpack.c.l.b16 %v1774
    %v1791 = vunpack.c.l.b16 %v1775
    %v1792 = vunpack.c.l.b16 %v1776
    %v1793 = vpack.c.b16 %v1786, %v1785
    %v1794 = vpack.c.b16 %v1788, %v1787
    %v1795 = vpack.c.b16 %v1790, %v1789
    %v1796 = vpack.c.b16 %v1792, %v1791
    %1801 = vmatprep.subr.bf16.mxu0 0
    %1802 = vmatpush1.bf16.msra.mxu0 %v1298
    %1803 = vmatprep.subr.bf16.mxu0 0
    %1804 = vmatpush1.bf16.msra.mxu0 %v1299
    %1805 = vmatprep.subr.bf16.mxu0 0
    %1806 = vmatpush1.bf16.msra.mxu0 %v1300
    %1807 = vmatprep.subr.bf16.mxu0 0
    %1808 = vmatpush1.bf16.msra.mxu0 %v1301
    %1809 = vmatprep.subr.bf16.mxu0 0
    %1810 = vmatpush1.bf16.msra.mxu0 %v1302
    %1811 = vmatprep.subr.bf16.mxu0 0
    %1812 = vmatpush1.bf16.msra.mxu0 %v1303
    %1813 = vmatprep.subr.bf16.mxu0 0
    %1814 = vmatpush1.bf16.msra.mxu0 %v1304
    %1815 = vmatprep.subr.bf16.mxu0 0
    %1816 = vmatpush1.bf16.msra.mxu0 %v1305
    %1817 = vmatprep.subr.bf16.mxu0 0
    %1818 = vmatpush1.bf16.msra.mxu0 0
    %1819 = vmatprep.subr.bf16.mxu0 0
    %1820 = vmatpush1.bf16.msra.mxu0 0
    %1821 = vmatprep.subr.bf16.mxu0 0
    %1822 = vmatpush1.bf16.msra.mxu0 0
    %1823 = vmatprep.subr.bf16.mxu0 0
    %1824 = vmatpush1.bf16.msra.mxu0 0
    %1825 = vmatprep.subr.bf16.mxu0 0
    %1826 = vmatpush1.bf16.msra.mxu0 0
    %1827 = vmatprep.subr.bf16.mxu0 0
    %1828 = vmatpush1.bf16.msra.mxu0 0
    %1829 = vmatprep.subr.bf16.mxu0 0
    %1830 = vmatpush1.bf16.msra.mxu0 0
    %1831 = vmatprep.subr.bf16.mxu0 0
    %1832 = vmatpush1.bf16.msra.mxu0 0
    %1833 = vmatprep.mubr.bf16.mxu0 0
    %1834 = vmatmul.mubr.bf16.gmra.mrb[0].mxu0 %v1793
    %v1835 = vpop.f32.mrb[0].mxu0
    %v1836 = vadd.f32 0.0, %v1835
    %v1837 = vpop.f32.mrb[0].mxu0
    %v1838 = vpop.f32.mrb[0].mxu0
    %v1839 = vadd.f32 0.0, %v1838
    %v1840 = vpop.f32.mrb[0].mxu0
    %1841 = vmatprep.mubr.bf16.mxu0 0
    %1842 = vmatmul.mubr.bf16.gmra.mrb[0].mxu0 %v1794
    %v1843 = vpop.f32.mrb[0].mxu0
    %v1844 = vadd.f32 0.0, %v1843
    %v1845 = vpop.f32.mrb[0].mxu0
    %v1846 = vpop.f32.mrb[0].mxu0
    %v1847 = vadd.f32 0.0, %v1846
    %v1848 = vpop.f32.mrb[0].mxu0
    %1849 = vmatprep.mubr.bf16.mxu0 0
    %1850 = vmatmul.mubr.bf16.gmra.mrb[0].mxu0 %v1795
    %v1851 = vpop.f32.mrb[0].mxu0
    %v1852 = vadd.f32 0.0, %v1851
    %v1853 = vpop.f32.mrb[0].mxu0
    %v1854 = vpop.f32.mrb[0].mxu0
    %v1855 = vadd.f32 0.0, %v1854
    %v1856 = vpop.f32.mrb[0].mxu0
    %1857 = vmatprep.mubr.bf16.mxu0 0
    %1858 = vmatmul.mubr.bf16.gmra.mrb[0].mxu0 %v1796
    %v1859 = vpop.f32.mrb[0].mxu0
    %v1860 = vadd.f32 0.0, %v1859
    %v1861 = vpop.f32.mrb[0].mxu0
    %v1862 = vpop.f32.mrb[0].mxu0
    %v1863 = vadd.f32 0.0, %v1862
    %v1864 = vpop.f32.mrb[0].mxu0
    %1865 = vdwg.mxu0
    %v1866 = vpack.c.bf16 %v1839, %v1836
    %v1867 = vpack.c.bf16 %v1847, %v1844
    %v1868 = vpack.c.bf16 %v1855, %v1852
    %v1869 = vpack.c.bf16 %v1863, %v1860
    %s1870 = scalar_lea.vmem %s5, 128
    %v1871 = vld [vmem:[%s1870] sm:$0xf]
    %v1872 = vld [vmem:[%s1870 + $0x4] sm:$0xf]
    %v1873 = vld [vmem:[%s1870 + $0x8] sm:$0xf]
    %v1874 = vld [vmem:[%s1870 + $0xc] sm:$0xf]
    %v1875 = vld [vmem:[%s1870 + $0x10] sm:$0xf]
    %v1876 = vld [vmem:[%s1870 + $0x14] sm:$0xf]
    %v1877 = vld [vmem:[%s1870 + $0x18] sm:$0xf]
    %v1878 = vld [vmem:[%s1870 + $0x1c] sm:$0xf]
    %v1879 = vld [vmem:[%s1870 + $0x20] sm:$0xf]
    %v1880 = vld [vmem:[%s1870 + $0x24] sm:$0xf]
    %v1881 = vld [vmem:[%s1870 + $0x28] sm:$0xf]
    %v1882 = vld [vmem:[%s1870 + $0x2c] sm:$0xf]
    %v1883 = vld [vmem:[%s1870 + $0x30] sm:$0xf]
    %v1884 = vld [vmem:[%s1870 + $0x34] sm:$0xf]
    %v1885 = vld [vmem:[%s1870 + $0x38] sm:$0xf]
    %v1886 = vld [vmem:[%s1870 + $0x3c] sm:$0xf]
    %v1903 = vunpack.c.l.b16 %v1871
    %v1904 = vunpack.c.l.b16 %v1872
    %v1905 = vunpack.c.l.b16 %v1873
    %v1906 = vunpack.c.l.b16 %v1874
    %v1907 = vunpack.c.l.b16 %v1875
    %v1908 = vunpack.c.l.b16 %v1876
    %v1909 = vunpack.c.l.b16 %v1877
    %v1910 = vunpack.c.l.b16 %v1878
    %v1911 = vunpack.c.l.b16 %v1879
    %v1912 = vunpack.c.l.b16 %v1880
    %v1913 = vunpack.c.l.b16 %v1881
    %v1914 = vunpack.c.l.b16 %v1882
    %v1915 = vunpack.c.l.b16 %v1883
    %v1916 = vunpack.c.l.b16 %v1884
    %v1917 = vunpack.c.l.b16 %v1885
    %v1918 = vunpack.c.l.b16 %v1886
    %v1919 = vpack.c.b16 %v1904, %v1903
    %v1920 = vpack.c.b16 %v1906, %v1905
    %v1921 = vpack.c.b16 %v1908, %v1907
    %v1922 = vpack.c.b16 %v1910, %v1909
    %v1923 = vpack.c.b16 %v1912, %v1911
    %v1924 = vpack.c.b16 %v1914, %v1913
    %v1925 = vpack.c.b16 %v1916, %v1915
    %v1926 = vpack.c.b16 %v1918, %v1917
    %1935 = vmatprep.subr.bf16.mxu0 0
    %1936 = vmatpush1.bf16.msra.mxu0 %v1919
    %1937 = vmatprep.subr.bf16.mxu0 0
    %1938 = vmatpush1.bf16.msra.mxu0 %v1920
    %1939 = vmatprep.subr.bf16.mxu0 0
    %1940 = vmatpush1.bf16.msra.mxu0 %v1921
    %1941 = vmatprep.subr.bf16.mxu0 0
    %1942 = vmatpush1.bf16.msra.mxu0 %v1922
    %1943 = vmatprep.subr.bf16.mxu0 0
    %1944 = vmatpush1.bf16.msra.mxu0 %v1923
    %1945 = vmatprep.subr.bf16.mxu0 0
    %1946 = vmatpush1.bf16.msra.mxu0 %v1924
    %1947 = vmatprep.subr.bf16.mxu0 0
    %1948 = vmatpush1.bf16.msra.mxu0 %v1925
    %1949 = vmatprep.subr.bf16.mxu0 0
    %1950 = vmatpush1.bf16.msra.mxu0 %v1926
    %1951 = vmatprep.subr.bf16.mxu0 0
    %1952 = vmatpush1.bf16.msra.mxu0 0
    %1953 = vmatprep.subr.bf16.mxu0 0
    %1954 = vmatpush1.bf16.msra.mxu0 0
    %1955 = vmatprep.subr.bf16.mxu0 0
    %1956 = vmatpush1.bf16.msra.mxu0 0
    %1957 = vmatprep.subr.bf16.mxu0 0
    %1958 = vmatpush1.bf16.msra.mxu0 0
    %1959 = vmatprep.subr.bf16.mxu0 0
    %1960 = vmatpush1.bf16.msra.mxu0 0
    %1961 = vmatprep.subr.bf16.mxu0 0
    %1962 = vmatpush1.bf16.msra.mxu0 0
    %1963 = vmatprep.subr.bf16.mxu0 0
    %1964 = vmatpush1.bf16.msra.mxu0 0
    %1965 = vmatprep.subr.bf16.mxu0 0
    %1966 = vmatpush1.bf16.msra.mxu0 0
    %1967 = vmatprep.mubr.bf16.mxu0 0
    %1968 = vmatmul.mubr.bf16.gmra.mrb[0].mxu0 %v1866
    %v1969 = vpop.f32.mrb[0].mxu0
    %v1970 = vadd.f32 0.0, %v1969
    %v1971 = vpop.f32.mrb[0].mxu0
    %v1972 = vpop.f32.mrb[0].mxu0
    %v1973 = vadd.f32 0.0, %v1972
    %v1974 = vpop.f32.mrb[0].mxu0
    %1975 = vmatprep.mubr.bf16.mxu0 0
    %1976 = vmatmul.mubr.bf16.gmra.mrb[0].mxu0 %v1867
    %v1977 = vpop.f32.mrb[0].mxu0
    %v1978 = vadd.f32 0.0, %v1977
    %v1979 = vpop.f32.mrb[0].mxu0
    %v1980 = vpop.f32.mrb[0].mxu0
    %v1981 = vadd.f32 0.0, %v1980
    %v1982 = vpop.f32.mrb[0].mxu0
    %1983 = vmatprep.mubr.bf16.mxu0 0
    %1984 = vmatmul.mubr.bf16.gmra.mrb[0].mxu0 %v1868
    %v1985 = vpop.f32.mrb[0].mxu0
    %v1986 = vadd.f32 0.0, %v1985
    %v1987 = vpop.f32.mrb[0].mxu0
    %v1988 = vpop.f32.mrb[0].mxu0
    %v1989 = vadd.f32 0.0, %v1988
    %v1990 = vpop.f32.mrb[0].mxu0
    %1991 = vmatprep.mubr.bf16.mxu0 0
    %1992 = vmatmul.mubr.bf16.gmra.mrb[0].mxu0 %v1869
    %v1993 = vpop.f32.mrb[0].mxu0
    %v1994 = vadd.f32 0.0, %v1993
    %v1995 = vpop.f32.mrb[0].mxu0
    %v1996 = vpop.f32.mrb[0].mxu0
    %v1997 = vadd.f32 0.0, %v1996
    %v1998 = vpop.f32.mrb[0].mxu0
    %1999 = vdwg.mxu0
    %v2000 = vadd.f32 %v1738, %v1970
    %v2001 = vadd.f32 %v1741, %v1973
    %v2002 = vadd.f32 %v1746, %v1978
    %v2003 = vadd.f32 %v1749, %v1981
    %v2004 = vadd.f32 %v1754, %v1986
    %v2005 = vadd.f32 %v1757, %v1989
    %v2006 = vadd.f32 %v1762, %v1994
    %v2007 = vadd.f32 %v1765, %v1997
    %v2008 = vld [vmem:[%s7] sm:$0x1]
    %v2010 = vlaneseq
    %v2011 = vshrl.u32 %v2010, 7
    %v2012 = vsub.s32 0, %v2011
    %v2013 = vrot.slane %v2008, %v2012
    %v2015 = vadd.f32 %v2000, %v2013
    %v2016 = vadd.f32 %v2001, %v2013
    %v2017 = vadd.f32 %v2002, %v2013
    %v2018 = vadd.f32 %v2003, %v2013
    %v2019 = vadd.f32 %v2004, %v2013
    %v2020 = vadd.f32 %v2005, %v2013
    %v2021 = vadd.f32 %v2006, %v2013
    %v2022 = vadd.f32 %v2007, %v2013
    %v2023 = vmax.f32 %v2015, 0.0
    %v2024 = vmax.f32 %v2016, 0.0
    %v2025 = vmax.f32 %v2017, 0.0
    %v2026 = vmax.f32 %v2018, 0.0
    %v2027 = vmax.f32 %v2019, 0.0
    %v2028 = vmax.f32 %v2020, 0.0
    %v2029 = vmax.f32 %v2021, 0.0
    %v2030 = vmax.f32 %v2022, 0.0
    %v2031 = vpack.c.bf16 %v2024, %v2023
    %v2032 = vpack.c.bf16 %v2026, %v2025
    %v2033 = vpack.c.bf16 %v2028, %v2027
    %v2034 = vpack.c.bf16 %v2030, %v2029
    %v2035 = vld [vmem:[%s9] sm:$0xf]
    %v2036 = vld [vmem:[%s9 + $0x4] sm:$0xf]
    %v2037 = vld [vmem:[%s9 + $0x8] sm:$0xf]
    %v2038 = vld [vmem:[%s9 + $0xc] sm:$0xf]
    %v2043 = vunpack.c.l.b16 %v2035
    %v2044 = vunpack.c.l.b16 %v2036
    %v2045 = vunpack.c.l.b16 %v2037
    %v2046 = vunpack.c.l.b16 %v2038
    %v2047 = vpack.c.b16 %v2044, %v2043
    %v2048 = vpack.c.b16 %v2046, %v2045
    %v2050 = vsel %vm620, %v2047, 0
    %v2053 = vsel %vm620, %v2048, 0
    %2055 = vmatprep.subr.bf16.mxu0 0
    %2056 = vmatpush1.bf16.msra.mxu0 %v2031
    %2057 = vmatprep.subr.bf16.mxu0 0
    %2058 = vmatpush1.bf16.msra.mxu0 %v2032
    %2059 = vmatprep.subr.bf16.mxu0 0
    %2060 = vmatpush1.bf16.msra.mxu0 %v2033
    %2061 = vmatprep.subr.bf16.mxu0 0
    %2062 = vmatpush1.bf16.msra.mxu0 %v2034
    %2063 = vmatprep.subr.bf16.mxu0 0
    %2064 = vmatpush1.bf16.msra.mxu0 0
    %2065 = vmatprep.subr.bf16.mxu0 0
    %2066 = vmatpush1.bf16.msra.mxu0 0
    %2067 = vmatprep.subr.bf16.mxu0 0
    %2068 = vmatpush1.bf16.msra.mxu0 0
    %2069 = vmatprep.subr.bf16.mxu0 0
    %2070 = vmatpush1.bf16.msra.mxu0 0
    %2071 = vmatprep.subr.bf16.mxu0 0
    %2072 = vmatpush1.bf16.msra.mxu0 0
    %2073 = vmatprep.subr.bf16.mxu0 0
    %2074 = vmatpush1.bf16.msra.mxu0 0
    %2075 = vmatprep.subr.bf16.mxu0 0
    %2076 = vmatpush1.bf16.msra.mxu0 0
    %2077 = vmatprep.subr.bf16.mxu0 0
    %2078 = vmatpush1.bf16.msra.mxu0 0
    %2079 = vmatprep.subr.bf16.mxu0 0
    %2080 = vmatpush1.bf16.msra.mxu0 0
    %2081 = vmatprep.subr.bf16.mxu0 0
    %2082 = vmatpush1.bf16.msra.mxu0 0
    %2083 = vmatprep.subr.bf16.mxu0 0
    %2084 = vmatpush1.bf16.msra.mxu0 0
    %2085 = vmatprep.subr.bf16.mxu0 0
    %2086 = vmatpush1.bf16.msra.mxu0 0
    %2087 = vmatprep.mubr.bf16.mxu0 0
    %2088 = vmatmul.mubr.bf16.gmra.mrb[0].mxu0 %v2050
    %v2089 = vpop.f32.mrb[0].mxu0
    %v2090 = vadd.f32 0.0, %v2089
    %v2091 = vpop.f32.mrb[0].mxu0
    %v2092 = vpop.f32.mrb[0].mxu0
    %v2093 = vadd.f32 0.0, %v2092
    %v2094 = vpop.f32.mrb[0].mxu0
    %2095 = vmatprep.mubr.bf16.mxu0 0
    %2096 = vmatmul.mubr.bf16.gmra.mrb[0].mxu0 %v2053
    %v2097 = vpop.f32.mrb[0].mxu0
    %v2098 = vadd.f32 0.0, %v2097
    %v2099 = vpop.f32.mrb[0].mxu0
    %v2100 = vpop.f32.mrb[0].mxu0
    %v2101 = vadd.f32 0.0, %v2100
    %v2102 = vpop.f32.mrb[0].mxu0
    %2103 = vdwg.mxu0
    %v2104 = vpack.c.bf16 %v2093, %v2090
    %v2105 = vpack.c.bf16 %v2101, %v2098
    %v2106 = vld [vmem:[%s8] sm:$0xf]
    %v2107 = vld [vmem:[%s8 + $0x4] sm:$0xf]
    %v2108 = vld [vmem:[%s8 + $0x8] sm:$0xf]
    %v2109 = vld [vmem:[%s8 + $0xc] sm:$0xf]
    %v2110 = vld [vmem:[%s8 + $0x10] sm:$0xf]
    %v2111 = vld [vmem:[%s8 + $0x14] sm:$0xf]
    %v2112 = vld [vmem:[%s8 + $0x18] sm:$0xf]
    %v2113 = vld [vmem:[%s8 + $0x1c] sm:$0xf]
    %v2114 = vld [vmem:[%s8 + $0x20] sm:$0xf]
    %v2115 = vld [vmem:[%s8 + $0x24] sm:$0xf]
    %v2116 = vld [vmem:[%s8 + $0x28] sm:$0xf]
    %v2117 = vld [vmem:[%s8 + $0x2c] sm:$0xf]
    %v2118 = vld [vmem:[%s8 + $0x30] sm:$0xf]
    %v2119 = vld [vmem:[%s8 + $0x34] sm:$0xf]
    %v2120 = vld [vmem:[%s8 + $0x38] sm:$0xf]
    %v2121 = vld [vmem:[%s8 + $0x3c] sm:$0xf]
    %s2122 = scalar_lea.vmem %s9, 16
    %v2123 = vld [vmem:[%s2122] sm:$0xf]
    %v2124 = vld [vmem:[%s2122 + $0x4] sm:$0xf]
    %v2125 = vld [vmem:[%s2122 + $0x8] sm:$0xf]
    %v2126 = vld [vmem:[%s2122 + $0xc] sm:$0xf]
    %v2131 = vunpack.c.l.b16 %v2123
    %v2132 = vunpack.c.l.b16 %v2124
    %v2133 = vunpack.c.l.b16 %v2125
    %v2134 = vunpack.c.l.b16 %v2126
    %v2135 = vpack.c.b16 %v2132, %v2131
    %v2136 = vpack.c.b16 %v2134, %v2133
    %v2138 = vsel %vm620, %v2135, 0
    %v2141 = vsel %vm620, %v2136, 0
    %2143 = vmatprep.subr.bf16.mxu0 0
    %2144 = vmatpush1.bf16.msra.mxu0 %v2031
    %2145 = vmatprep.subr.bf16.mxu0 0
    %2146 = vmatpush1.bf16.msra.mxu0 %v2032
    %2147 = vmatprep.subr.bf16.mxu0 0
    %2148 = vmatpush1.bf16.msra.mxu0 %v2033
    %2149 = vmatprep.subr.bf16.mxu0 0
    %2150 = vmatpush1.bf16.msra.mxu0 %v2034
    %2151 = vmatprep.subr.bf16.mxu0 0
    %2152 = vmatpush1.bf16.msra.mxu0 0
    %2153 = vmatprep.subr.bf16.mxu0 0
    %2154 = vmatpush1.bf16.msra.mxu0 0
    %2155 = vmatprep.subr.bf16.mxu0 0
    %2156 = vmatpush1.bf16.msra.mxu0 0
    %2157 = vmatprep.subr.bf16.mxu0 0
    %2158 = vmatpush1.bf16.msra.mxu0 0
    %2159 = vmatprep.subr.bf16.mxu0 0
    %2160 = vmatpush1.bf16.msra.mxu0 0
    %2161 = vmatprep.subr.bf16.mxu0 0
    %2162 = vmatpush1.bf16.msra.mxu0 0
    %2163 = vmatprep.subr.bf16.mxu0 0
    %2164 = vmatpush1.bf16.msra.mxu0 0
    %2165 = vmatprep.subr.bf16.mxu0 0
    %2166 = vmatpush1.bf16.msra.mxu0 0
    %2167 = vmatprep.subr.bf16.mxu0 0
    %2168 = vmatpush1.bf16.msra.mxu0 0
    %2169 = vmatprep.subr.bf16.mxu0 0
    %2170 = vmatpush1.bf16.msra.mxu0 0
    %2171 = vmatprep.subr.bf16.mxu0 0
    %2172 = vmatpush1.bf16.msra.mxu0 0
    %2173 = vmatprep.subr.bf16.mxu0 0
    %2174 = vmatpush1.bf16.msra.mxu0 0
    %2175 = vmatprep.mubr.bf16.mxu0 0
    %2176 = vmatmul.mubr.bf16.gmra.mrb[0].mxu0 %v2138
    %v2177 = vpop.f32.mrb[0].mxu0
    %v2178 = vadd.f32 0.0, %v2177
    %v2179 = vpop.f32.mrb[0].mxu0
    %v2180 = vpop.f32.mrb[0].mxu0
    %v2181 = vadd.f32 0.0, %v2180
    %v2182 = vpop.f32.mrb[0].mxu0
    %2183 = vmatprep.mubr.bf16.mxu0 0
    %2184 = vmatmul.mubr.bf16.gmra.mrb[0].mxu0 %v2141
    %v2185 = vpop.f32.mrb[0].mxu0
    %v2186 = vadd.f32 0.0, %v2185
    %v2187 = vpop.f32.mrb[0].mxu0
    %v2188 = vpop.f32.mrb[0].mxu0
    %v2189 = vadd.f32 0.0, %v2188
    %v2190 = vpop.f32.mrb[0].mxu0
    %2191 = vdwg.mxu0
    %v2192 = vpack.c.bf16 %v2181, %v2178
    %v2193 = vpack.c.bf16 %v2189, %v2186
    %s2194 = scalar_lea.vmem %s8, 64
    %v2195 = vld [vmem:[%s2194] sm:$0xf]
    %v2196 = vld [vmem:[%s2194 + $0x4] sm:$0xf]
    %v2197 = vld [vmem:[%s2194 + $0x8] sm:$0xf]
    %v2198 = vld [vmem:[%s2194 + $0xc] sm:$0xf]
    %v2199 = vld [vmem:[%s2194 + $0x10] sm:$0xf]
    %v2200 = vld [vmem:[%s2194 + $0x14] sm:$0xf]
    %v2201 = vld [vmem:[%s2194 + $0x18] sm:$0xf]
    %v2202 = vld [vmem:[%s2194 + $0x1c] sm:$0xf]
    %v2203 = vld [vmem:[%s2194 + $0x20] sm:$0xf]
    %v2204 = vld [vmem:[%s2194 + $0x24] sm:$0xf]
    %v2205 = vld [vmem:[%s2194 + $0x28] sm:$0xf]
    %v2206 = vld [vmem:[%s2194 + $0x2c] sm:$0xf]
    %v2207 = vld [vmem:[%s2194 + $0x30] sm:$0xf]
    %v2208 = vld [vmem:[%s2194 + $0x34] sm:$0xf]
    %v2209 = vld [vmem:[%s2194 + $0x38] sm:$0xf]
    %v2210 = vld [vmem:[%s2194 + $0x3c] sm:$0xf]
    %v2227 = vunpack.c.l.b16 %v2195
    %v2228 = vunpack.c.l.b16 %v2196
    %v2229 = vunpack.c.l.b16 %v2197
    %v2230 = vunpack.c.l.b16 %v2198
    %v2231 = vunpack.c.l.b16 %v2199
    %v2232 = vunpack.c.l.b16 %v2200
    %v2233 = vunpack.c.l.b16 %v2201
    %v2234 = vunpack.c.l.b16 %v2202
    %v2235 = vunpack.c.l.b16 %v2203
    %v2236 = vunpack.c.l.b16 %v2204
    %v2237 = vunpack.c.l.b16 %v2205
    %v2238 = vunpack.c.l.b16 %v2206
    %v2239 = vunpack.c.l.b16 %v2207
    %v2240 = vunpack.c.l.b16 %v2208
    %v2241 = vunpack.c.l.b16 %v2209
    %v2242 = vunpack.c.l.b16 %v2210
    %v2243 = vpack.c.b16 %v2228, %v2227
    %v2244 = vpack.c.b16 %v2230, %v2229
    %v2245 = vpack.c.b16 %v2232, %v2231
    %v2246 = vpack.c.b16 %v2234, %v2233
    %v2247 = vpack.c.b16 %v2236, %v2235
    %v2248 = vpack.c.b16 %v2238, %v2237
    %v2249 = vpack.c.b16 %v2240, %v2239
    %v2250 = vpack.c.b16 %v2242, %v2241
    %2259 = vmatprep.subr.bf16.mxu0 0
    %2260 = vmatpush1.bf16.msra.mxu0 %v2243
    %2261 = vmatprep.subr.bf16.mxu0 0
    %2262 = vmatpush1.bf16.msra.mxu0 %v2244
    %2263 = vmatprep.subr.bf16.mxu0 0
    %2264 = vmatpush1.bf16.msra.mxu0 %v2245
    %2265 = vmatprep.subr.bf16.mxu0 0
    %2266 = vmatpush1.bf16.msra.mxu0 %v2246
    %2267 = vmatprep.subr.bf16.mxu0 0
    %2268 = vmatpush1.bf16.msra.mxu0 %v2247
    %2269 = vmatprep.subr.bf16.mxu0 0
    %2270 = vmatpush1.bf16.msra.mxu0 %v2248
    %2271 = vmatprep.subr.bf16.mxu0 0
    %2272 = vmatpush1.bf16.msra.mxu0 %v2249
    %2273 = vmatprep.subr.bf16.mxu0 0
    %2274 = vmatpush1.bf16.msra.mxu0 %v2250
    %2275 = vmatprep.subr.bf16.mxu0 0
    %2276 = vmatpush1.bf16.msra.mxu0 0
    %2277 = vmatprep.subr.bf16.mxu0 0
    %2278 = vmatpush1.bf16.msra.mxu0 0
    %2279 = vmatprep.subr.bf16.mxu0 0
    %2280 = vmatpush1.bf16.msra.mxu0 0
    %2281 = vmatprep.subr.bf16.mxu0 0
    %2282 = vmatpush1.bf16.msra.mxu0 0
    %2283 = vmatprep.subr.bf16.mxu0 0
    %2284 = vmatpush1.bf16.msra.mxu0 0
    %2285 = vmatprep.subr.bf16.mxu0 0
    %2286 = vmatpush1.bf16.msra.mxu0 0
    %2287 = vmatprep.subr.bf16.mxu0 0
    %2288 = vmatpush1.bf16.msra.mxu0 0
    %2289 = vmatprep.subr.bf16.mxu0 0
    %2290 = vmatpush1.bf16.msra.mxu0 0
    %2291 = vmatprep.mubr.bf16.mxu0 0
    %2292 = vmatmul.mubr.bf16.gmra.mrb[0].mxu0 %v2192
    %v2293 = vpop.f32.mrb[0].mxu0
    %v2294 = vadd.f32 0.0, %v2293
    %v2295 = vpop.f32.mrb[0].mxu0
    %v2296 = vpop.f32.mrb[0].mxu0
    %v2297 = vadd.f32 0.0, %v2296
    %v2298 = vpop.f32.mrb[0].mxu0
    %2299 = vmatprep.mubr.bf16.mxu0 0
    %2300 = vmatmul.mubr.bf16.gmra.mrb[0].mxu0 %v2193
    %v2301 = vpop.f32.mrb[0].mxu0
    %v2302 = vadd.f32 0.0, %v2301
    %v2303 = vpop.f32.mrb[0].mxu0
    %v2304 = vpop.f32.mrb[0].mxu0
    %v2305 = vadd.f32 0.0, %v2304
    %v2306 = vpop.f32.mrb[0].mxu0
    %2307 = vdwg.mxu0
    %v2324 = vunpack.c.l.b16 %v2106
    %v2325 = vunpack.c.l.b16 %v2107
    %v2326 = vunpack.c.l.b16 %v2108
    %v2327 = vunpack.c.l.b16 %v2109
    %v2328 = vunpack.c.l.b16 %v2110
    %v2329 = vunpack.c.l.b16 %v2111
    %v2330 = vunpack.c.l.b16 %v2112
    %v2331 = vunpack.c.l.b16 %v2113
    %v2332 = vunpack.c.l.b16 %v2114
    %v2333 = vunpack.c.l.b16 %v2115
    %v2334 = vunpack.c.l.b16 %v2116
    %v2335 = vunpack.c.l.b16 %v2117
    %v2336 = vunpack.c.l.b16 %v2118
    %v2337 = vunpack.c.l.b16 %v2119
    %v2338 = vunpack.c.l.b16 %v2120
    %v2339 = vunpack.c.l.b16 %v2121
    %v2340 = vpack.c.b16 %v2325, %v2324
    %v2341 = vpack.c.b16 %v2327, %v2326
    %v2342 = vpack.c.b16 %v2329, %v2328
    %v2343 = vpack.c.b16 %v2331, %v2330
    %v2344 = vpack.c.b16 %v2333, %v2332
    %v2345 = vpack.c.b16 %v2335, %v2334
    %v2346 = vpack.c.b16 %v2337, %v2336
    %v2347 = vpack.c.b16 %v2339, %v2338
    %2356 = vmatprep.subr.bf16.mxu0 0
    %2357 = vmatpush1.bf16.msra.mxu0 %v2340
    %2358 = vmatprep.subr.bf16.mxu0 0
    %2359 = vmatpush1.bf16.msra.mxu0 %v2341
    %2360 = vmatprep.subr.bf16.mxu0 0
    %2361 = vmatpush1.bf16.msra.mxu0 %v2342
    %2362 = vmatprep.subr.bf16.mxu0 0
    %2363 = vmatpush1.bf16.msra.mxu0 %v2343
    %2364 = vmatprep.subr.bf16.mxu0 0
    %2365 = vmatpush1.bf16.msra.mxu0 %v2344
    %2366 = vmatprep.subr.bf16.mxu0 0
    %2367 = vmatpush1.bf16.msra.mxu0 %v2345
    %2368 = vmatprep.subr.bf16.mxu0 0
    %2369 = vmatpush1.bf16.msra.mxu0 %v2346
    %2370 = vmatprep.subr.bf16.mxu0 0
    %2371 = vmatpush1.bf16.msra.mxu0 %v2347
    %2372 = vmatprep.subr.bf16.mxu0 0
    %2373 = vmatpush1.bf16.msra.mxu0 0
    %2374 = vmatprep.subr.bf16.mxu0 0
    %2375 = vmatpush1.bf16.msra.mxu0 0
    %2376 = vmatprep.subr.bf16.mxu0 0
    %2377 = vmatpush1.bf16.msra.mxu0 0
    %2378 = vmatprep.subr.bf16.mxu0 0
    %2379 = vmatpush1.bf16.msra.mxu0 0
    %2380 = vmatprep.subr.bf16.mxu0 0
    %2381 = vmatpush1.bf16.msra.mxu0 0
    %2382 = vmatprep.subr.bf16.mxu0 0
    %2383 = vmatpush1.bf16.msra.mxu0 0
    %2384 = vmatprep.subr.bf16.mxu0 0
    %2385 = vmatpush1.bf16.msra.mxu0 0
    %2386 = vmatprep.subr.bf16.mxu0 0
    %2387 = vmatpush1.bf16.msra.mxu0 0
    %2388 = vmatprep.mubr.bf16.mxu0 0
    %2389 = vmatmul.mubr.bf16.gmra.mrb[0].mxu0 %v2104
    %v2390 = vpop.f32.mrb[0].mxu0
    %v2391 = vadd.f32 %v2294, %v2390
    %v2392 = vpop.f32.mrb[0].mxu0
    %v2393 = vpop.f32.mrb[0].mxu0
    %v2394 = vadd.f32 %v2297, %v2393
    %v2395 = vpop.f32.mrb[0].mxu0
    %2396 = vmatprep.mubr.bf16.mxu0 0
    %2397 = vmatmul.mubr.bf16.gmra.mrb[0].mxu0 %v2105
    %v2398 = vpop.f32.mrb[0].mxu0
    %v2399 = vadd.f32 %v2302, %v2398
    %v2400 = vpop.f32.mrb[0].mxu0
    %v2401 = vpop.f32.mrb[0].mxu0
    %v2402 = vadd.f32 %v2305, %v2401
    %v2403 = vpop.f32.mrb[0].mxu0
    %2404 = vdwg.mxu0
    %s2405 = scalar_lea.vmem %s9, 32
    %v2406 = vld [vmem:[%s2405] sm:$0xf]
    %v2407 = vld [vmem:[%s2405 + $0x4] sm:$0xf]
    %v2408 = vld [vmem:[%s2405 + $0x8] sm:$0xf]
    %v2409 = vld [vmem:[%s2405 + $0xc] sm:$0xf]
    %v2414 = vunpack.c.l.b16 %v2406
    %v2415 = vunpack.c.l.b16 %v2407
    %v2416 = vunpack.c.l.b16 %v2408
    %v2417 = vunpack.c.l.b16 %v2409
    %v2418 = vpack.c.b16 %v2415, %v2414
    %v2419 = vpack.c.b16 %v2417, %v2416
    %v2421 = vsel %vm620, %v2418, 0
    %v2424 = vsel %vm620, %v2419, 0
    %2426 = vmatprep.subr.bf16.mxu0 0
    %2427 = vmatpush1.bf16.msra.mxu0 %v2031
    %2428 = vmatprep.subr.bf16.mxu0 0
    %2429 = vmatpush1.bf16.msra.mxu0 %v2032
    %2430 = vmatprep.subr.bf16.mxu0 0
    %2431 = vmatpush1.bf16.msra.mxu0 %v2033
    %2432 = vmatprep.subr.bf16.mxu0 0
    %2433 = vmatpush1.bf16.msra.mxu0 %v2034
    %2434 = vmatprep.subr.bf16.mxu0 0
    %2435 = vmatpush1.bf16.msra.mxu0 0
    %2436 = vmatprep.subr.bf16.mxu0 0
    %2437 = vmatpush1.bf16.msra.mxu0 0
    %2438 = vmatprep.subr.bf16.mxu0 0
    %2439 = vmatpush1.bf16.msra.mxu0 0
    %2440 = vmatprep.subr.bf16.mxu0 0
    %2441 = vmatpush1.bf16.msra.mxu0 0
    %2442 = vmatprep.subr.bf16.mxu0 0
    %2443 = vmatpush1.bf16.msra.mxu0 0
    %2444 = vmatprep.subr.bf16.mxu0 0
    %2445 = vmatpush1.bf16.msra.mxu0 0
    %2446 = vmatprep.subr.bf16.mxu0 0
    %2447 = vmatpush1.bf16.msra.mxu0 0
    %2448 = vmatprep.subr.bf16.mxu0 0
    %2449 = vmatpush1.bf16.msra.mxu0 0
    %2450 = vmatprep.subr.bf16.mxu0 0
    %2451 = vmatpush1.bf16.msra.mxu0 0
    %2452 = vmatprep.subr.bf16.mxu0 0
    %2453 = vmatpush1.bf16.msra.mxu0 0
    %2454 = vmatprep.subr.bf16.mxu0 0
    %2455 = vmatpush1.bf16.msra.mxu0 0
    %2456 = vmatprep.subr.bf16.mxu0 0
    %2457 = vmatpush1.bf16.msra.mxu0 0
    %2458 = vmatprep.mubr.bf16.mxu0 0
    %2459 = vmatmul.mubr.bf16.gmra.mrb[0].mxu0 %v2421
    %v2460 = vpop.f32.mrb[0].mxu0
    %v2461 = vadd.f32 0.0, %v2460
    %v2462 = vpop.f32.mrb[0].mxu0
    %v2463 = vpop.f32.mrb[0].mxu0
    %v2464 = vadd.f32 0.0, %v2463
    %v2465 = vpop.f32.mrb[0].mxu0
    %2466 = vmatprep.mubr.bf16.mxu0 0
    %2467 = vmatmul.mubr.bf16.gmra.mrb[0].mxu0 %v2424
    %v2468 = vpop.f32.mrb[0].mxu0
    %v2469 = vadd.f32 0.0, %v2468
    %v2470 = vpop.f32.mrb[0].mxu0
    %v2471 = vpop.f32.mrb[0].mxu0
    %v2472 = vadd.f32 0.0, %v2471
    %v2473 = vpop.f32.mrb[0].mxu0
    %2474 = vdwg.mxu0
    %v2475 = vpack.c.bf16 %v2464, %v2461
    %v2476 = vpack.c.bf16 %v2472, %v2469
    %s2477 = scalar_lea.vmem %s8, 128
    %v2478 = vld [vmem:[%s2477] sm:$0xf]
    %v2479 = vld [vmem:[%s2477 + $0x4] sm:$0xf]
    %v2480 = vld [vmem:[%s2477 + $0x8] sm:$0xf]
    %v2481 = vld [vmem:[%s2477 + $0xc] sm:$0xf]
    %v2482 = vld [vmem:[%s2477 + $0x10] sm:$0xf]
    %v2483 = vld [vmem:[%s2477 + $0x14] sm:$0xf]
    %v2484 = vld [vmem:[%s2477 + $0x18] sm:$0xf]
    %v2485 = vld [vmem:[%s2477 + $0x1c] sm:$0xf]
    %v2486 = vld [vmem:[%s2477 + $0x20] sm:$0xf]
    %v2487 = vld [vmem:[%s2477 + $0x24] sm:$0xf]
    %v2488 = vld [vmem:[%s2477 + $0x28] sm:$0xf]
    %v2489 = vld [vmem:[%s2477 + $0x2c] sm:$0xf]
    %v2490 = vld [vmem:[%s2477 + $0x30] sm:$0xf]
    %v2491 = vld [vmem:[%s2477 + $0x34] sm:$0xf]
    %v2492 = vld [vmem:[%s2477 + $0x38] sm:$0xf]
    %v2493 = vld [vmem:[%s2477 + $0x3c] sm:$0xf]
    %v2510 = vunpack.c.l.b16 %v2478
    %v2511 = vunpack.c.l.b16 %v2479
    %v2512 = vunpack.c.l.b16 %v2480
    %v2513 = vunpack.c.l.b16 %v2481
    %v2514 = vunpack.c.l.b16 %v2482
    %v2515 = vunpack.c.l.b16 %v2483
    %v2516 = vunpack.c.l.b16 %v2484
    %v2517 = vunpack.c.l.b16 %v2485
    %v2518 = vunpack.c.l.b16 %v2486
    %v2519 = vunpack.c.l.b16 %v2487
    %v2520 = vunpack.c.l.b16 %v2488
    %v2521 = vunpack.c.l.b16 %v2489
    %v2522 = vunpack.c.l.b16 %v2490
    %v2523 = vunpack.c.l.b16 %v2491
    %v2524 = vunpack.c.l.b16 %v2492
    %v2525 = vunpack.c.l.b16 %v2493
    %v2526 = vpack.c.b16 %v2511, %v2510
    %v2527 = vpack.c.b16 %v2513, %v2512
    %v2528 = vpack.c.b16 %v2515, %v2514
    %v2529 = vpack.c.b16 %v2517, %v2516
    %v2530 = vpack.c.b16 %v2519, %v2518
    %v2531 = vpack.c.b16 %v2521, %v2520
    %v2532 = vpack.c.b16 %v2523, %v2522
    %v2533 = vpack.c.b16 %v2525, %v2524
    %2542 = vmatprep.subr.bf16.mxu0 0
    %2543 = vmatpush1.bf16.msra.mxu0 %v2526
    %2544 = vmatprep.subr.bf16.mxu0 0
    %2545 = vmatpush1.bf16.msra.mxu0 %v2527
    %2546 = vmatprep.subr.bf16.mxu0 0
    %2547 = vmatpush1.bf16.msra.mxu0 %v2528
    %2548 = vmatprep.subr.bf16.mxu0 0
    %2549 = vmatpush1.bf16.msra.mxu0 %v2529
    %2550 = vmatprep.subr.bf16.mxu0 0
    %2551 = vmatpush1.bf16.msra.mxu0 %v2530
    %2552 = vmatprep.subr.bf16.mxu0 0
    %2553 = vmatpush1.bf16.msra.mxu0 %v2531
    %2554 = vmatprep.subr.bf16.mxu0 0
    %2555 = vmatpush1.bf16.msra.mxu0 %v2532
    %2556 = vmatprep.subr.bf16.mxu0 0
    %2557 = vmatpush1.bf16.msra.mxu0 %v2533
    %2558 = vmatprep.subr.bf16.mxu0 0
    %2559 = vmatpush1.bf16.msra.mxu0 0
    %2560 = vmatprep.subr.bf16.mxu0 0
    %2561 = vmatpush1.bf16.msra.mxu0 0
    %2562 = vmatprep.subr.bf16.mxu0 0
    %2563 = vmatpush1.bf16.msra.mxu0 0
    %2564 = vmatprep.subr.bf16.mxu0 0
    %2565 = vmatpush1.bf16.msra.mxu0 0
    %2566 = vmatprep.subr.bf16.mxu0 0
    %2567 = vmatpush1.bf16.msra.mxu0 0
    %2568 = vmatprep.subr.bf16.mxu0 0
    %2569 = vmatpush1.bf16.msra.mxu0 0
    %2570 = vmatprep.subr.bf16.mxu0 0
    %2571 = vmatpush1.bf16.msra.mxu0 0
    %2572 = vmatprep.subr.bf16.mxu0 0
    %2573 = vmatpush1.bf16.msra.mxu0 0
    %2574 = vmatprep.mubr.bf16.mxu0 0
    %2575 = vmatmul.mubr.bf16.gmra.mrb[0].mxu0 %v2475
    %v2576 = vpop.f32.mrb[0].mxu0
    %v2577 = vadd.f32 0.0, %v2576
    %v2578 = vpop.f32.mrb[0].mxu0
    %v2579 = vpop.f32.mrb[0].mxu0
    %v2580 = vadd.f32 0.0, %v2579
    %v2581 = vpop.f32.mrb[0].mxu0
    %2582 = vmatprep.mubr.bf16.mxu0 0
    %2583 = vmatmul.mubr.bf16.gmra.mrb[0].mxu0 %v2476
    %v2584 = vpop.f32.mrb[0].mxu0
    %v2585 = vadd.f32 0.0, %v2584
    %v2586 = vpop.f32.mrb[0].mxu0
    %v2587 = vpop.f32.mrb[0].mxu0
    %v2588 = vadd.f32 0.0, %v2587
    %v2589 = vpop.f32.mrb[0].mxu0
    %2590 = vdwg.mxu0
    %v2591 = vadd.f32 %v2391, %v2577
    %v2592 = vadd.f32 %v2394, %v2580
    %v2593 = vadd.f32 %v2399, %v2585
    %v2594 = vadd.f32 %v2402, %v2588
    %v2595 = vld [vmem:[%s10] sm:$0x1]
    %v2597 = vlaneseq
    %v2598 = vshrl.u32 %v2597, 7
    %v2599 = vsub.s32 0, %v2598
    %v2600 = vrot.slane %v2595, %v2599
    %v2602 = vadd.f32 %v2591, %v2600
    %v2603 = vadd.f32 %v2592, %v2600
    %v2604 = vadd.f32 %v2593, %v2600
    %v2605 = vadd.f32 %v2594, %v2600
    %v2606 = vmax.f32 %v2602, 0.0
    %v2607 = vmax.f32 %v2603, 0.0
    %v2608 = vmax.f32 %v2604, 0.0
    %v2609 = vmax.f32 %v2605, 0.0
    %vm2610 = vcmask 261120
    %2611 = vst.msk [vmem:[%s13] sm:$0xff] %vm2610, %v2606
    %2612 = vst.msk [vmem:[%s13 + $0x8] sm:$0xff] %vm2610, %v2607
    %2613 = vst.msk [vmem:[%s13 + $0x10] sm:$0xff] %vm2610, %v2608
    %2614 = vst.msk [vmem:[%s13 + $0x18] sm:$0xff] %vm2610, %v2609
    %v2615 = vld [vmem:[%s1] sm:$0xf]
    %v2616 = vld [vmem:[%s1 + $0x4] sm:$0xf]
    %v2617 = vld [vmem:[%s11] sm:$0x7]
    %v2618 = vld [vmem:[%s12] sm:$0x1]
    %v2620 = vlaneseq
    %v2621 = vshrl.u32 %v2620, 7
    %v2622 = vsub.s32 0, %v2621
    %v2623 = vrot.slane %v2618, %v2622
    %v2627 = vunpack.c.l.b16 %v2615
    %v2628 = vunpack.c.l.b16 %v2616
    %v2629 = vpack.c.b16 %v2628, %v2627
    %vm2630 = vcmask 39936
    %v2632 = vsel %vm2630, %v2629, 0
    %vm2634 = vcmask 1041408
    %vm2635 = vcmask 1042432
    %v2636 = vsel %vm2634, 4294967295, 65535
    %v2637 = vsel %vm2635, %v2636, 0
    %v2639 = vand.u32 %v2617, %v2637
    %2641 = vmatprep.subr.bf16.mxu0 0
    %2642 = vmatpush1.bf16.msra.mxu0 %v2639
    %2643 = vmatprep.subr.bf16.mxu0 0
    %2644 = vmatpush1.bf16.msra.mxu0 0
    %2645 = vmatprep.subr.bf16.mxu0 0
    %2646 = vmatpush1.bf16.msra.mxu0 0
    %2647 = vmatprep.subr.bf16.mxu0 0
    %2648 = vmatpush1.bf16.msra.mxu0 0
    %2649 = vmatprep.subr.bf16.mxu0 0
    %2650 = vmatpush1.bf16.msra.mxu0 0
    %2651 = vmatprep.subr.bf16.mxu0 0
    %2652 = vmatpush1.bf16.msra.mxu0 0
    %2653 = vmatprep.subr.bf16.mxu0 0
    %2654 = vmatpush1.bf16.msra.mxu0 0
    %2655 = vmatprep.subr.bf16.mxu0 0
    %2656 = vmatpush1.bf16.msra.mxu0 0
    %2657 = vmatprep.subr.bf16.mxu0 0
    %2658 = vmatpush1.bf16.msra.mxu0 0
    %2659 = vmatprep.subr.bf16.mxu0 0
    %2660 = vmatpush1.bf16.msra.mxu0 0
    %2661 = vmatprep.subr.bf16.mxu0 0
    %2662 = vmatpush1.bf16.msra.mxu0 0
    %2663 = vmatprep.subr.bf16.mxu0 0
    %2664 = vmatpush1.bf16.msra.mxu0 0
    %2665 = vmatprep.subr.bf16.mxu0 0
    %2666 = vmatpush1.bf16.msra.mxu0 0
    %2667 = vmatprep.subr.bf16.mxu0 0
    %2668 = vmatpush1.bf16.msra.mxu0 0
    %2669 = vmatprep.subr.bf16.mxu0 0
    %2670 = vmatpush1.bf16.msra.mxu0 0
    %2671 = vmatprep.subr.bf16.mxu0 0
    %2672 = vmatpush1.bf16.msra.mxu0 0
    %2673 = vmatprep.mubr.bf16.mxu0 0
    %2674 = vmatmul.mubr.bf16.gmra.mrb[0].mxu0 %v2632
    %v2675 = vpop.f32.mrb[0].mxu0
    %v2676 = vadd.f32 %v2623, %v2675
    %v2677 = vpop.f32.mrb[0].mxu0
    %v2678 = vpop.f32.mrb[0].mxu0
    %v2679 = vadd.f32 %v2623, %v2678
    %v2680 = vpop.f32.mrb[0].mxu0
    %2681 = vdwg.mxu0
    %v2682 = vmax.f32 %v2676, 0.0
    %v2683 = vmax.f32 %v2679, 0.0
    %2684 = vst.msk [vmem:[#allocation2] sm:$0xff] %vm2610, %v2682
    %2685 = vst.msk [vmem:[#allocation2 + $0x8] sm:$0xff] %vm2610, %v2683
    // Predicated region
    $region54: #{vrnn_encoding_forward.1} parent=1 // pred_check
      _
    $region55: #{vrnn_encoding_forward.1} parent=1 // pred_check_branch
      %2687 = sbr.rel (0) target = $region57
    $region56: #{vrnn_encoding_forward.1} parent=1 // pred_region
      _
    $region57: #{vrnn_encoding_forward.1} parent=1 // pred_fallthru
      _
    // Predicated region
    $region58: #{vrnn_encoding_forward.1} parent=1 // pred_check
      _
    $region59: #{vrnn_encoding_forward.1} parent=1 // pred_check_branch
      %2689 = sbr.rel (0) target = $region61
    $region60: #{vrnn_encoding_forward.1} parent=1 // pred_region
      %s2691 = ssub.s32 256, 256
      %2692 = vsyncadd [#allocation3], %s2691
      %s2693 = sshll.u32 [#allocation2], 4
      %s2694 = int_to_ptr.vmem [resolvable:$true] %s2693
      %2699 = dma.vmem_to_hbm [thread:$0]  %s2694, 256, %s14, [#allocation3], 128, 128, 8
    $region61: #{vrnn_encoding_forward.1} parent=1 // pred_fallthru
      _
    // Predicated region
    $region62: #{vrnn_encoding_forward.1} parent=1 // pred_check
      _
    $region63: #{vrnn_encoding_forward.1} parent=1 // pred_check_branch
      %2701 = sbr.rel (0) target = $region65
    $region64: #{vrnn_encoding_forward.1} parent=1 // pred_region
      _
    $region65: #{vrnn_encoding_forward.1} parent=1 // pred_fallthru
      _
    // Predicated region
    $region66: #{vrnn_encoding_forward.1} parent=1 // pred_check
      _
    $region67: #{vrnn_encoding_forward.1} parent=1 // pred_check_branch
      %2703 = sbr.rel (0) target = $region69
    $region68: #{vrnn_encoding_forward.1} parent=1 // pred_region
      %2704 = dma.done [#allocation3], 256
    $region69: #{vrnn_encoding_forward.1} parent=1 // pred_fallthru
      _
    %2705 = vsyncpa [#allocation3], 1

</llo_original>
